<compile_context>
chip_gen: v6e
topology: v6e:2x2x1
jax: 0.10.0
libtpu: 0.0.40
codegen_flags: <defaults>
</compile_context>

<pallas_src>
import jax
import jax.numpy as jnp
import numpy as np
from jax.experimental import pallas as pl
from jax.experimental.pallas import tpu as pltpu

_LANE = 128


def _round_up(n, m):
    return (n + m - 1) // m * m


def _up2_pad_matrix(n_in, n_rows):
    """(n_rows, n_in) matrix: row r -> padded-upsampled sample r of a length-n_in axis.

    Row r corresponds to upsampled coordinate o = r - 1 (2x bilinear, half-pixel centers,
    edge clamp == PyTorch align_corners=False); rows with o outside [0, 2*n_in) are zero,
    which produces conv1's 1-pixel 'SAME' zero border (and any alignment padding columns)
    for free.  All weights are multiples of 1/16 -> exact in bf16.
    """
    U = np.zeros((n_rows, n_in), np.float32)
    for r in range(n_rows):
        o = r - 1
        if o < 0 or o >= 2 * n_in:
            continue
        src = o / 2.0 - 0.25
        i0 = int(np.floor(src))
        f = src - i0
        for idx, wgt in ((i0, 1.0 - f), (i0 + 1, f)):
            U[r, min(max(idx, 0), n_in - 1)] += wgt
    return U


def _pad_hw1(x):
    """Zero-pad a (H, W, C) VMEM value by 1 pixel on each spatial side."""
    H, W, C = x.shape
    zc = jnp.zeros((H, 1, C), x.dtype)
    x = jnp.concatenate([zc, x, zc], axis=1)
    zr = jnp.zeros((1, W + 2, C), x.dtype)
    return jnp.concatenate([zr, x, zr], axis=0)


def _make_decoder_kernel(*, H, W, Wp2, Cx, Cs, Co8, has_skip):
    HW = H * W
    cin1 = Cx + Cs if has_skip else Cx

    def kernel(*refs):
        if has_skip:
            (x_ref, sk_ref, up_ref, w1_ref, s1_ref, b1_ref,
             w2_ref, s2_ref, b2_ref, o_ref, y1pad_ref) = refs
        else:
            (x_ref, up_ref, w1_ref, s1_ref, b1_ref,
             w2_ref, s2_ref, b2_ref, o_ref, y1pad_ref) = refs
        Cp = y1pad_ref.shape[-1]

        # ---- bilinear x2 upsample + 1-px zero border: ONE small MXU matmul. ----
        xu = jnp.dot(up_ref[...], x_ref[0], preferred_element_type=jnp.float32)
        xu = xu.reshape(H + 2, Wp2, Cx).astype(jnp.bfloat16)          # (H+2, Wp2, Cx)

        if has_skip:
            sk = _pad_hw1(sk_ref[0])                                  # (H+2, W+2, Cs)

        # ---- conv1: 3x3 'SAME' over concat([x_up, skip], C) as ONE im2col matmul. ----
        # Per-tap channel order [x..., skip...] matches w1.reshape(9*cin1, Cp).
        taps = []
        for dy in range(3):
            for dx in range(3):
                taps.append(xu[dy:dy + H, dx:dx + W, :])
                if has_skip:
                    taps.append(sk[dy:dy + H, dx:dx + W, :])
        p1 = jnp.concatenate(taps, axis=-1).reshape(HW, 9 * cin1)
        acc1 = jnp.dot(p1, w1_ref[...], preferred_element_type=jnp.float32)   # (HW, Cp)

        # Folded BatchNorm + ReLU.  Padded channels keep scale=bias=0, so y1's padded
        # channels are exactly 0 (invariant required by conv2's zero-padded Cin rows).
        y1 = jnp.maximum(acc1 * s1_ref[0] + b1_ref[0], 0.0)

        # Zero-bordered VMEM scratch gives conv2 its halo without HBM or concat copies.
        # The border is re-zeroed every step (cheap): the grid axis is 'parallel', so a
        # one-time program_id==0 init is not guaranteed to run on every core.
        y1pad_ref[...] = jnp.zeros_like(y1pad_ref)
        y1pad_ref[1:H + 1, 1:W + 1, :] = y1.reshape(H, W, Cp)

        # ---- conv2: same im2col recipe, fed straight from the padded scratch. ----
        taps2 = [y1pad_ref[dy:dy + H, dx:dx + W, :]
                 for dy in range(3) for dx in range(3)]
        p2 = jnp.concatenate(taps2, axis=-1).reshape(HW, 9 * Cp).astype(jnp.bfloat16)
        acc2 = jnp.dot(p2, w2_ref[...], preferred_element_type=jnp.float32)   # (HW, Cp)
        y2 = jnp.maximum(acc2 * s2_ref[0] + b2_ref[0], 0.0)

        # Unpadded, channel-major store: (Co8, H*W), lane-dense over H*W -> the XLA
        # epilogue is a free reshape (no padded-channel slice, no NHWC->NCHW transpose).
        o_ref[0] = jnp.transpose(y2)[:Co8, :]

    return kernel


@jax.jit
def decoder_block(x_nchw, skip_nchw, w1, bn1_scale, bn1_bias, w2, bn2_scale, bn2_bias):
    """DecoderBlock.forward (eval mode).  NCHW in / NCHW out (PyTorch convention).

    w1: (3,3,in_ch[+skip_ch],out_ch) HWIO;  w2: (3,3,out_ch,out_ch) HWIO;
    bn*_scale/bias: folded BatchNorm affine (gamma/sqrt(var+eps), beta - mean*scale).
    """
    B, Cx, Hs, Ws = x_nchw.shape
    H, W = 2 * Hs, 2 * Ws
    HW = H * W
    Wp2 = _round_up(W + 2, 8)            # sublane-aligned padded width
    Cout = w1.shape[-1]
    Cp = _round_up(Cout, _LANE)          # lane-dense matmul N / BN width
    Co8 = _round_up(Cout, 8)             # sublane-aligned output-channel count
    has_skip = skip_nchw is not None

    # Only the small pre-upsample x goes to the kernel: NCHW -> (B, Hs*Ws, Cx) bf16.
    x_flat = (jnp.transpose(x_nchw, (0, 2, 3, 1))
              .reshape(B, Hs * Ws, Cx).astype(jnp.bfloat16))

    # Fixed upsample(+pad) matrix, built from static shapes; exact in bf16.
    up_np = np.kron(_up2_pad_matrix(Hs, H + 2), _up2_pad_matrix(Ws, Wp2))
    up_mat = jnp.asarray(up_np, dtype=jnp.bfloat16)                  # ((H+2)*Wp2, Hs*Ws)

    if has_skip:
        skip = jnp.transpose(skip_nchw, (0, 2, 3, 1)).astype(jnp.bfloat16)   # (B,H,W,Cs)
        Cs = skip.shape[-1]
        cin1 = Cx + Cs
    else:
        skip = None
        Cs = 0
        cin1 = Cx
    assert w1.shape[2] == cin1, (w1.shape, cin1)

    w1f = (jnp.pad(w1, ((0, 0), (0, 0), (0, 0), (0, Cp - Cout)))
           .reshape(9 * cin1, Cp).astype(jnp.bfloat16))
    # conv2: pad Cin too. Those rows are zero AND only ever multiply y1's zero padded
    # channels, so the padding is doubly inert.
    w2f = (jnp.pad(w2, ((0, 0), (0, 0), (0, Cp - w2.shape[2]), (0, Cp - Cout)))
           .reshape(9 * Cp, Cp).astype(jnp.bfloat16))

    def pad_vec(v):
        return jnp.pad(v.astype(jnp.float32), (0, Cp - Cout)).reshape(1, Cp)

    s1p, b1p = pad_vec(bn1_scale), pad_vec(bn1_bias)
    s2p, b2p = pad_vec(bn2_scale), pad_vec(bn2_bias)

    kernel = _make_decoder_kernel(H=H, W=W, Wp2=Wp2, Cx=Cx, Cs=Cs, Co8=Co8,
                                  has_skip=has_skip)

    in_specs = [pl.BlockSpec((1, Hs * Ws, Cx), lambda b: (b, 0, 0))]
    args = [x_flat]
    if has_skip:
        in_specs.append(pl.BlockSpec((1, H, W, Cs), lambda b: (b, 0, 0, 0)))
        args.append(skip)
    in_specs += [
        pl.BlockSpec(((H + 2) * Wp2, Hs * Ws), lambda b: (0, 0)),
        pl.BlockSpec((9 * cin1, Cp), lambda b: (0, 0)),
        pl.BlockSpec((1, Cp), lambda b: (0, 0)),
        pl.BlockSpec((1, Cp), lambda b: (0, 0)),
        pl.BlockSpec((9 * Cp, Cp), lambda b: (0, 0)),
        pl.BlockSpec((1, Cp), lambda b: (0, 0)),
        pl.BlockSpec((1, Cp), lambda b: (0, 0)),
    ]
    args += [up_mat, w1f, s1p, b1p, w2f, s2p, b2p]

    out = pl.pallas_call(
        kernel,
        out_shape=jax.ShapeDtypeStruct((B, Co8, HW), jnp.float32),
        grid=(B,),
        in_specs=in_specs,
        out_specs=pl.BlockSpec((1, Co8, HW), lambda b: (b, 0, 0)),
        scratch_shapes=[pltpu.VMEM((H + 2, Wp2, Cp), jnp.float32)],
        compiler_params=pltpu.CompilerParams(
            # B >= 2 feeds both v7x TensorCores; safe because the kernel carries no
            # cross-step scratch state (the scratch is fully re-initialized each step).
            dimension_semantics=("parallel",),
            # Demo needs only a few MiB; keep <= ~48 MiB on v7x, raise toward ~96 MiB
            # on v5e/v6e once the production row-tile grid axis (see TODO) is added.
            vmem_limit_bytes=32 * 1024 * 1024),
    )(*args)

    # (B, Co8, H*W) -> (B, Cout, H, W): slice is a no-op when Cout % 8 == 0 and the
    # reshape is contiguous -- the kernel already wrote channel-major (NCHW) data.
    return out[:, :Cout, :].reshape(B, Cout, H, W)


def decoder_block_reference(x_nchw, skip_nchw, w1, s1, b1, w2, s2, b2):
    """Pure-JAX f32 reference (same eval-mode semantics) for a numerical check."""
    x = jnp.transpose(x_nchw, (0, 2, 3, 1))
    B, Hs, Ws, Cx = x.shape
    x = jax.image.resize(x, (B, 2 * Hs, 2 * Ws, Cx), method="bilinear")
    if skip_nchw is not None:
        x = jnp.concatenate([x, jnp.transpose(skip_nchw, (0, 2, 3, 1))], axis=-1)
    dn = ("NHWC", "HWIO", "NHWC")
    y = jax.lax.conv_general_dilated(x, w1, (1, 1), "SAME", dimension_numbers=dn)
    y = jnp.maximum(y * s1 + b1, 0.0)
    y = jax.lax.conv_general_dilated(y, w2, (1, 1), "SAME", dimension_numbers=dn)
    y = jnp.maximum(y * s2 + b2, 0.0)
    return jnp.transpose(y, (0, 3, 1, 2))


if __name__ == "__main__":
    key = jax.random.PRNGKey(0)
    B = 2
    in_channels = 4
    skip_channels = 4
    out_channels = 8
    Hs, Ws = 8, 8                      # pre-upsample spatial size
    Hu, Wu = 2 * Hs, 2 * Ws            # post-upsample (skip resolution)

    k_x, k_skip, k_w1, k_w2, k_bn = jax.random.split(key, 5)
    x = jax.random.normal(k_x, (B, in_channels, Hs, Ws), jnp.float32)
    skip = jax.random.normal(k_skip, (B, skip_channels, Hu, Wu), jnp.float32)

    # Conv weights (HWIO); Conv2d has bias=False since use_batchnorm=True.
    cin1 = in_channels + skip_channels
    w1 = 0.1 * jax.random.normal(k_w1, (3, 3, cin1, out_channels), jnp.float32)
    w2 = 0.1 * jax.random.normal(k_w2, (3, 3, out_channels, out_channels), jnp.float32)

    # BatchNorm2d in eval mode, folded into affine scale/bias (non-trivial stats).
    eps = 1e-5
    kg1, kb1, km1, kv1, kg2, kb2, km2, kv2 = jax.random.split(k_bn, 8)

    def fold_bn(kg, kb, km, kv):
        gamma = 1.0 + 0.1 * jax.random.normal(kg, (out_channels,), jnp.float32)
        beta = 0.1 * jax.random.normal(kb, (out_channels,), jnp.float32)
        mean = 0.1 * jax.random.normal(km, (out_channels,), jnp.float32)
        var = 1.0 + 0.1 * jax.random.uniform(kv, (out_channels,), jnp.float32)
        scale = gamma / jnp.sqrt(var + eps)
        return scale, beta - mean * scale

    bn1_scale, bn1_bias = fold_bn(kg1, kb1, km1, kv1)
    bn2_scale, bn2_bias = fold_bn(kg2, kb2, km2, kv2)

    # With skip (the common U-Net++ decoder path).
    y = decoder_block(x, skip, w1, bn1_scale, bn1_bias, w2, bn2_scale, bn2_bias)
    jax.block_until_ready(y)
    assert y.shape == (B, out_channels, Hu, Wu), y.shape
    y_ref = decoder_block_reference(x, skip, w1, bn1_scale, bn1_bias,
                                    w2, bn2_scale, bn2_bias)
    np.testing.assert_allclose(np.asarray(y), np.asarray(y_ref), atol=5e-2, rtol=5e-2)

    # Specialized skip=None variant (no dummy skip input / zero-weight work).
    w1_ns = w1[:, :, :in_channels, :]
    y_ns = decoder_block(x, None, w1_ns, bn1_scale, bn1_bias, w2, bn2_scale, bn2_bias)
    jax.block_until_ready(y_ns)
    assert y_ns.shape == (B, out_channels, Hu, Wu), y_ns.shape
    y_ns_ref = decoder_block_reference(x, None, w1_ns, bn1_scale, bn1_bias,
                                       w2, bn2_scale, bn2_bias)
    np.testing.assert_allclose(np.asarray(y_ns), np.asarray(y_ns_ref),
                               atol=5e-2, rtol=5e-2)

    print("KERNEL_OK")
</pallas_src>

<mosaic_0001>
module attributes {stable_mosaic.version = 11 : i64} {
  func.func @kernel(%arg0: i32, %arg1: memref<1x64x4xbf16, #tpu.memory_space<vmem>>, %arg2: memref<1x16x16x4xbf16, #tpu.memory_space<vmem>>, %arg3: memref<432x64xbf16, #tpu.memory_space<vmem>>, %arg4: memref<72x128xbf16, #tpu.memory_space<vmem>>, %arg5: memref<1x128xf32, #tpu.memory_space<vmem>>, %arg6: memref<1x128xf32, #tpu.memory_space<vmem>>, %arg7: memref<1152x128xbf16, #tpu.memory_space<vmem>>, %arg8: memref<1x128xf32, #tpu.memory_space<vmem>>, %arg9: memref<1x128xf32, #tpu.memory_space<vmem>>, %arg10: memref<1x8x256xf32, #tpu.memory_space<vmem>>, %arg11: memref<18x24x128xf32, #tpu.memory_space<vmem>>) attributes {dimension_semantics = [#tpu.dimension_semantics<parallel>], iteration_bounds = array<i64: 2>, scalar_prefetch = 0 : i64, scratch_operands = 1 : i64, tpu.core_type = #tpu.core_type<tc>, window_params = [{transform_indices = @transform_0, window_bounds = array<i64: 1, 64, 4>}, {transform_indices = @transform_1, window_bounds = array<i64: 1, 16, 16, 4>}, {pipeline_mode = #tpu.pipeline_mode<synchronous>, transform_indices = @transform_2, window_bounds = array<i64: 432, 64>}, {pipeline_mode = #tpu.pipeline_mode<synchronous>, transform_indices = @transform_3, window_bounds = array<i64: 72, 128>}, {pipeline_mode = #tpu.pipeline_mode<synchronous>, transform_indices = @transform_4, window_bounds = array<i64: 1, 128>}, {pipeline_mode = #tpu.pipeline_mode<synchronous>, transform_indices = @transform_5, window_bounds = array<i64: 1, 128>}, {pipeline_mode = #tpu.pipeline_mode<synchronous>, transform_indices = @transform_6, window_bounds = array<i64: 1152, 128>}, {pipeline_mode = #tpu.pipeline_mode<synchronous>, transform_indices = @transform_7, window_bounds = array<i64: 1, 128>}, {pipeline_mode = #tpu.pipeline_mode<synchronous>, transform_indices = @transform_8, window_bounds = array<i64: 1, 128>}, {transform_indices = @transform_9, window_bounds = array<i64: 1, 8, 256>}]} {
    %c0 = arith.constant 0 : index
    %c0_0 = arith.constant 0 : index
    %0 = vector.load %arg3[%c0, %c0_0] : memref<432x64xbf16, #tpu.memory_space<vmem>>, vector<432x64xbf16>
    %c0_1 = arith.constant 0 : index
    %c0_2 = arith.constant 0 : index
    %c0_3 = arith.constant 0 : index
    %1 = vector.load %arg1[%c0_1, %c0_2, %c0_3] : memref<1x64x4xbf16, #tpu.memory_space<vmem>>, vector<1x64x4xbf16>
    %2 = vector.shape_cast %1 : vector<1x64x4xbf16> to vector<64x4xbf16>
    %cst = arith.constant dense<0.000000e+00> : vector<432x4xf32>
    %3 = tpu.matmul %0, %2, %cst {dimension_numbers = #tpu.dot_dimension_numbers<[1], [0], [0], [1], [0, 0, 1, 1], [], []>} : vector<432x64xbf16>, vector<64x4xbf16>, vector<432x4xf32> -> vector<432x4xf32>
    %4 = vector.shape_cast %3 : vector<432x4xf32> to vector<18x24x4xf32>
    %5 = arith.truncf %4 : vector<18x24x4xf32> to vector<18x24x4xbf16>
    %c0_4 = arith.constant 0 : index
    %c0_5 = arith.constant 0 : index
    %c0_6 = arith.constant 0 : index
    %c0_7 = arith.constant 0 : index
    %6 = vector.load %arg2[%c0_4, %c0_5, %c0_6, %c0_7] : memref<1x16x16x4xbf16, #tpu.memory_space<vmem>>, vector<1x16x16x4xbf16>
    %7 = vector.shape_cast %6 : vector<1x16x16x4xbf16> to vector<16x16x4xbf16>
    %cst_8 = arith.constant 0.000000e+00 : bf16
    %8 = vector.broadcast %cst_8 : bf16 to vector<16x1x4xbf16>
    %9 = tpu.concatenate %8, %7, %8 in 1 : vector<16x1x4xbf16>, vector<16x16x4xbf16>, vector<16x1x4xbf16> -> vector<16x18x4xbf16>
    %cst_9 = arith.constant 0.000000e+00 : bf16
    %10 = vector.broadcast %cst_9 : bf16 to vector<1x18x4xbf16>
    %11 = tpu.concatenate %10, %9, %10 in 0 : vector<1x18x4xbf16>, vector<16x18x4xbf16>, vector<1x18x4xbf16> -> vector<18x18x4xbf16>
    %12 = vector.extract_strided_slice %5 {offsets = [0, 0, 0], sizes = [16, 16, 4], strides = [1, 1, 1]} : vector<18x24x4xbf16> to vector<16x16x4xbf16>
    %13 = vector.extract_strided_slice %11 {offsets = [0, 0, 0], sizes = [16, 16, 4], strides = [1, 1, 1]} : vector<18x18x4xbf16> to vector<16x16x4xbf16>
    %14 = vector.extract_strided_slice %5 {offsets = [0, 1, 0], sizes = [16, 16, 4], strides = [1, 1, 1]} : vector<18x24x4xbf16> to vector<16x16x4xbf16>
    %15 = vector.extract_strided_slice %11 {offsets = [0, 1, 0], sizes = [16, 16, 4], strides = [1, 1, 1]} : vector<18x18x4xbf16> to vector<16x16x4xbf16>
    %16 = vector.extract_strided_slice %5 {offsets = [0, 2, 0], sizes = [16, 16, 4], strides = [1, 1, 1]} : vector<18x24x4xbf16> to vector<16x16x4xbf16>
    %17 = vector.extract_strided_slice %11 {offsets = [0, 2, 0], sizes = [16, 16, 4], strides = [1, 1, 1]} : vector<18x18x4xbf16> to vector<16x16x4xbf16>
    %18 = vector.extract_strided_slice %5 {offsets = [1, 0, 0], sizes = [16, 16, 4], strides = [1, 1, 1]} : vector<18x24x4xbf16> to vector<16x16x4xbf16>
    %19 = vector.extract_strided_slice %11 {offsets = [1, 0, 0], sizes = [16, 16, 4], strides = [1, 1, 1]} : vector<18x18x4xbf16> to vector<16x16x4xbf16>
    %20 = vector.extract_strided_slice %5 {offsets = [1, 1, 0], sizes = [16, 16, 4], strides = [1, 1, 1]} : vector<18x24x4xbf16> to vector<16x16x4xbf16>
    %21 = vector.extract_strided_slice %11 {offsets = [1, 1, 0], sizes = [16, 16, 4], strides = [1, 1, 1]} : vector<18x18x4xbf16> to vector<16x16x4xbf16>
    %22 = vector.extract_strided_slice %5 {offsets = [1, 2, 0], sizes = [16, 16, 4], strides = [1, 1, 1]} : vector<18x24x4xbf16> to vector<16x16x4xbf16>
    %23 = vector.extract_strided_slice %11 {offsets = [1, 2, 0], sizes = [16, 16, 4], strides = [1, 1, 1]} : vector<18x18x4xbf16> to vector<16x16x4xbf16>
    %24 = vector.extract_strided_slice %5 {offsets = [2, 0, 0], sizes = [16, 16, 4], strides = [1, 1, 1]} : vector<18x24x4xbf16> to vector<16x16x4xbf16>
    %25 = vector.extract_strided_slice %11 {offsets = [2, 0, 0], sizes = [16, 16, 4], strides = [1, 1, 1]} : vector<18x18x4xbf16> to vector<16x16x4xbf16>
    %26 = vector.extract_strided_slice %5 {offsets = [2, 1, 0], sizes = [16, 16, 4], strides = [1, 1, 1]} : vector<18x24x4xbf16> to vector<16x16x4xbf16>
    %27 = vector.extract_strided_slice %11 {offsets = [2, 1, 0], sizes = [16, 16, 4], strides = [1, 1, 1]} : vector<18x18x4xbf16> to vector<16x16x4xbf16>
    %28 = vector.extract_strided_slice %5 {offsets = [2, 2, 0], sizes = [16, 16, 4], strides = [1, 1, 1]} : vector<18x24x4xbf16> to vector<16x16x4xbf16>
    %29 = vector.extract_strided_slice %11 {offsets = [2, 2, 0], sizes = [16, 16, 4], strides = [1, 1, 1]} : vector<18x18x4xbf16> to vector<16x16x4xbf16>
    %30 = tpu.concatenate %12, %13, %14, %15, %16, %17, %18, %19, %20, %21, %22, %23, %24, %25, %26, %27 in 2 : vector<16x16x4xbf16>, vector<16x16x4xbf16>, vector<16x16x4xbf16>, vector<16x16x4xbf16>, vector<16x16x4xbf16>, vector<16x16x4xbf16>, vector<16x16x4xbf16>, vector<16x16x4xbf16>, vector<16x16x4xbf16>, vector<16x16x4xbf16>, vector<16x16x4xbf16>, vector<16x16x4xbf16>, vector<16x16x4xbf16>, vector<16x16x4xbf16>, vector<16x16x4xbf16>, vector<16x16x4xbf16> -> vector<16x16x64xbf16>
    %31 = tpu.concatenate %28, %29 in 2 : vector<16x16x4xbf16>, vector<16x16x4xbf16> -> vector<16x16x8xbf16>
    %32 = tpu.concatenate %30, %31 in 2 : vector<16x16x64xbf16>, vector<16x16x8xbf16> -> vector<16x16x72xbf16>
    %33 = vector.shape_cast %32 : vector<16x16x72xbf16> to vector<256x72xbf16>
    %c0_10 = arith.constant 0 : index
    %c0_11 = arith.constant 0 : index
    %34 = vector.load %arg4[%c0_10, %c0_11] : memref<72x128xbf16, #tpu.memory_space<vmem>>, vector<72x128xbf16>
    %cst_12 = arith.constant dense<0.000000e+00> : vector<256x128xf32>
    %35 = tpu.matmul %33, %34, %cst_12 {dimension_numbers = #tpu.dot_dimension_numbers<[1], [0], [0], [1], [0, 0, 1, 1], [], []>} : vector<256x72xbf16>, vector<72x128xbf16>, vector<256x128xf32> -> vector<256x128xf32>
    %c0_13 = arith.constant 0 : index
    %c0_14 = arith.constant 0 : index
    %36 = vector.load %arg5[%c0_13, %c0_14] : memref<1x128xf32, #tpu.memory_space<vmem>>, vector<1x128xf32>
    %37 = vector.shape_cast %36 : vector<1x128xf32> to vector<128xf32>
    %38 = vector.shape_cast %37 : vector<128xf32> to vector<1x128xf32>
    %39 = vector.broadcast %38 : vector<1x128xf32> to vector<256x128xf32>
    %40 = arith.mulf %35, %39 : vector<256x128xf32>
    %c0_15 = arith.constant 0 : index
    %c0_16 = arith.constant 0 : index
    %41 = vector.load %arg6[%c0_15, %c0_16] : memref<1x128xf32, #tpu.memory_space<vmem>>, vector<1x128xf32>
    %42 = vector.shape_cast %41 : vector<1x128xf32> to vector<128xf32>
    %43 = vector.shape_cast %42 : vector<128xf32> to vector<1x128xf32>
    %44 = vector.broadcast %43 : vector<1x128xf32> to vector<256x128xf32>
    %45 = arith.addf %40, %44 : vector<256x128xf32>
    %cst_17 = arith.constant 0.000000e+00 : f32
    %46 = vector.broadcast %cst_17 : f32 to vector<256x128xf32>
    %47 = arith.maximumf %45, %46 : vector<256x128xf32>
    %cst_18 = arith.constant 0.000000e+00 : f32
    %48 = vector.broadcast %cst_18 : f32 to vector<18x24x128xf32>
    %c0_19 = arith.constant 0 : index
    %c0_20 = arith.constant 0 : index
    %c0_21 = arith.constant 0 : index
    %49 = vector.load %arg11[%c0_19, %c0_20, %c0_21] : memref<18x24x128xf32, #tpu.memory_space<vmem>>, vector<18x24x128xf32>
    tpu.vector_store %arg11[%c0_19, %c0_20, %c0_21], %48 {strides = array<i32>} : memref<18x24x128xf32, #tpu.memory_space<vmem>>, vector<18x24x128xf32>,
    %50 = vector.shape_cast %47 : vector<256x128xf32> to vector<16x16x128xf32>
    %c1 = arith.constant 1 : index
    %c1_22 = arith.constant 1 : index
    %c0_23 = arith.constant 0 : index
    %51 = vector.load %arg11[%c1, %c1_22, %c0_23] : memref<18x24x128xf32, #tpu.memory_space<vmem>>, vector<16x16x128xf32>
    tpu.vector_store %arg11[%c1, %c1_22, %c0_23], %50 {strides = array<i32>} : memref<18x24x128xf32, #tpu.memory_space<vmem>>, vector<16x16x128xf32>,
    %c0_24 = arith.constant 0 : index
    %c0_25 = arith.constant 0 : index
    %c0_26 = arith.constant 0 : index
    %52 = vector.load %arg11[%c0_24, %c0_25, %c0_26] : memref<18x24x128xf32, #tpu.memory_space<vmem>>, vector<16x16x128xf32>
    %c0_27 = arith.constant 0 : index
    %c1_28 = arith.constant 1 : index
    %c0_29 = arith.constant 0 : index
    %53 = vector.load %arg11[%c0_27, %c1_28, %c0_29] : memref<18x24x128xf32, #tpu.memory_space<vmem>>, vector<16x16x128xf32>
    %c0_30 = arith.constant 0 : index
    %c2 = arith.constant 2 : index
    %c0_31 = arith.constant 0 : index
    %54 = vector.load %arg11[%c0_30, %c2, %c0_31] : memref<18x24x128xf32, #tpu.memory_space<vmem>>, vector<16x16x128xf32>
    %c1_32 = arith.constant 1 : index
    %c0_33 = arith.constant 0 : index
    %c0_34 = arith.constant 0 : index
    %55 = vector.load %arg11[%c1_32, %c0_33, %c0_34] : memref<18x24x128xf32, #tpu.memory_space<vmem>>, vector<16x16x128xf32>
    %c1_35 = arith.constant 1 : index
    %c1_36 = arith.constant 1 : index
    %c0_37 = arith.constant 0 : index
    %56 = vector.load %arg11[%c1_35, %c1_36, %c0_37] : memref<18x24x128xf32, #tpu.memory_space<vmem>>, vector<16x16x128xf32>
    %c1_38 = arith.constant 1 : index
    %c2_39 = arith.constant 2 : index
    %c0_40 = arith.constant 0 : index
    %57 = vector.load %arg11[%c1_38, %c2_39, %c0_40] : memref<18x24x128xf32, #tpu.memory_space<vmem>>, vector<16x16x128xf32>
    %c2_41 = arith.constant 2 : index
    %c0_42 = arith.constant 0 : index
    %c0_43 = arith.constant 0 : index
    %58 = vector.load %arg11[%c2_41, %c0_42, %c0_43] : memref<18x24x128xf32, #tpu.memory_space<vmem>>, vector<16x16x128xf32>
    %c2_44 = arith.constant 2 : index
    %c1_45 = arith.constant 1 : index
    %c0_46 = arith.constant 0 : index
    %59 = vector.load %arg11[%c2_44, %c1_45, %c0_46] : memref<18x24x128xf32, #tpu.memory_space<vmem>>, vector<16x16x128xf32>
    %c2_47 = arith.constant 2 : index
    %c2_48 = arith.constant 2 : index
    %c0_49 = arith.constant 0 : index
    %60 = vector.load %arg11[%c2_47, %c2_48, %c0_49] : memref<18x24x128xf32, #tpu.memory_space<vmem>>, vector<16x16x128xf32>
    %61 = tpu.concatenate %52, %53, %54, %55, %56, %57, %58, %59, %60 in 2 : vector<16x16x128xf32>, vector<16x16x128xf32>, vector<16x16x128xf32>, vector<16x16x128xf32>, vector<16x16x128xf32>, vector<16x16x128xf32>, vector<16x16x128xf32>, vector<16x16x128xf32>, vector<16x16x128xf32> -> vector<16x16x1152xf32>
    %62 = vector.shape_cast %61 : vector<16x16x1152xf32> to vector<256x1152xf32>
    %63 = arith.truncf %62 : vector<256x1152xf32> to vector<256x1152xbf16>
    %c0_50 = arith.constant 0 : index
    %c0_51 = arith.constant 0 : index
    %64 = vector.load %arg7[%c0_50, %c0_51] : memref<1152x128xbf16, #tpu.memory_space<vmem>>, vector<1152x128xbf16>
    %cst_52 = arith.constant dense<0.000000e+00> : vector<256x128xf32>
    %65 = tpu.matmul %63, %64, %cst_52 {dimension_numbers = #tpu.dot_dimension_numbers<[1], [0], [0], [1], [0, 0, 1, 1], [], []>} : vector<256x1152xbf16>, vector<1152x128xbf16>, vector<256x128xf32> -> vector<256x128xf32>
    %c0_53 = arith.constant 0 : index
    %c0_54 = arith.constant 0 : index
    %66 = vector.load %arg8[%c0_53, %c0_54] : memref<1x128xf32, #tpu.memory_space<vmem>>, vector<1x128xf32>
    %67 = vector.shape_cast %66 : vector<1x128xf32> to vector<128xf32>
    %68 = vector.shape_cast %67 : vector<128xf32> to vector<1x128xf32>
    %69 = vector.broadcast %68 : vector<1x128xf32> to vector<256x128xf32>
    %70 = arith.mulf %65, %69 : vector<256x128xf32>
    %c0_55 = arith.constant 0 : index
    %c0_56 = arith.constant 0 : index
    %71 = vector.load %arg9[%c0_55, %c0_56] : memref<1x128xf32, #tpu.memory_space<vmem>>, vector<1x128xf32>
    %72 = vector.shape_cast %71 : vector<1x128xf32> to vector<128xf32>
    %73 = vector.shape_cast %72 : vector<128xf32> to vector<1x128xf32>
    %74 = vector.broadcast %73 : vector<1x128xf32> to vector<256x128xf32>
    %75 = arith.addf %70, %74 : vector<256x128xf32>
    %cst_57 = arith.constant 0.000000e+00 : f32
    %76 = vector.broadcast %cst_57 : f32 to vector<256x128xf32>
    %77 = arith.maximumf %75, %76 : vector<256x128xf32>
    %78 = tpu.transpose %77, [1, 0] : vector<256x128xf32> -> vector<128x256xf32>
    %79 = vector.extract_strided_slice %78 {offsets = [0, 0], sizes = [8, 256], strides = [1, 1]} : vector<128x256xf32> to vector<8x256xf32>
    %c0_58 = arith.constant 0 : index
    %c0_59 = arith.constant 0 : index
    %c0_60 = arith.constant 0 : index
    %80 = vector.load %arg10[%c0_58, %c0_59, %c0_60] : memref<1x8x256xf32, #tpu.memory_space<vmem>>, vector<1x8x256xf32>
    %81 = vector.shape_cast %80 : vector<1x8x256xf32> to vector<8x256xf32>
    %82 = vector.shape_cast %79 : vector<8x256xf32> to vector<1x8x256xf32>
    tpu.vector_store %arg10[%c0_58, %c0_59, %c0_60], %82 {strides = array<i32>} : memref<1x8x256xf32, #tpu.memory_space<vmem>>, vector<1x8x256xf32>,
    return
  }
  func.func @transform_0(%arg0: i32) -> (i32, i32, i32) {
    %c0_i32 = arith.constant 0 : i32
    %c0_i32_0 = arith.constant 0 : i32
    %c0_i32_1 = arith.constant 0 : i32
    return %arg0, %c0_i32, %c0_i32_0 : i32, i32, i32
  }
  func.func @transform_1(%arg0: i32) -> (i32, i32, i32, i32) {
    %c0_i32 = arith.constant 0 : i32
    %c0_i32_0 = arith.constant 0 : i32
    %c0_i32_1 = arith.constant 0 : i32
    %c0_i32_2 = arith.constant 0 : i32
    return %arg0, %c0_i32, %c0_i32_0, %c0_i32_1 : i32, i32, i32, i32
  }
  func.func @transform_2(%arg0: i32) -> (i32, i32) {
    %c0_i32 = arith.constant 0 : i32
    %c0_i32_0 = arith.constant 0 : i32
    %c0_i32_1 = arith.constant 0 : i32
    return %c0_i32, %c0_i32_0 : i32, i32
  }
  func.func @transform_3(%arg0: i32) -> (i32, i32) {
    %c0_i32 = arith.constant 0 : i32
    %c0_i32_0 = arith.constant 0 : i32
    %c0_i32_1 = arith.constant 0 : i32
    return %c0_i32, %c0_i32_0 : i32, i32
  }
  func.func @transform_4(%arg0: i32) -> (i32, i32) {
    %c0_i32 = arith.constant 0 : i32
    %c0_i32_0 = arith.constant 0 : i32
    %c0_i32_1 = arith.constant 0 : i32
    return %c0_i32, %c0_i32_0 : i32, i32
  }
  func.func @transform_5(%arg0: i32) -> (i32, i32) {
    %c0_i32 = arith.constant 0 : i32
    %c0_i32_0 = arith.constant 0 : i32
    %c0_i32_1 = arith.constant 0 : i32
    return %c0_i32, %c0_i32_0 : i32, i32
  }
  func.func @transform_6(%arg0: i32) -> (i32, i32) {
    %c0_i32 = arith.constant 0 : i32
    %c0_i32_0 = arith.constant 0 : i32
    %c0_i32_1 = arith.constant 0 : i32
    return %c0_i32, %c0_i32_0 : i32, i32
  }
  func.func @transform_7(%arg0: i32) -> (i32, i32) {
    %c0_i32 = arith.constant 0 : i32
    %c0_i32_0 = arith.constant 0 : i32
    %c0_i32_1 = arith.constant 0 : i32
    return %c0_i32, %c0_i32_0 : i32, i32
  }
  func.func @transform_8(%arg0: i32) -> (i32, i32) {
    %c0_i32 = arith.constant 0 : i32
    %c0_i32_0 = arith.constant 0 : i32
    %c0_i32_1 = arith.constant 0 : i32
    return %c0_i32, %c0_i32_0 : i32, i32
  }
  func.func @transform_9(%arg0: i32) -> (i32, i32, i32) {
    %c0_i32 = arith.constant 0 : i32
    %c0_i32_0 = arith.constant 0 : i32
    %c0_i32_1 = arith.constant 0 : i32
    return %arg0, %c0_i32, %c0_i32_0 : i32, i32, i32
  }
}

</mosaic_0001>

<llo_original>
// kernel: decoder_block.1
$region0: #{decoder_block.1}
  #allocation0 [shape = 'u32[]', space=smem, size = 0x4, offset = 0x4, fixed_abs, tag = 'smem constant byte address 0x4 - core index']
  #allocation1 [shape = 'u32[144,128]{1,0:T(1,128)}', space=vmem, size = 0x12000, scoped, tag = 'internal scratch']
  #allocation2 [shape = 'f32[18,24,128]{2,1,0:T(8,128)}', space=vmem, size = 0x36000, scoped, tag = 'scratch operand']
  %s0 = inlined_call_operand.vmem [shape: bf16[2,64,4], index: 0, kind: input, shape index: {}]
  %s1 = inlined_call_operand.vmem [shape: bf16[2,16,16,4], index: 1, kind: input, shape index: {}]
  %s2 = inlined_call_operand.vmem [shape: bf16[432,64], index: 2, kind: input, shape index: {}]
  %s3 = inlined_call_operand.vmem [shape: bf16[72,128], index: 3, kind: input, shape index: {}]
  %s4 = inlined_call_operand.vmem [shape: f32[1,128], index: 4, kind: input, shape index: {}]
  %s5 = inlined_call_operand.vmem [shape: f32[1,128], index: 5, kind: input, shape index: {}]
  %s6 = inlined_call_operand.vmem [shape: bf16[1152,128], index: 6, kind: input, shape index: {}]
  %s7 = inlined_call_operand.vmem [shape: f32[1,128], index: 7, kind: input, shape index: {}]
  %s8 = inlined_call_operand.vmem [shape: f32[1,128], index: 8, kind: input, shape index: {}]
  %s9 = inlined_call_operand.vmem [shape: f32[2,8,256], index: 9, kind: output, shape index: {}]
  %s10 = sld [smem:[#allocation0]]
  $region69: #{decoder_block.1} parent=0
    _
  %s12 = ssub.s32 1, %s10
  %s13 = scalar_select 0, %s12, %s10
  loop: start=0, step=1, limit=4
  $region2: #{decoder_block.1} parent=0 // loop_pre_header
    _
  $region3: #{decoder_block.1} parent=0 // loop_header
    %s15 = sphi 0, %s19
    %p16 = scmp.ge.s32.totalorder %s15, 4
    %s25 = sphi 0, %s27
    %s28 = sphi 0, %s25
    %s29 = sphi 0, %s28
    %s45 = sphi 0, %s29
    %s51 = sphi 0, %s53
    %s54 = sphi 0, %s51
    %s55 = sphi 0, %s54
    %s71 = sphi 0, %s55
    %s75 = sphi 0, %s75
    %s77 = sphi 0, %s75
    %s78 = sphi 0, %s77
    %s92 = sphi 0, %s78
    %s96 = sphi 0, %s96
    %s98 = sphi 0, %s96
    %s99 = sphi 0, %s98
    %s113 = sphi 0, %s99
    %s117 = sphi 0, %s117
    %s119 = sphi 0, %s117
    %s120 = sphi 0, %s119
    %s134 = sphi 0, %s120
    %s138 = sphi 0, %s138
    %s140 = sphi 0, %s138
    %s141 = sphi 0, %s140
    %s155 = sphi 0, %s141
    %s159 = sphi 0, %s159
    %s161 = sphi 0, %s159
    %s162 = sphi 0, %s161
    %s176 = sphi 0, %s162
    %s180 = sphi 0, %s180
    %s182 = sphi 0, %s180
    %s183 = sphi 0, %s182
    %s197 = sphi 0, %s183
    %s201 = sphi 0, %s201
    %s203 = sphi 0, %s201
    %s204 = sphi 0, %s203
    %s218 = sphi 0, %s204
    %s224 = sphi 0, %s226
    %s227 = sphi 0, %s224
    %s228 = sphi 0, %s227
    %s244 = sphi 0, %s228
  $region4: #{decoder_block.1} parent=0 // loop_header_branch
    %18 = sbr.rel (%p16) target = $region8
  $region5: #{decoder_block.1} parent=0 // loop_body
    %s20 = ssub.s32 %s15, 1
    %s21 = ssub.s32 %s15, 2
    %s22 = sadd.s32 %s15, 1
    %s23 = ssub.s32 %s15, %s22
    %p24 = scmp.eq.s32.totalorder %s23, 0
    %s26 = sadd.s32 %s25, 1
    %s27 = scalar_select %p24, %s25, %s26
    %p30 = pneg %p24
    %p31 = scmp.eq.s32.totalorder %s15, 1
    %p32 = por %p30, %p31
    %p33 = scmp.ne.s32.totalorder %s25, %s28
    %p34 = scmp.eq.s32.totalorder %s15, 0
    %p35 = por %p33, %p34
    %p36 = scmp.ne.s32.totalorder %s25, %s28
    %p37 = scmp.eq.s32.totalorder %s20, 1
    %p38 = por %p36, %p37
    %p39 = scmp.ne.s32.totalorder %s28, %s29
    %p40 = scmp.eq.s32.totalorder %s20, 0
    %p41 = por %p39, %p40
    %p42 = scmp.ne.s32.totalorder %s28, %s29
    %p43 = scmp.eq.s32.totalorder %s21, 1
    %p44 = por %p42, %p43
    %p46 = scmp.ne.s32.totalorder %s29, %s45
    %p47 = scmp.eq.s32.totalorder %s21, 0
    %p48 = por %p46, %p47
    %s49 = ssub.s32 %s15, %s22
    %p50 = scmp.eq.s32.totalorder %s49, 0
    %s52 = sadd.s32 %s51, 1
    %s53 = scalar_select %p50, %s51, %s52
    %p56 = pneg %p50
    %p57 = scmp.eq.s32.totalorder %s15, 1
    %p58 = por %p56, %p57
    %p59 = scmp.ne.s32.totalorder %s51, %s54
    %p60 = scmp.eq.s32.totalorder %s15, 0
    %p61 = por %p59, %p60
    %p62 = scmp.ne.s32.totalorder %s51, %s54
    %p63 = scmp.eq.s32.totalorder %s20, 1
    %p64 = por %p62, %p63
    %p65 = scmp.ne.s32.totalorder %s54, %s55
    %p66 = scmp.eq.s32.totalorder %s20, 0
    %p67 = por %p65, %p66
    %p68 = scmp.ne.s32.totalorder %s54, %s55
    %p69 = scmp.eq.s32.totalorder %s21, 1
    %p70 = por %p68, %p69
    %p72 = scmp.ne.s32.totalorder %s55, %s71
    %p73 = scmp.eq.s32.totalorder %s21, 0
    %p74 = por %p72, %p73
    %s76 = sadd.s32 %s75, 1
    %p79 = scmp.eq.s32.totalorder %s15, 1
    %p80 = scmp.ne.s32.totalorder %s75, %s77
    %p81 = scmp.eq.s32.totalorder %s15, 0
    %p82 = por %p80, %p81
    %p83 = scmp.ne.s32.totalorder %s75, %s77
    %p84 = scmp.eq.s32.totalorder %s20, 1
    %p85 = por %p83, %p84
    %p86 = scmp.ne.s32.totalorder %s77, %s78
    %p87 = scmp.eq.s32.totalorder %s20, 0
    %p88 = por %p86, %p87
    %p89 = scmp.ne.s32.totalorder %s77, %s78
    %p90 = scmp.eq.s32.totalorder %s21, 1
    %p91 = por %p89, %p90
    %p93 = scmp.ne.s32.totalorder %s78, %s92
    %p94 = scmp.eq.s32.totalorder %s21, 0
    %p95 = por %p93, %p94
    %s97 = sadd.s32 %s96, 1
    %p100 = scmp.eq.s32.totalorder %s15, 1
    %p101 = scmp.ne.s32.totalorder %s96, %s98
    %p102 = scmp.eq.s32.totalorder %s15, 0
    %p103 = por %p101, %p102
    %p104 = scmp.ne.s32.totalorder %s96, %s98
    %p105 = scmp.eq.s32.totalorder %s20, 1
    %p106 = por %p104, %p105
    %p107 = scmp.ne.s32.totalorder %s98, %s99
    %p108 = scmp.eq.s32.totalorder %s20, 0
    %p109 = por %p107, %p108
    %p110 = scmp.ne.s32.totalorder %s98, %s99
    %p111 = scmp.eq.s32.totalorder %s21, 1
    %p112 = por %p110, %p111
    %p114 = scmp.ne.s32.totalorder %s99, %s113
    %p115 = scmp.eq.s32.totalorder %s21, 0
    %p116 = por %p114, %p115
    %s118 = sadd.s32 %s117, 1
    %p121 = scmp.eq.s32.totalorder %s15, 1
    %p122 = scmp.ne.s32.totalorder %s117, %s119
    %p123 = scmp.eq.s32.totalorder %s15, 0
    %p124 = por %p122, %p123
    %p125 = scmp.ne.s32.totalorder %s117, %s119
    %p126 = scmp.eq.s32.totalorder %s20, 1
    %p127 = por %p125, %p126
    %p128 = scmp.ne.s32.totalorder %s119, %s120
    %p129 = scmp.eq.s32.totalorder %s20, 0
    %p130 = por %p128, %p129
    %p131 = scmp.ne.s32.totalorder %s119, %s120
    %p132 = scmp.eq.s32.totalorder %s21, 1
    %p133 = por %p131, %p132
    %p135 = scmp.ne.s32.totalorder %s120, %s134
    %p136 = scmp.eq.s32.totalorder %s21, 0
    %p137 = por %p135, %p136
    %s139 = sadd.s32 %s138, 1
    %p142 = scmp.eq.s32.totalorder %s15, 1
    %p143 = scmp.ne.s32.totalorder %s138, %s140
    %p144 = scmp.eq.s32.totalorder %s15, 0
    %p145 = por %p143, %p144
    %p146 = scmp.ne.s32.totalorder %s138, %s140
    %p147 = scmp.eq.s32.totalorder %s20, 1
    %p148 = por %p146, %p147
    %p149 = scmp.ne.s32.totalorder %s140, %s141
    %p150 = scmp.eq.s32.totalorder %s20, 0
    %p151 = por %p149, %p150
    %p152 = scmp.ne.s32.totalorder %s140, %s141
    %p153 = scmp.eq.s32.totalorder %s21, 1
    %p154 = por %p152, %p153
    %p156 = scmp.ne.s32.totalorder %s141, %s155
    %p157 = scmp.eq.s32.totalorder %s21, 0
    %p158 = por %p156, %p157
    %s160 = sadd.s32 %s159, 1
    %p163 = scmp.eq.s32.totalorder %s15, 1
    %p164 = scmp.ne.s32.totalorder %s159, %s161
    %p165 = scmp.eq.s32.totalorder %s15, 0
    %p166 = por %p164, %p165
    %p167 = scmp.ne.s32.totalorder %s159, %s161
    %p168 = scmp.eq.s32.totalorder %s20, 1
    %p169 = por %p167, %p168
    %p170 = scmp.ne.s32.totalorder %s161, %s162
    %p171 = scmp.eq.s32.totalorder %s20, 0
    %p172 = por %p170, %p171
    %p173 = scmp.ne.s32.totalorder %s161, %s162
    %p174 = scmp.eq.s32.totalorder %s21, 1
    %p175 = por %p173, %p174
    %p177 = scmp.ne.s32.totalorder %s162, %s176
    %p178 = scmp.eq.s32.totalorder %s21, 0
    %p179 = por %p177, %p178
    %s181 = sadd.s32 %s180, 1
    %p184 = scmp.eq.s32.totalorder %s15, 1
    %p185 = scmp.ne.s32.totalorder %s180, %s182
    %p186 = scmp.eq.s32.totalorder %s15, 0
    %p187 = por %p185, %p186
    %p188 = scmp.ne.s32.totalorder %s180, %s182
    %p189 = scmp.eq.s32.totalorder %s20, 1
    %p190 = por %p188, %p189
    %p191 = scmp.ne.s32.totalorder %s182, %s183
    %p192 = scmp.eq.s32.totalorder %s20, 0
    %p193 = por %p191, %p192
    %p194 = scmp.ne.s32.totalorder %s182, %s183
    %p195 = scmp.eq.s32.totalorder %s21, 1
    %p196 = por %p194, %p195
    %p198 = scmp.ne.s32.totalorder %s183, %s197
    %p199 = scmp.eq.s32.totalorder %s21, 0
    %p200 = por %p198, %p199
    %s202 = sadd.s32 %s201, 1
    %p205 = scmp.eq.s32.totalorder %s15, 1
    %p206 = scmp.ne.s32.totalorder %s201, %s203
    %p207 = scmp.eq.s32.totalorder %s15, 0
    %p208 = por %p206, %p207
    %p209 = scmp.ne.s32.totalorder %s201, %s203
    %p210 = scmp.eq.s32.totalorder %s20, 1
    %p211 = por %p209, %p210
    %p212 = scmp.ne.s32.totalorder %s203, %s204
    %p213 = scmp.eq.s32.totalorder %s20, 0
    %p214 = por %p212, %p213
    %p215 = scmp.ne.s32.totalorder %s203, %s204
    %p216 = scmp.eq.s32.totalorder %s21, 1
    %p217 = por %p215, %p216
    %p219 = scmp.ne.s32.totalorder %s204, %s218
    %p220 = scmp.eq.s32.totalorder %s21, 0
    %p221 = por %p219, %p220
    %s222 = ssub.s32 %s15, %s22
    %p223 = scmp.eq.s32.totalorder %s222, 0
    %s225 = sadd.s32 %s224, 1
    %s226 = scalar_select %p223, %s224, %s225
    %p229 = pneg %p223
    %p230 = scmp.eq.s32.totalorder %s15, 1
    %p231 = por %p229, %p230
    %p232 = scmp.ne.s32.totalorder %s224, %s227
    %p233 = scmp.eq.s32.totalorder %s15, 0
    %p234 = por %p232, %p233
    %p235 = scmp.ne.s32.totalorder %s224, %s227
    %p236 = scmp.eq.s32.totalorder %s20, 1
    %p237 = por %p235, %p236
    %p238 = scmp.ne.s32.totalorder %s227, %s228
    %p239 = scmp.eq.s32.totalorder %s20, 0
    %p240 = por %p238, %p239
    %p241 = scmp.ne.s32.totalorder %s227, %s228
    %p242 = scmp.eq.s32.totalorder %s21, 1
    %p243 = por %p241, %p242
    %p245 = scmp.ne.s32.totalorder %s228, %s244
    %p246 = scmp.eq.s32.totalorder %s21, 0
    %p247 = por %p245, %p246
    %p248 = scmp.le.s32.totalorder 1, %s15
    %p249 = scmp.lt.s32.totalorder %s15, 3
    %p250 = pnand %p248, %p249
    %p251 = pneg %p250
    // Predicated region
    $region9: #{decoder_block.1} parent=5 // pred_check
      _
    $region10: #{decoder_block.1} parent=5 // pred_check_branch
      %253 = sbr.rel (%p250) target = $region12
    $region11: #{decoder_block.1} parent=5 // pred_region
      %s254 = ssub.s32 %s15, 1
      // Predicated region
      $region13: #{decoder_block.1} parent=11 // pred_check
        %p255 = pneg %p88
      $region14: #{decoder_block.1} parent=11 // pred_check_branch
        %257 = sbr.rel (%p255) target = $region16
      $region15: #{decoder_block.1} parent=11 // pred_region
        _
      $region16: #{decoder_block.1} parent=11 // pred_fallthru
        _
      // Predicated region
      $region17: #{decoder_block.1} parent=11 // pred_check
        %p258 = pneg %p109
      $region18: #{decoder_block.1} parent=11 // pred_check_branch
        %260 = sbr.rel (%p258) target = $region20
      $region19: #{decoder_block.1} parent=11 // pred_region
        _
      $region20: #{decoder_block.1} parent=11 // pred_fallthru
        _
      // Predicated region
      $region21: #{decoder_block.1} parent=11 // pred_check
        %p261 = pneg %p130
      $region22: #{decoder_block.1} parent=11 // pred_check_branch
        %263 = sbr.rel (%p261) target = $region24
      $region23: #{decoder_block.1} parent=11 // pred_region
        _
      $region24: #{decoder_block.1} parent=11 // pred_fallthru
        _
      // Predicated region
      $region25: #{decoder_block.1} parent=11 // pred_check
        %p264 = pneg %p151
      $region26: #{decoder_block.1} parent=11 // pred_check_branch
        %266 = sbr.rel (%p264) target = $region28
      $region27: #{decoder_block.1} parent=11 // pred_region
        _
      $region28: #{decoder_block.1} parent=11 // pred_fallthru
        _
      // Predicated region
      $region29: #{decoder_block.1} parent=11 // pred_check
        %p267 = pneg %p172
      $region30: #{decoder_block.1} parent=11 // pred_check_branch
        %269 = sbr.rel (%p267) target = $region32
      $region31: #{decoder_block.1} parent=11 // pred_region
        _
      $region32: #{decoder_block.1} parent=11 // pred_fallthru
        _
      // Predicated region
      $region33: #{decoder_block.1} parent=11 // pred_check
        %p270 = pneg %p193
      $region34: #{decoder_block.1} parent=11 // pred_check_branch
        %272 = sbr.rel (%p270) target = $region36
      $region35: #{decoder_block.1} parent=11 // pred_region
        _
      $region36: #{decoder_block.1} parent=11 // pred_fallthru
        _
      // Predicated region
      $region37: #{decoder_block.1} parent=11 // pred_check
        %p273 = pneg %p214
      $region38: #{decoder_block.1} parent=11 // pred_check_branch
        %275 = sbr.rel (%p273) target = $region40
      $region39: #{decoder_block.1} parent=11 // pred_region
        _
      $region40: #{decoder_block.1} parent=11 // pred_fallthru
        _
    $region12: #{decoder_block.1} parent=5 // pred_fallthru
      _
    %p276 = scmp.lt.s32.totalorder %s15, 2
    // Predicated region
    $region41: #{decoder_block.1} parent=5 // pred_check
      %p277 = pneg %p276
    $region42: #{decoder_block.1} parent=5 // pred_check_branch
      %279 = sbr.rel (%p277) target = $region44
    $region43: #{decoder_block.1} parent=5 // pred_region
      // Predicated region
      $region45: #{decoder_block.1} parent=43 // pred_check
        %p280 = pneg %p35
      $region46: #{decoder_block.1} parent=43 // pred_check_branch
        %282 = sbr.rel (%p280) target = $region48
      $region47: #{decoder_block.1} parent=43 // pred_region
        %p283 = scmp.lt.s32.totalorder %s15, 1
        %s284 = scalar_select %p283, %s15, 1
        %s285 = smul.addr %s284, 8
        %s286 = smul.addr %s285, 4
        %s287 = scalar_lea.vmem %s0, %s286
      $region48: #{decoder_block.1} parent=43 // pred_fallthru
        _
      // Predicated region
      $region49: #{decoder_block.1} parent=43 // pred_check
        %p288 = pneg %p61
      $region50: #{decoder_block.1} parent=43 // pred_check_branch
        %290 = sbr.rel (%p288) target = $region52
      $region51: #{decoder_block.1} parent=43 // pred_region
        %p291 = scmp.lt.s32.totalorder %s15, 1
        %s292 = scalar_select %p291, %s15, 1
        %s293 = smul.addr %s292, 32
        %s294 = smul.addr %s293, 4
        %s295 = scalar_lea.vmem %s1, %s294
      $region52: #{decoder_block.1} parent=43 // pred_fallthru
        _
    $region44: #{decoder_block.1} parent=5 // pred_fallthru
      _
    %p296 = scmp.le.s32.totalorder 1, %s15
    %p297 = scmp.lt.s32.totalorder %s15, 3
    %p298 = pnand %p296, %p297
    %p299 = pneg %p298
    // Predicated region
    $region53: #{decoder_block.1} parent=5 // pred_check
      _
    $region54: #{decoder_block.1} parent=5 // pred_check_branch
      %301 = sbr.rel (%p298) target = $region56
    $region55: #{decoder_block.1} parent=5 // pred_region
      %s302 = ssub.s32 %s15, 1
      %p303 = scmp.lt.s32.totalorder %s20, 1
      %s304 = scalar_select %p303, %s20, 1
      %s305 = smul.addr %s304, 8
      %s306 = smul.addr %s305, 4
      %s307 = scalar_lea.vmem %s0, %s306
      %p308 = pneg %p41
      %p309 = pneg %p38
      %p310 = scmp.lt.s32.totalorder %s20, 1
      %s311 = scalar_select %p310, %s20, 1
      %s312 = smul.addr %s311, 32
      %s313 = smul.addr %s312, 4
      %s314 = scalar_lea.vmem %s1, %s313
      %p315 = pneg %p67
      %p316 = pneg %p64
      %p317 = pneg %p88
      %p318 = pneg %p85
      %p319 = pneg %p109
      %p320 = pneg %p106
      %p321 = pneg %p130
      %p322 = pneg %p127
      %p323 = pneg %p151
      %p324 = pneg %p148
      %p325 = pneg %p172
      %p326 = pneg %p169
      %p327 = pneg %p193
      %p328 = pneg %p190
      %p329 = pneg %p214
      %p330 = pneg %p211
      %p331 = pneg %p240
      %p332 = pneg %p237
      %p333 = scmp.lt.s32.totalorder %s20, 1
      %s334 = scalar_select %p333, %s20, 1
      %s335 = smul.addr %s334, 2
      %s336 = smul.addr %s335, 8
      %s337 = scalar_lea.vmem %s9, %s336
      %p338 = scmp.lt.s32.totalorder %s20, 1
      %s339 = scalar_select %p338, %s20, 1
      %s340 = smul.addr %s339, 8
      %s341 = smul.addr %s340, 4
      %s342 = scalar_lea.vmem %s0, %s341
      %p343 = scmp.lt.s32.totalorder %s20, 1
      %s344 = scalar_select %p343, %s20, 1
      %s345 = smul.addr %s344, 32
      %s346 = smul.addr %s345, 4
      %s347 = scalar_lea.vmem %s1, %s346
      %p348 = scmp.lt.s32.totalorder %s20, 1
      %s349 = scalar_select %p348, %s20, 1
      %s350 = smul.addr %s349, 2
      %s351 = smul.addr %s350, 8
      %s352 = scalar_lea.vmem %s9, %s351
      %v354 = vld [vmem:[%s2] sm:$0xf]
      %v355 = vld [vmem:[%s2 + $0x4] sm:$0xf]
      %v356 = vld [vmem:[%s2 + $0x8] sm:$0xf]
      %v357 = vld [vmem:[%s2 + $0xc] sm:$0xf]
      %v358 = vld [vmem:[%s2 + $0x10] sm:$0xf]
      %v359 = vld [vmem:[%s2 + $0x14] sm:$0xf]
      %v360 = vld [vmem:[%s2 + $0x18] sm:$0xf]
      %v361 = vld [vmem:[%s2 + $0x1c] sm:$0xf]
      %v362 = vld [vmem:[%s2 + $0x20] sm:$0xf]
      %v363 = vld [vmem:[%s2 + $0x24] sm:$0xf]
      %v364 = vld [vmem:[%s2 + $0x28] sm:$0xf]
      %v365 = vld [vmem:[%s2 + $0x2c] sm:$0xf]
      %v366 = vld [vmem:[%s2 + $0x30] sm:$0xf]
      %v367 = vld [vmem:[%s2 + $0x34] sm:$0xf]
      %v368 = vld [vmem:[%s2 + $0x38] sm:$0xf]
      %v369 = vld [vmem:[%s2 + $0x3c] sm:$0xf]
      %v370 = vld [vmem:[%s2 + $0x40] sm:$0xf]
      %v371 = vld [vmem:[%s2 + $0x44] sm:$0xf]
      %v372 = vld [vmem:[%s2 + $0x48] sm:$0xf]
      %v373 = vld [vmem:[%s2 + $0x4c] sm:$0xf]
      %v374 = vld [vmem:[%s2 + $0x50] sm:$0xf]
      %v375 = vld [vmem:[%s2 + $0x54] sm:$0xf]
      %v376 = vld [vmem:[%s2 + $0x58] sm:$0xf]
      %v377 = vld [vmem:[%s2 + $0x5c] sm:$0xf]
      %v378 = vld [vmem:[%s2 + $0x60] sm:$0xf]
      %v379 = vld [vmem:[%s2 + $0x64] sm:$0xf]
      %v380 = vld [vmem:[%s2 + $0x68] sm:$0xf]
      %v381 = vld [vmem:[%s2 + $0x6c] sm:$0xf]
      %v382 = vld [vmem:[%s2 + $0x70] sm:$0xf]
      %v383 = vld [vmem:[%s2 + $0x74] sm:$0xf]
      %v384 = vld [vmem:[%s2 + $0x78] sm:$0xf]
      %v385 = vld [vmem:[%s2 + $0x7c] sm:$0xf]
      %v386 = vld [vmem:[%s2 + $0x80] sm:$0xf]
      %v387 = vld [vmem:[%s2 + $0x84] sm:$0xf]
      %v388 = vld [vmem:[%s2 + $0x88] sm:$0xf]
      %v389 = vld [vmem:[%s2 + $0x8c] sm:$0xf]
      %v390 = vld [vmem:[%s2 + $0x90] sm:$0xf]
      %v391 = vld [vmem:[%s2 + $0x94] sm:$0xf]
      %v392 = vld [vmem:[%s2 + $0x98] sm:$0xf]
      %v393 = vld [vmem:[%s2 + $0x9c] sm:$0xf]
      %v394 = vld [vmem:[%s2 + $0xa0] sm:$0xf]
      %v395 = vld [vmem:[%s2 + $0xa4] sm:$0xf]
      %v396 = vld [vmem:[%s2 + $0xa8] sm:$0xf]
      %v397 = vld [vmem:[%s2 + $0xac] sm:$0xf]
      %v398 = vld [vmem:[%s2 + $0xb0] sm:$0xf]
      %v399 = vld [vmem:[%s2 + $0xb4] sm:$0xf]
      %v400 = vld [vmem:[%s2 + $0xb8] sm:$0xf]
      %v401 = vld [vmem:[%s2 + $0xbc] sm:$0xf]
      %v402 = vld [vmem:[%s2 + $0xc0] sm:$0xf]
      %v403 = vld [vmem:[%s2 + $0xc4] sm:$0xf]
      %v404 = vld [vmem:[%s2 + $0xc8] sm:$0xf]
      %v405 = vld [vmem:[%s2 + $0xcc] sm:$0xf]
      %v406 = vld [vmem:[%s2 + $0xd0] sm:$0xf]
      %v407 = vld [vmem:[%s2 + $0xd4] sm:$0xf]
      %v408 = vld [vmem:[%s342] sm:$0xf]
      %v409 = vld [vmem:[%s342 + $0x4] sm:$0xf]
      %v410 = vld [vmem:[%s342 + $0x8] sm:$0xf]
      %v411 = vld [vmem:[%s342 + $0xc] sm:$0xf]
      %v412 = vld [vmem:[%s342 + $0x10] sm:$0xf]
      %v413 = vld [vmem:[%s342 + $0x14] sm:$0xf]
      %v414 = vld [vmem:[%s342 + $0x18] sm:$0xf]
      %v415 = vld [vmem:[%s342 + $0x1c] sm:$0xf]
      %v470 = vunpack.c.l.b16 %v354
      %v471 = vunpack.c.l.b16 %v355
      %v472 = vunpack.c.l.b16 %v356
      %v473 = vunpack.c.l.b16 %v357
      %v474 = vunpack.c.l.b16 %v358
      %v475 = vunpack.c.l.b16 %v359
      %v476 = vunpack.c.l.b16 %v360
      %v477 = vunpack.c.l.b16 %v361
      %v478 = vunpack.c.l.b16 %v362
      %v479 = vunpack.c.l.b16 %v363
      %v480 = vunpack.c.l.b16 %v364
      %v481 = vunpack.c.l.b16 %v365
      %v482 = vunpack.c.l.b16 %v366
      %v483 = vunpack.c.l.b16 %v367
      %v484 = vunpack.c.l.b16 %v368
      %v485 = vunpack.c.l.b16 %v369
      %v486 = vunpack.c.l.b16 %v370
      %v487 = vunpack.c.l.b16 %v371
      %v488 = vunpack.c.l.b16 %v372
      %v489 = vunpack.c.l.b16 %v373
      %v490 = vunpack.c.l.b16 %v374
      %v491 = vunpack.c.l.b16 %v375
      %v492 = vunpack.c.l.b16 %v376
      %v493 = vunpack.c.l.b16 %v377
      %v494 = vunpack.c.l.b16 %v378
      %v495 = vunpack.c.l.b16 %v379
      %v496 = vunpack.c.l.b16 %v380
      %v497 = vunpack.c.l.b16 %v381
      %v498 = vunpack.c.l.b16 %v382
      %v499 = vunpack.c.l.b16 %v383
      %v500 = vunpack.c.l.b16 %v384
      %v501 = vunpack.c.l.b16 %v385
      %v502 = vunpack.c.l.b16 %v386
      %v503 = vunpack.c.l.b16 %v387
      %v504 = vunpack.c.l.b16 %v388
      %v505 = vunpack.c.l.b16 %v389
      %v506 = vunpack.c.l.b16 %v390
      %v507 = vunpack.c.l.b16 %v391
      %v508 = vunpack.c.l.b16 %v392
      %v509 = vunpack.c.l.b16 %v393
      %v510 = vunpack.c.l.b16 %v394
      %v511 = vunpack.c.l.b16 %v395
      %v512 = vunpack.c.l.b16 %v396
      %v513 = vunpack.c.l.b16 %v397
      %v514 = vunpack.c.l.b16 %v398
      %v515 = vunpack.c.l.b16 %v399
      %v516 = vunpack.c.l.b16 %v400
      %v517 = vunpack.c.l.b16 %v401
      %v518 = vunpack.c.l.b16 %v402
      %v519 = vunpack.c.l.b16 %v403
      %v520 = vunpack.c.l.b16 %v404
      %v521 = vunpack.c.l.b16 %v405
      %v522 = vunpack.c.l.b16 %v406
      %v523 = vunpack.c.l.b16 %v407
      %v524 = vpack.c.b16 %v471, %v470
      %v525 = vpack.c.b16 %v473, %v472
      %v526 = vpack.c.b16 %v475, %v474
      %v527 = vpack.c.b16 %v477, %v476
      %v528 = vpack.c.b16 %v479, %v478
      %v529 = vpack.c.b16 %v481, %v480
      %v530 = vpack.c.b16 %v483, %v482
      %v531 = vpack.c.b16 %v485, %v484
      %v532 = vpack.c.b16 %v487, %v486
      %v533 = vpack.c.b16 %v489, %v488
      %v534 = vpack.c.b16 %v491, %v490
      %v535 = vpack.c.b16 %v493, %v492
      %v536 = vpack.c.b16 %v495, %v494
      %v537 = vpack.c.b16 %v497, %v496
      %v538 = vpack.c.b16 %v499, %v498
      %v539 = vpack.c.b16 %v501, %v500
      %v540 = vpack.c.b16 %v503, %v502
      %v541 = vpack.c.b16 %v505, %v504
      %v542 = vpack.c.b16 %v507, %v506
      %v543 = vpack.c.b16 %v509, %v508
      %v544 = vpack.c.b16 %v511, %v510
      %v545 = vpack.c.b16 %v513, %v512
      %v546 = vpack.c.b16 %v515, %v514
      %v547 = vpack.c.b16 %v517, %v516
      %v548 = vpack.c.b16 %v519, %v518
      %v549 = vpack.c.b16 %v521, %v520
      %v550 = vpack.c.b16 %v523, %v522
      %v559 = vunpack.c.l.b16 %v408
      %v560 = vunpack.c.l.b16 %v409
      %v561 = vunpack.c.l.b16 %v410
      %v562 = vunpack.c.l.b16 %v411
      %v563 = vunpack.c.l.b16 %v412
      %v564 = vunpack.c.l.b16 %v413
      %v565 = vunpack.c.l.b16 %v414
      %v566 = vunpack.c.l.b16 %v415
      %v567 = vpack.c.b16 %v560, %v559
      %v568 = vpack.c.b16 %v562, %v561
      %v569 = vpack.c.b16 %v564, %v563
      %v570 = vpack.c.b16 %v566, %v565
      %vm575 = vcmask 523264
      %v577 = vsel %vm575, %v524, 0
      %v580 = vsel %vm575, %v525, 0
      %v583 = vsel %vm575, %v526, 0
      %v586 = vsel %vm575, %v527, 0
      %v589 = vsel %vm575, %v528, 0
      %v592 = vsel %vm575, %v529, 0
      %v595 = vsel %vm575, %v530, 0
      %v598 = vsel %vm575, %v531, 0
      %v601 = vsel %vm575, %v532, 0
      %v604 = vsel %vm575, %v533, 0
      %v607 = vsel %vm575, %v534, 0
      %v610 = vsel %vm575, %v535, 0
      %v613 = vsel %vm575, %v536, 0
      %v616 = vsel %vm575, %v537, 0
      %v619 = vsel %vm575, %v538, 0
      %v622 = vsel %vm575, %v539, 0
      %v625 = vsel %vm575, %v540, 0
      %v628 = vsel %vm575, %v541, 0
      %v631 = vsel %vm575, %v542, 0
      %v634 = vsel %vm575, %v543, 0
      %v637 = vsel %vm575, %v544, 0
      %v640 = vsel %vm575, %v545, 0
      %v643 = vsel %vm575, %v546, 0
      %v646 = vsel %vm575, %v547, 0
      %v649 = vsel %vm575, %v548, 0
      %v652 = vsel %vm575, %v549, 0
      %v655 = vsel %vm575, %v550, 0
      %657 = vmatprep.subr.bf16.mxu0 0
      %658 = vmatpush1.bf16.msra.mxu0 0
      %659 = vmatprep.subr.bf16.mxu0 0
      %660 = vmatpush1.bf16.msra.mxu0 0
      %661 = vmatprep.subr.bf16.mxu0 0
      %662 = vmatpush1.bf16.msra.mxu0 0
      %663 = vmatprep.subr.bf16.mxu0 0
      %664 = vmatpush1.bf16.msra.mxu0 0
      %665 = vmatprep.subr.bf16.mxu0 0
      %666 = vmatpush1.bf16.msra.mxu0 %v570
      %667 = vmatprep.subr.bf16.mxu0 0
      %668 = vmatpush1.bf16.msra.mxu0 %v569
      %669 = vmatprep.subr.bf16.mxu0 0
      %670 = vmatpush1.bf16.msra.mxu0 %v568
      %671 = vmatprep.subr.bf16.mxu0 0
      %672 = vmatpush1.bf16.msra.mxu0 %v567
      %673 = vmatprep.subr.bf16.mxu0 0
      %674 = vmatpush2.bf16.msra.mxu0 0
      %675 = vmatprep.subr.bf16.mxu0 0
      %676 = vmatpush2.bf16.msra.mxu0 0
      %677 = vmatprep.subr.bf16.mxu0 0
      %678 = vmatpush2.bf16.msra.mxu0 0
      %679 = vmatprep.subr.bf16.mxu0 0
      %680 = vmatpush2.bf16.msra.mxu0 0
      %681 = vmatprep.subr.bf16.mxu0 0
      %682 = vmatpush2.bf16.msra.mxu0 0
      %683 = vmatprep.subr.bf16.mxu0 0
      %684 = vmatpush2.bf16.msra.mxu0 0
      %685 = vmatprep.subr.bf16.mxu0 0
      %686 = vmatpush2.bf16.msra.mxu0 0
      %687 = vmatprep.subr.bf16.mxu0 0
      %688 = vmatpush2.bf16.msra.mxu0 0
      %689 = vmatprep.mubr.bf16.mxu0 0
      %690 = vmatmul.mubr.bf16.gmra.mxu0 %v577
      %v691 = vpop.f32.mrf.mxu0
      %v692 = vadd.f32 0.0, %v691
      %v693 = vpop.f32.mrf.mxu0
      %v694 = vpop.f32.mrf.mxu0
      %v695 = vadd.f32 0.0, %v694
      %v696 = vpop.f32.mrf.mxu0
      %697 = vmatprep.mubr.bf16.mxu0 0
      %698 = vmatmul.mubr.bf16.gmra.mxu0 %v580
      %v699 = vpop.f32.mrf.mxu0
      %v700 = vadd.f32 0.0, %v699
      %v701 = vpop.f32.mrf.mxu0
      %v702 = vpop.f32.mrf.mxu0
      %v703 = vadd.f32 0.0, %v702
      %v704 = vpop.f32.mrf.mxu0
      %705 = vmatprep.mubr.bf16.mxu0 0
      %706 = vmatmul.mubr.bf16.gmra.mxu0 %v583
      %v707 = vpop.f32.mrf.mxu0
      %v708 = vadd.f32 0.0, %v707
      %v709 = vpop.f32.mrf.mxu0
      %v710 = vpop.f32.mrf.mxu0
      %v711 = vadd.f32 0.0, %v710
      %v712 = vpop.f32.mrf.mxu0
      %713 = vmatprep.mubr.bf16.mxu0 0
      %714 = vmatmul.mubr.bf16.gmra.mxu0 %v586
      %v715 = vpop.f32.mrf.mxu0
      %v716 = vadd.f32 0.0, %v715
      %v717 = vpop.f32.mrf.mxu0
      %v718 = vpop.f32.mrf.mxu0
      %v719 = vadd.f32 0.0, %v718
      %v720 = vpop.f32.mrf.mxu0
      %721 = vmatprep.mubr.bf16.mxu0 0
      %722 = vmatmul.mubr.bf16.gmra.mxu0 %v589
      %v723 = vpop.f32.mrf.mxu0
      %v724 = vadd.f32 0.0, %v723
      %v725 = vpop.f32.mrf.mxu0
      %v726 = vpop.f32.mrf.mxu0
      %v727 = vadd.f32 0.0, %v726
      %v728 = vpop.f32.mrf.mxu0
      %729 = vmatprep.mubr.bf16.mxu0 0
      %730 = vmatmul.mubr.bf16.gmra.mxu0 %v592
      %v731 = vpop.f32.mrf.mxu0
      %v732 = vadd.f32 0.0, %v731
      %v733 = vpop.f32.mrf.mxu0
      %v734 = vpop.f32.mrf.mxu0
      %v735 = vadd.f32 0.0, %v734
      %v736 = vpop.f32.mrf.mxu0
      %737 = vmatprep.mubr.bf16.mxu0 0
      %738 = vmatmul.mubr.bf16.gmra.mxu0 %v595
      %v739 = vpop.f32.mrf.mxu0
      %v740 = vadd.f32 0.0, %v739
      %v741 = vpop.f32.mrf.mxu0
      %v742 = vpop.f32.mrf.mxu0
      %v743 = vadd.f32 0.0, %v742
      %v744 = vpop.f32.mrf.mxu0
      %745 = vmatprep.mubr.bf16.mxu0 0
      %746 = vmatmul.mubr.bf16.gmra.mxu0 %v598
      %v747 = vpop.f32.mrf.mxu0
      %v748 = vadd.f32 0.0, %v747
      %v749 = vpop.f32.mrf.mxu0
      %v750 = vpop.f32.mrf.mxu0
      %v751 = vadd.f32 0.0, %v750
      %v752 = vpop.f32.mrf.mxu0
      %753 = vmatprep.mubr.bf16.mxu0 0
      %754 = vmatmul.mubr.bf16.gmra.mxu0 %v601
      %v755 = vpop.f32.mrf.mxu0
      %v756 = vadd.f32 0.0, %v755
      %v757 = vpop.f32.mrf.mxu0
      %v758 = vpop.f32.mrf.mxu0
      %v759 = vadd.f32 0.0, %v758
      %v760 = vpop.f32.mrf.mxu0
      %761 = vmatprep.mubr.bf16.mxu0 0
      %762 = vmatmul.mubr.bf16.gmra.mxu0 %v604
      %v763 = vpop.f32.mrf.mxu0
      %v764 = vadd.f32 0.0, %v763
      %v765 = vpop.f32.mrf.mxu0
      %v766 = vpop.f32.mrf.mxu0
      %v767 = vadd.f32 0.0, %v766
      %v768 = vpop.f32.mrf.mxu0
      %769 = vmatprep.mubr.bf16.mxu0 0
      %770 = vmatmul.mubr.bf16.gmra.mxu0 %v607
      %v771 = vpop.f32.mrf.mxu0
      %v772 = vadd.f32 0.0, %v771
      %v773 = vpop.f32.mrf.mxu0
      %v774 = vpop.f32.mrf.mxu0
      %v775 = vadd.f32 0.0, %v774
      %v776 = vpop.f32.mrf.mxu0
      %777 = vmatprep.mubr.bf16.mxu0 0
      %778 = vmatmul.mubr.bf16.gmra.mxu0 %v610
      %v779 = vpop.f32.mrf.mxu0
      %v780 = vadd.f32 0.0, %v779
      %v781 = vpop.f32.mrf.mxu0
      %v782 = vpop.f32.mrf.mxu0
      %v783 = vadd.f32 0.0, %v782
      %v784 = vpop.f32.mrf.mxu0
      %785 = vmatprep.mubr.bf16.mxu0 0
      %786 = vmatmul.mubr.bf16.gmra.mxu0 %v613
      %v787 = vpop.f32.mrf.mxu0
      %v788 = vadd.f32 0.0, %v787
      %v789 = vpop.f32.mrf.mxu0
      %v790 = vpop.f32.mrf.mxu0
      %v791 = vadd.f32 0.0, %v790
      %v792 = vpop.f32.mrf.mxu0
      %793 = vmatprep.mubr.bf16.mxu0 0
      %794 = vmatmul.mubr.bf16.gmra.mxu0 %v616
      %v795 = vpop.f32.mrf.mxu0
      %v796 = vadd.f32 0.0, %v795
      %v797 = vpop.f32.mrf.mxu0
      %v798 = vpop.f32.mrf.mxu0
      %v799 = vadd.f32 0.0, %v798
      %v800 = vpop.f32.mrf.mxu0
      %801 = vmatprep.mubr.bf16.mxu0 0
      %802 = vmatmul.mubr.bf16.gmra.mxu0 %v619
      %v803 = vpop.f32.mrf.mxu0
      %v804 = vadd.f32 0.0, %v803
      %v805 = vpop.f32.mrf.mxu0
      %v806 = vpop.f32.mrf.mxu0
      %v807 = vadd.f32 0.0, %v806
      %v808 = vpop.f32.mrf.mxu0
      %809 = vmatprep.mubr.bf16.mxu0 0
      %810 = vmatmul.mubr.bf16.gmra.mxu0 %v622
      %v811 = vpop.f32.mrf.mxu0
      %v812 = vadd.f32 0.0, %v811
      %v813 = vpop.f32.mrf.mxu0
      %v814 = vpop.f32.mrf.mxu0
      %v815 = vadd.f32 0.0, %v814
      %v816 = vpop.f32.mrf.mxu0
      %817 = vmatprep.mubr.bf16.mxu0 0
      %818 = vmatmul.mubr.bf16.gmra.mxu0 %v625
      %v819 = vpop.f32.mrf.mxu0
      %v820 = vadd.f32 0.0, %v819
      %v821 = vpop.f32.mrf.mxu0
      %v822 = vpop.f32.mrf.mxu0
      %v823 = vadd.f32 0.0, %v822
      %v824 = vpop.f32.mrf.mxu0
      %825 = vmatprep.mubr.bf16.mxu0 0
      %826 = vmatmul.mubr.bf16.gmra.mxu0 %v628
      %v827 = vpop.f32.mrf.mxu0
      %v828 = vadd.f32 0.0, %v827
      %v829 = vpop.f32.mrf.mxu0
      %v830 = vpop.f32.mrf.mxu0
      %v831 = vadd.f32 0.0, %v830
      %v832 = vpop.f32.mrf.mxu0
      %833 = vmatprep.mubr.bf16.mxu0 0
      %834 = vmatmul.mubr.bf16.gmra.mxu0 %v631
      %v835 = vpop.f32.mrf.mxu0
      %v836 = vadd.f32 0.0, %v835
      %v837 = vpop.f32.mrf.mxu0
      %v838 = vpop.f32.mrf.mxu0
      %v839 = vadd.f32 0.0, %v838
      %v840 = vpop.f32.mrf.mxu0
      %841 = vmatprep.mubr.bf16.mxu0 0
      %842 = vmatmul.mubr.bf16.gmra.mxu0 %v634
      %v843 = vpop.f32.mrf.mxu0
      %v844 = vadd.f32 0.0, %v843
      %v845 = vpop.f32.mrf.mxu0
      %v846 = vpop.f32.mrf.mxu0
      %v847 = vadd.f32 0.0, %v846
      %v848 = vpop.f32.mrf.mxu0
      %849 = vmatprep.mubr.bf16.mxu0 0
      %850 = vmatmul.mubr.bf16.gmra.mxu0 %v637
      %v851 = vpop.f32.mrf.mxu0
      %v852 = vadd.f32 0.0, %v851
      %v853 = vpop.f32.mrf.mxu0
      %v854 = vpop.f32.mrf.mxu0
      %v855 = vadd.f32 0.0, %v854
      %v856 = vpop.f32.mrf.mxu0
      %857 = vmatprep.mubr.bf16.mxu0 0
      %858 = vmatmul.mubr.bf16.gmra.mxu0 %v640
      %v859 = vpop.f32.mrf.mxu0
      %v860 = vadd.f32 0.0, %v859
      %v861 = vpop.f32.mrf.mxu0
      %v862 = vpop.f32.mrf.mxu0
      %v863 = vadd.f32 0.0, %v862
      %v864 = vpop.f32.mrf.mxu0
      %865 = vmatprep.mubr.bf16.mxu0 0
      %866 = vmatmul.mubr.bf16.gmra.mxu0 %v643
      %v867 = vpop.f32.mrf.mxu0
      %v868 = vadd.f32 0.0, %v867
      %v869 = vpop.f32.mrf.mxu0
      %v870 = vpop.f32.mrf.mxu0
      %v871 = vadd.f32 0.0, %v870
      %v872 = vpop.f32.mrf.mxu0
      %873 = vmatprep.mubr.bf16.mxu0 0
      %874 = vmatmul.mubr.bf16.gmra.mxu0 %v646
      %v875 = vpop.f32.mrf.mxu0
      %v876 = vadd.f32 0.0, %v875
      %v877 = vpop.f32.mrf.mxu0
      %v878 = vpop.f32.mrf.mxu0
      %v879 = vadd.f32 0.0, %v878
      %v880 = vpop.f32.mrf.mxu0
      %881 = vmatprep.mubr.bf16.mxu0 0
      %882 = vmatmul.mubr.bf16.gmra.mxu0 %v649
      %v883 = vpop.f32.mrf.mxu0
      %v884 = vadd.f32 0.0, %v883
      %v885 = vpop.f32.mrf.mxu0
      %v886 = vpop.f32.mrf.mxu0
      %v887 = vadd.f32 0.0, %v886
      %v888 = vpop.f32.mrf.mxu0
      %889 = vmatprep.mubr.bf16.mxu0 0
      %890 = vmatmul.mubr.bf16.gmra.mxu0 %v652
      %v891 = vpop.f32.mrf.mxu0
      %v892 = vadd.f32 0.0, %v891
      %v893 = vpop.f32.mrf.mxu0
      %v894 = vpop.f32.mrf.mxu0
      %v895 = vadd.f32 0.0, %v894
      %v896 = vpop.f32.mrf.mxu0
      %897 = vmatprep.mubr.bf16.mxu0 0
      %898 = vmatmul.mubr.bf16.gmra.mxu0 %v655
      %v899 = vpop.f32.mrf.mxu0
      %v900 = vadd.f32 0.0, %v899
      %v901 = vpop.f32.mrf.mxu0
      %v902 = vpop.f32.mrf.mxu0
      %v903 = vadd.f32 0.0, %v902
      %v904 = vpop.f32.mrf.mxu0
      %905 = vdwg.mxu0
      %v906 = vpack.c.bf16 %v695, %v692
      %v907 = vpack.c.bf16 %v700, %v700
      %v908 = vpack.c.bf16 %v708, %v703
      %v909 = vpack.c.bf16 %v711, %v711
      %v910 = vpack.c.bf16 %v719, %v716
      %v911 = vpack.c.bf16 %v724, %v724
      %v912 = vpack.c.bf16 %v732, %v727
      %v913 = vpack.c.bf16 %v735, %v735
      %v914 = vpack.c.bf16 %v743, %v740
      %v915 = vpack.c.bf16 %v748, %v748
      %v916 = vpack.c.bf16 %v756, %v751
      %v917 = vpack.c.bf16 %v759, %v759
      %v918 = vpack.c.bf16 %v767, %v764
      %v919 = vpack.c.bf16 %v772, %v772
      %v920 = vpack.c.bf16 %v780, %v775
      %v921 = vpack.c.bf16 %v783, %v783
      %v922 = vpack.c.bf16 %v791, %v788
      %v923 = vpack.c.bf16 %v796, %v796
      %v924 = vpack.c.bf16 %v804, %v799
      %v925 = vpack.c.bf16 %v807, %v807
      %v926 = vpack.c.bf16 %v815, %v812
      %v927 = vpack.c.bf16 %v820, %v820
      %v928 = vpack.c.bf16 %v828, %v823
      %v929 = vpack.c.bf16 %v831, %v831
      %v930 = vpack.c.bf16 %v839, %v836
      %v931 = vpack.c.bf16 %v844, %v844
      %v932 = vpack.c.bf16 %v852, %v847
      %v933 = vpack.c.bf16 %v855, %v855
      %v934 = vpack.c.bf16 %v863, %v860
      %v935 = vpack.c.bf16 %v868, %v868
      %v936 = vpack.c.bf16 %v876, %v871
      %v937 = vpack.c.bf16 %v879, %v879
      %v938 = vpack.c.bf16 %v887, %v884
      %v939 = vpack.c.bf16 %v892, %v892
      %v940 = vpack.c.bf16 %v900, %v895
      %v941 = vpack.c.bf16 %v903, %v903
      %v942 = vld [vmem:[%s347] sm:$0xf]
      %v943 = vld [vmem:[%s347 + $0x4] sm:$0xf]
      %v944 = vld [vmem:[%s347 + $0x8] sm:$0xf]
      %v945 = vld [vmem:[%s347 + $0xc] sm:$0xf]
      %v946 = vld [vmem:[%s347 + $0x10] sm:$0xf]
      %v947 = vld [vmem:[%s347 + $0x14] sm:$0xf]
      %v948 = vld [vmem:[%s347 + $0x18] sm:$0xf]
      %v949 = vld [vmem:[%s347 + $0x1c] sm:$0xf]
      %v950 = vld [vmem:[%s347 + $0x20] sm:$0xf]
      %v951 = vld [vmem:[%s347 + $0x24] sm:$0xf]
      %v952 = vld [vmem:[%s347 + $0x28] sm:$0xf]
      %v953 = vld [vmem:[%s347 + $0x2c] sm:$0xf]
      %v954 = vld [vmem:[%s347 + $0x30] sm:$0xf]
      %v955 = vld [vmem:[%s347 + $0x34] sm:$0xf]
      %v956 = vld [vmem:[%s347 + $0x38] sm:$0xf]
      %v957 = vld [vmem:[%s347 + $0x3c] sm:$0xf]
      %v958 = vld [vmem:[%s347 + $0x40] sm:$0xf]
      %v959 = vld [vmem:[%s347 + $0x44] sm:$0xf]
      %v960 = vld [vmem:[%s347 + $0x48] sm:$0xf]
      %v961 = vld [vmem:[%s347 + $0x4c] sm:$0xf]
      %v962 = vld [vmem:[%s347 + $0x50] sm:$0xf]
      %v963 = vld [vmem:[%s347 + $0x54] sm:$0xf]
      %v964 = vld [vmem:[%s347 + $0x58] sm:$0xf]
      %v965 = vld [vmem:[%s347 + $0x5c] sm:$0xf]
      %v966 = vld [vmem:[%s347 + $0x60] sm:$0xf]
      %v967 = vld [vmem:[%s347 + $0x64] sm:$0xf]
      %v968 = vld [vmem:[%s347 + $0x68] sm:$0xf]
      %v969 = vld [vmem:[%s347 + $0x6c] sm:$0xf]
      %v970 = vld [vmem:[%s347 + $0x70] sm:$0xf]
      %v971 = vld [vmem:[%s347 + $0x74] sm:$0xf]
      %v972 = vld [vmem:[%s347 + $0x78] sm:$0xf]
      %v973 = vld [vmem:[%s347 + $0x7c] sm:$0xf]
      %v1006 = vunpack.c.l.b16 %v942
      %v1007 = vunpack.c.l.b16 %v943
      %v1008 = vunpack.c.l.b16 %v944
      %v1009 = vunpack.c.l.b16 %v945
      %v1010 = vunpack.c.l.b16 %v946
      %v1011 = vunpack.c.l.b16 %v947
      %v1012 = vunpack.c.l.b16 %v948
      %v1013 = vunpack.c.l.b16 %v949
      %v1014 = vunpack.c.l.b16 %v950
      %v1015 = vunpack.c.l.b16 %v951
      %v1016 = vunpack.c.l.b16 %v952
      %v1017 = vunpack.c.l.b16 %v953
      %v1018 = vunpack.c.l.b16 %v954
      %v1019 = vunpack.c.l.b16 %v955
      %v1020 = vunpack.c.l.b16 %v956
      %v1021 = vunpack.c.l.b16 %v957
      %v1022 = vunpack.c.l.b16 %v958
      %v1023 = vunpack.c.l.b16 %v959
      %v1024 = vunpack.c.l.b16 %v960
      %v1025 = vunpack.c.l.b16 %v961
      %v1026 = vunpack.c.l.b16 %v962
      %v1027 = vunpack.c.l.b16 %v963
      %v1028 = vunpack.c.l.b16 %v964
      %v1029 = vunpack.c.l.b16 %v965
      %v1030 = vunpack.c.l.b16 %v966
      %v1031 = vunpack.c.l.b16 %v967
      %v1032 = vunpack.c.l.b16 %v968
      %v1033 = vunpack.c.l.b16 %v969
      %v1034 = vunpack.c.l.b16 %v970
      %v1035 = vunpack.c.l.b16 %v971
      %v1036 = vunpack.c.l.b16 %v972
      %v1037 = vunpack.c.l.b16 %v973
      %v1038 = vpack.c.b16 %v1007, %v1006
      %v1039 = vpack.c.b16 %v1009, %v1008
      %v1040 = vpack.c.b16 %v1011, %v1010
      %v1041 = vpack.c.b16 %v1013, %v1012
      %v1042 = vpack.c.b16 %v1015, %v1014
      %v1043 = vpack.c.b16 %v1017, %v1016
      %v1044 = vpack.c.b16 %v1019, %v1018
      %v1045 = vpack.c.b16 %v1021, %v1020
      %v1046 = vpack.c.b16 %v1023, %v1022
      %v1047 = vpack.c.b16 %v1025, %v1024
      %v1048 = vpack.c.b16 %v1027, %v1026
      %v1049 = vpack.c.b16 %v1029, %v1028
      %v1050 = vpack.c.b16 %v1031, %v1030
      %v1051 = vpack.c.b16 %v1033, %v1032
      %v1052 = vpack.c.b16 %v1035, %v1034
      %v1053 = vpack.c.b16 %v1037, %v1036
      %v1055 = vshrl.u32 %v1038, 16
      %v1057 = vrot.slane %v1055, 7
      %v1058 = vshll.u32 %v1038, 16
      %v1060 = vor.u32 %v1057, %v1058
      %v1062 = vshrl.u32 %v1039, 16
      %v1064 = vrot.slane %v1062, 7
      %v1065 = vshll.u32 %v1039, 16
      %v1067 = vor.u32 %v1064, %v1065
      %v1069 = vshrl.u32 %v1040, 16
      %v1071 = vrot.slane %v1069, 7
      %v1072 = vshll.u32 %v1040, 16
      %v1074 = vor.u32 %v1071, %v1072
      %v1076 = vshrl.u32 %v1041, 16
      %v1078 = vrot.slane %v1076, 7
      %v1079 = vshll.u32 %v1041, 16
      %v1081 = vor.u32 %v1078, %v1079
      %v1083 = vshrl.u32 %v1042, 16
      %v1085 = vrot.slane %v1083, 7
      %v1086 = vshll.u32 %v1042, 16
      %v1088 = vor.u32 %v1085, %v1086
      %v1090 = vshrl.u32 %v1043, 16
      %v1092 = vrot.slane %v1090, 7
      %v1093 = vshll.u32 %v1043, 16
      %v1095 = vor.u32 %v1092, %v1093
      %v1097 = vshrl.u32 %v1044, 16
      %v1099 = vrot.slane %v1097, 7
      %v1100 = vshll.u32 %v1044, 16
      %v1102 = vor.u32 %v1099, %v1100
      %v1104 = vshrl.u32 %v1045, 16
      %v1106 = vrot.slane %v1104, 7
      %v1107 = vshll.u32 %v1045, 16
      %v1109 = vor.u32 %v1106, %v1107
      %v1111 = vshrl.u32 %v1046, 16
      %v1113 = vrot.slane %v1111, 7
      %v1114 = vshll.u32 %v1046, 16
      %v1116 = vor.u32 %v1113, %v1114
      %v1118 = vshrl.u32 %v1047, 16
      %v1120 = vrot.slane %v1118, 7
      %v1121 = vshll.u32 %v1047, 16
      %v1123 = vor.u32 %v1120, %v1121
      %v1125 = vshrl.u32 %v1048, 16
      %v1127 = vrot.slane %v1125, 7
      %v1128 = vshll.u32 %v1048, 16
      %v1130 = vor.u32 %v1127, %v1128
      %v1132 = vshrl.u32 %v1049, 16
      %v1134 = vrot.slane %v1132, 7
      %v1135 = vshll.u32 %v1049, 16
      %v1137 = vor.u32 %v1134, %v1135
      %v1139 = vshrl.u32 %v1050, 16
      %v1141 = vrot.slane %v1139, 7
      %v1142 = vshll.u32 %v1050, 16
      %v1144 = vor.u32 %v1141, %v1142
      %v1146 = vshrl.u32 %v1051, 16
      %v1148 = vrot.slane %v1146, 7
      %v1149 = vshll.u32 %v1051, 16
      %v1151 = vor.u32 %v1148, %v1149
      %v1153 = vshrl.u32 %v1052, 16
      %v1155 = vrot.slane %v1153, 7
      %v1156 = vshll.u32 %v1052, 16
      %v1158 = vor.u32 %v1155, %v1156
      %v1160 = vshrl.u32 %v1053, 16
      %v1162 = vrot.slane %v1160, 7
      %v1163 = vshll.u32 %v1053, 16
      %v1165 = vor.u32 %v1162, %v1163
      %vm1198 = vcmask 1040384
      %vm1199 = vsmask.f32 256
      %vm1200 = vmand %vm1198, %vm1199
      %v1201 = vsel %vm1200, 0, %v1060
      %v1202 = vsel %vm1200, 0, %v1067
      %v1203 = vsel %vm1200, 0, %v1074
      %v1204 = vsel %vm1200, 0, %v1081
      %v1205 = vsel %vm1200, 0, %v1088
      %v1206 = vsel %vm1200, 0, %v1095
      %v1207 = vsel %vm1200, 0, %v1102
      %v1208 = vsel %vm1200, 0, %v1109
      %v1209 = vsel %vm1200, 0, %v1116
      %v1210 = vsel %vm1200, 0, %v1123
      %v1211 = vsel %vm1200, 0, %v1130
      %v1212 = vsel %vm1200, 0, %v1137
      %v1213 = vsel %vm1200, 0, %v1144
      %v1214 = vsel %vm1200, 0, %v1151
      %v1215 = vsel %vm1200, 0, %v1158
      %v1216 = vsel %vm1200, 0, %v1165
      %v1217 = vsel %vm1200, %v1057, 0
      %v1218 = vsel %vm1200, %v1064, 0
      %v1219 = vsel %vm1200, %v1071, 0
      %v1220 = vsel %vm1200, %v1078, 0
      %v1221 = vsel %vm1200, %v1085, 0
      %v1222 = vsel %vm1200, %v1092, 0
      %v1223 = vsel %vm1200, %v1099, 0
      %v1224 = vsel %vm1200, %v1106, 0
      %v1225 = vsel %vm1200, %v1113, 0
      %v1226 = vsel %vm1200, %v1120, 0
      %v1227 = vsel %vm1200, %v1127, 0
      %v1228 = vsel %vm1200, %v1134, 0
      %v1229 = vsel %vm1200, %v1141, 0
      %v1230 = vsel %vm1200, %v1148, 0
      %v1231 = vsel %vm1200, %v1155, 0
      %v1232 = vsel %vm1200, %v1162, 0
      %1249 = vrot.lane.b32.xlu0 0, 4
      %v1250 = vpop.permute.xlu0 %1249
      %1251 = vrot.lane.b32.xlu0 %v1201, 4
      %v1252 = vpop.permute.xlu0 %1251
      %1253 = vrot.lane.b32.xlu0 %v1202, 4
      %v1254 = vpop.permute.xlu0 %1253
      %1255 = vrot.lane.b32.xlu0 %v1203, 4
      %v1256 = vpop.permute.xlu0 %1255
      %1257 = vrot.lane.b32.xlu0 %v1204, 4
      %v1258 = vpop.permute.xlu0 %1257
      %1259 = vrot.lane.b32.xlu0 %v1205, 4
      %v1260 = vpop.permute.xlu0 %1259
      %1261 = vrot.lane.b32.xlu0 %v1206, 4
      %v1262 = vpop.permute.xlu0 %1261
      %1263 = vrot.lane.b32.xlu0 %v1207, 4
      %v1264 = vpop.permute.xlu0 %1263
      %1265 = vrot.lane.b32.xlu0 %v1208, 4
      %v1266 = vpop.permute.xlu0 %1265
      %1267 = vrot.lane.b32.xlu0 %v1209, 4
      %v1268 = vpop.permute.xlu0 %1267
      %1269 = vrot.lane.b32.xlu0 %v1210, 4
      %v1270 = vpop.permute.xlu0 %1269
      %1271 = vrot.lane.b32.xlu0 %v1211, 4
      %v1272 = vpop.permute.xlu0 %1271
      %1273 = vrot.lane.b32.xlu0 %v1212, 4
      %v1274 = vpop.permute.xlu0 %1273
      %1275 = vrot.lane.b32.xlu0 %v1213, 4
      %v1276 = vpop.permute.xlu0 %1275
      %1277 = vrot.lane.b32.xlu0 %v1214, 4
      %v1278 = vpop.permute.xlu0 %1277
      %1279 = vrot.lane.b32.xlu0 %v1215, 4
      %v1280 = vpop.permute.xlu0 %1279
      %vm1281 = vsmask.f32 7424
      %v1283 = vshrl.u32 %v906, 16
      %v1285 = vshll.u32 %v906, 16
      %v1287 = vrot.slane %v1285, 1
      %v1288 = vor.u32 %v1283, %v1287
      %v1290 = vshll.u32 %v907, 16
      %v1292 = vrot.slane %v1290, 1
      %v1293 = vsel %vm1281, %v1288, %v1292
      %v1295 = vshrl.u32 %v908, 16
      %v1297 = vshll.u32 %v908, 16
      %v1299 = vrot.slane %v1297, 1
      %v1300 = vor.u32 %v1295, %v1299
      %v1302 = vshll.u32 %v909, 16
      %v1304 = vrot.slane %v1302, 1
      %v1305 = vsel %vm1281, %v1300, %v1304
      %v1307 = vshrl.u32 %v910, 16
      %v1309 = vshll.u32 %v910, 16
      %v1311 = vrot.slane %v1309, 1
      %v1312 = vor.u32 %v1307, %v1311
      %v1314 = vshll.u32 %v911, 16
      %v1316 = vrot.slane %v1314, 1
      %v1317 = vsel %vm1281, %v1312, %v1316
      %v1319 = vshrl.u32 %v912, 16
      %v1321 = vshll.u32 %v912, 16
      %v1323 = vrot.slane %v1321, 1
      %v1324 = vor.u32 %v1319, %v1323
      %v1326 = vshll.u32 %v913, 16
      %v1328 = vrot.slane %v1326, 1
      %v1329 = vsel %vm1281, %v1324, %v1328
      %v1331 = vshrl.u32 %v914, 16
      %v1333 = vshll.u32 %v914, 16
      %v1335 = vrot.slane %v1333, 1
      %v1336 = vor.u32 %v1331, %v1335
      %v1338 = vshll.u32 %v915, 16
      %v1340 = vrot.slane %v1338, 1
      %v1341 = vsel %vm1281, %v1336, %v1340
      %v1343 = vshrl.u32 %v916, 16
      %v1345 = vshll.u32 %v916, 16
      %v1347 = vrot.slane %v1345, 1
      %v1348 = vor.u32 %v1343, %v1347
      %v1350 = vshll.u32 %v917, 16
      %v1352 = vrot.slane %v1350, 1
      %v1353 = vsel %vm1281, %v1348, %v1352
      %v1355 = vshrl.u32 %v918, 16
      %v1357 = vshll.u32 %v918, 16
      %v1359 = vrot.slane %v1357, 1
      %v1360 = vor.u32 %v1355, %v1359
      %v1362 = vshll.u32 %v919, 16
      %v1364 = vrot.slane %v1362, 1
      %v1365 = vsel %vm1281, %v1360, %v1364
      %v1367 = vshrl.u32 %v920, 16
      %v1369 = vshll.u32 %v920, 16
      %v1371 = vrot.slane %v1369, 1
      %v1372 = vor.u32 %v1367, %v1371
      %v1374 = vshll.u32 %v921, 16
      %v1376 = vrot.slane %v1374, 1
      %v1377 = vsel %vm1281, %v1372, %v1376
      %v1379 = vshrl.u32 %v922, 16
      %v1381 = vshll.u32 %v922, 16
      %v1383 = vrot.slane %v1381, 1
      %v1384 = vor.u32 %v1379, %v1383
      %v1386 = vshll.u32 %v923, 16
      %v1388 = vrot.slane %v1386, 1
      %v1389 = vsel %vm1281, %v1384, %v1388
      %v1391 = vshrl.u32 %v924, 16
      %v1393 = vshll.u32 %v924, 16
      %v1395 = vrot.slane %v1393, 1
      %v1396 = vor.u32 %v1391, %v1395
      %v1398 = vshll.u32 %v925, 16
      %v1400 = vrot.slane %v1398, 1
      %v1401 = vsel %vm1281, %v1396, %v1400
      %v1403 = vshrl.u32 %v926, 16
      %v1405 = vshll.u32 %v926, 16
      %v1407 = vrot.slane %v1405, 1
      %v1408 = vor.u32 %v1403, %v1407
      %v1410 = vshll.u32 %v927, 16
      %v1412 = vrot.slane %v1410, 1
      %v1413 = vsel %vm1281, %v1408, %v1412
      %v1415 = vshrl.u32 %v928, 16
      %v1417 = vshll.u32 %v928, 16
      %v1419 = vrot.slane %v1417, 1
      %v1420 = vor.u32 %v1415, %v1419
      %v1422 = vshll.u32 %v929, 16
      %v1424 = vrot.slane %v1422, 1
      %v1425 = vsel %vm1281, %v1420, %v1424
      %v1427 = vshrl.u32 %v930, 16
      %v1429 = vshll.u32 %v930, 16
      %v1431 = vrot.slane %v1429, 1
      %v1432 = vor.u32 %v1427, %v1431
      %v1434 = vshll.u32 %v931, 16
      %v1436 = vrot.slane %v1434, 1
      %v1437 = vsel %vm1281, %v1432, %v1436
      %v1439 = vshrl.u32 %v932, 16
      %v1441 = vshll.u32 %v932, 16
      %v1443 = vrot.slane %v1441, 1
      %v1444 = vor.u32 %v1439, %v1443
      %v1446 = vshll.u32 %v933, 16
      %v1448 = vrot.slane %v1446, 1
      %v1449 = vsel %vm1281, %v1444, %v1448
      %v1451 = vshrl.u32 %v934, 16
      %v1453 = vshll.u32 %v934, 16
      %v1455 = vrot.slane %v1453, 1
      %v1456 = vor.u32 %v1451, %v1455
      %v1458 = vshll.u32 %v935, 16
      %v1460 = vrot.slane %v1458, 1
      %v1461 = vsel %vm1281, %v1456, %v1460
      %v1463 = vshrl.u32 %v936, 16
      %v1465 = vshll.u32 %v936, 16
      %v1467 = vrot.slane %v1465, 1
      %v1468 = vor.u32 %v1463, %v1467
      %v1470 = vshll.u32 %v937, 16
      %v1472 = vrot.slane %v1470, 1
      %v1473 = vsel %vm1281, %v1468, %v1472
      %1474 = vrot.lane.b32.xlu0 %v1293, 8
      %v1475 = vpop.permute.xlu0 %1474
      %1476 = vrot.lane.b32.xlu0 %v1305, 8
      %v1477 = vpop.permute.xlu0 %1476
      %1478 = vrot.lane.b32.xlu0 %v1317, 8
      %v1479 = vpop.permute.xlu0 %1478
      %1480 = vrot.lane.b32.xlu0 %v1329, 8
      %v1481 = vpop.permute.xlu0 %1480
      %1482 = vrot.lane.b32.xlu0 %v1341, 8
      %v1483 = vpop.permute.xlu0 %1482
      %1484 = vrot.lane.b32.xlu0 %v1353, 8
      %v1485 = vpop.permute.xlu0 %1484
      %1486 = vrot.lane.b32.xlu0 %v1365, 8
      %v1487 = vpop.permute.xlu0 %1486
      %1488 = vrot.lane.b32.xlu0 %v1377, 8
      %v1489 = vpop.permute.xlu0 %1488
      %1490 = vrot.lane.b32.xlu0 %v1389, 8
      %v1491 = vpop.permute.xlu0 %1490
      %1492 = vrot.lane.b32.xlu0 %v1401, 8
      %v1493 = vpop.permute.xlu0 %1492
      %1494 = vrot.lane.b32.xlu0 %v1413, 8
      %v1495 = vpop.permute.xlu0 %1494
      %1496 = vrot.lane.b32.xlu0 %v1425, 8
      %v1497 = vpop.permute.xlu0 %1496
      %1498 = vrot.lane.b32.xlu0 %v1437, 8
      %v1499 = vpop.permute.xlu0 %1498
      %1500 = vrot.lane.b32.xlu0 %v1449, 8
      %v1501 = vpop.permute.xlu0 %1500
      %1502 = vrot.lane.b32.xlu0 %v1461, 8
      %v1503 = vpop.permute.xlu0 %1502
      %1504 = vrot.lane.b32.xlu0 %v1473, 8
      %v1505 = vpop.permute.xlu0 %1504
      %v1507 = vshrl.u32 0, 16
      %v1509 = vshll.u32 0, 16
      %v1511 = vrot.slane %v1509, 1
      %v1512 = vor.u32 %v1507, %v1511
      %v1513 = vsel %vm1281, %v1512, %v1511
      %v1515 = vshrl.u32 %v1201, 16
      %v1517 = vshll.u32 %v1201, 16
      %v1519 = vrot.slane %v1517, 1
      %v1520 = vor.u32 %v1515, %v1519
      %v1522 = vshll.u32 %v1217, 16
      %v1524 = vrot.slane %v1522, 1
      %v1525 = vsel %vm1281, %v1520, %v1524
      %v1527 = vshrl.u32 %v1202, 16
      %v1529 = vshll.u32 %v1202, 16
      %v1531 = vrot.slane %v1529, 1
      %v1532 = vor.u32 %v1527, %v1531
      %v1534 = vshll.u32 %v1218, 16
      %v1536 = vrot.slane %v1534, 1
      %v1537 = vsel %vm1281, %v1532, %v1536
      %v1539 = vshrl.u32 %v1203, 16
      %v1541 = vshll.u32 %v1203, 16
      %v1543 = vrot.slane %v1541, 1
      %v1544 = vor.u32 %v1539, %v1543
      %v1546 = vshll.u32 %v1219, 16
      %v1548 = vrot.slane %v1546, 1
      %v1549 = vsel %vm1281, %v1544, %v1548
      %v1551 = vshrl.u32 %v1204, 16
      %v1553 = vshll.u32 %v1204, 16
      %v1555 = vrot.slane %v1553, 1
      %v1556 = vor.u32 %v1551, %v1555
      %v1558 = vshll.u32 %v1220, 16
      %v1560 = vrot.slane %v1558, 1
      %v1561 = vsel %vm1281, %v1556, %v1560
      %v1563 = vshrl.u32 %v1205, 16
      %v1565 = vshll.u32 %v1205, 16
      %v1567 = vrot.slane %v1565, 1
      %v1568 = vor.u32 %v1563, %v1567
      %v1570 = vshll.u32 %v1221, 16
      %v1572 = vrot.slane %v1570, 1
      %v1573 = vsel %vm1281, %v1568, %v1572
      %v1575 = vshrl.u32 %v1206, 16
      %v1577 = vshll.u32 %v1206, 16
      %v1579 = vrot.slane %v1577, 1
      %v1580 = vor.u32 %v1575, %v1579
      %v1582 = vshll.u32 %v1222, 16
      %v1584 = vrot.slane %v1582, 1
      %v1585 = vsel %vm1281, %v1580, %v1584
      %v1587 = vshrl.u32 %v1207, 16
      %v1589 = vshll.u32 %v1207, 16
      %v1591 = vrot.slane %v1589, 1
      %v1592 = vor.u32 %v1587, %v1591
      %v1594 = vshll.u32 %v1223, 16
      %v1596 = vrot.slane %v1594, 1
      %v1597 = vsel %vm1281, %v1592, %v1596
      %v1599 = vshrl.u32 %v1208, 16
      %v1601 = vshll.u32 %v1208, 16
      %v1603 = vrot.slane %v1601, 1
      %v1604 = vor.u32 %v1599, %v1603
      %v1606 = vshll.u32 %v1224, 16
      %v1608 = vrot.slane %v1606, 1
      %v1609 = vsel %vm1281, %v1604, %v1608
      %v1611 = vshrl.u32 %v1209, 16
      %v1613 = vshll.u32 %v1209, 16
      %v1615 = vrot.slane %v1613, 1
      %v1616 = vor.u32 %v1611, %v1615
      %v1618 = vshll.u32 %v1225, 16
      %v1620 = vrot.slane %v1618, 1
      %v1621 = vsel %vm1281, %v1616, %v1620
      %v1623 = vshrl.u32 %v1210, 16
      %v1625 = vshll.u32 %v1210, 16
      %v1627 = vrot.slane %v1625, 1
      %v1628 = vor.u32 %v1623, %v1627
      %v1630 = vshll.u32 %v1226, 16
      %v1632 = vrot.slane %v1630, 1
      %v1633 = vsel %vm1281, %v1628, %v1632
      %v1635 = vshrl.u32 %v1211, 16
      %v1637 = vshll.u32 %v1211, 16
      %v1639 = vrot.slane %v1637, 1
      %v1640 = vor.u32 %v1635, %v1639
      %v1642 = vshll.u32 %v1227, 16
      %v1644 = vrot.slane %v1642, 1
      %v1645 = vsel %vm1281, %v1640, %v1644
      %v1647 = vshrl.u32 %v1212, 16
      %v1649 = vshll.u32 %v1212, 16
      %v1651 = vrot.slane %v1649, 1
      %v1652 = vor.u32 %v1647, %v1651
      %v1654 = vshll.u32 %v1228, 16
      %v1656 = vrot.slane %v1654, 1
      %v1657 = vsel %vm1281, %v1652, %v1656
      %v1659 = vshrl.u32 %v1213, 16
      %v1661 = vshll.u32 %v1213, 16
      %v1663 = vrot.slane %v1661, 1
      %v1664 = vor.u32 %v1659, %v1663
      %v1666 = vshll.u32 %v1229, 16
      %v1668 = vrot.slane %v1666, 1
      %v1669 = vsel %vm1281, %v1664, %v1668
      %v1671 = vshrl.u32 %v1214, 16
      %v1673 = vshll.u32 %v1214, 16
      %v1675 = vrot.slane %v1673, 1
      %v1676 = vor.u32 %v1671, %v1675
      %v1678 = vshll.u32 %v1230, 16
      %v1680 = vrot.slane %v1678, 1
      %v1681 = vsel %vm1281, %v1676, %v1680
      %v1683 = vshrl.u32 %v1215, 16
      %v1685 = vshll.u32 %v1215, 16
      %v1687 = vrot.slane %v1685, 1
      %v1688 = vor.u32 %v1683, %v1687
      %v1690 = vshll.u32 %v1231, 16
      %v1692 = vrot.slane %v1690, 1
      %v1693 = vsel %vm1281, %v1688, %v1692
      %1694 = vrot.lane.b32.xlu0 %v1513, 12
      %v1695 = vpop.permute.xlu0 %1694
      %1696 = vrot.lane.b32.xlu0 %v1525, 12
      %v1697 = vpop.permute.xlu0 %1696
      %1698 = vrot.lane.b32.xlu0 %v1537, 12
      %v1699 = vpop.permute.xlu0 %1698
      %1700 = vrot.lane.b32.xlu0 %v1549, 12
      %v1701 = vpop.permute.xlu0 %1700
      %1702 = vrot.lane.b32.xlu0 %v1561, 12
      %v1703 = vpop.permute.xlu0 %1702
      %1704 = vrot.lane.b32.xlu0 %v1573, 12
      %v1705 = vpop.permute.xlu0 %1704
      %1706 = vrot.lane.b32.xlu0 %v1585, 12
      %v1707 = vpop.permute.xlu0 %1706
      %1708 = vrot.lane.b32.xlu0 %v1597, 12
      %v1709 = vpop.permute.xlu0 %1708
      %1710 = vrot.lane.b32.xlu0 %v1609, 12
      %v1711 = vpop.permute.xlu0 %1710
      %1712 = vrot.lane.b32.xlu0 %v1621, 12
      %v1713 = vpop.permute.xlu0 %1712
      %1714 = vrot.lane.b32.xlu0 %v1633, 12
      %v1715 = vpop.permute.xlu0 %1714
      %1716 = vrot.lane.b32.xlu0 %v1645, 12
      %v1717 = vpop.permute.xlu0 %1716
      %1718 = vrot.lane.b32.xlu0 %v1657, 12
      %v1719 = vpop.permute.xlu0 %1718
      %1720 = vrot.lane.b32.xlu0 %v1669, 12
      %v1721 = vpop.permute.xlu0 %1720
      %1722 = vrot.lane.b32.xlu0 %v1681, 12
      %v1723 = vpop.permute.xlu0 %1722
      %1724 = vrot.lane.b32.xlu0 %v1693, 12
      %v1725 = vpop.permute.xlu0 %1724
      %vm1758 = vcmask 1046528
      %v1759 = vrot.slane %v906, 1
      %v1760 = vrot.slane %v907, 1
      %v1761 = vsel %vm1758, %v1759, %v1760
      %v1762 = vrot.slane %v908, 1
      %v1763 = vrot.slane %v909, 1
      %v1764 = vsel %vm1758, %v1762, %v1763
      %v1765 = vrot.slane %v910, 1
      %v1766 = vrot.slane %v911, 1
      %v1767 = vsel %vm1758, %v1765, %v1766
      %v1768 = vrot.slane %v912, 1
      %v1769 = vrot.slane %v913, 1
      %v1770 = vsel %vm1758, %v1768, %v1769
      %v1771 = vrot.slane %v914, 1
      %v1772 = vrot.slane %v915, 1
      %v1773 = vsel %vm1758, %v1771, %v1772
      %v1774 = vrot.slane %v916, 1
      %v1775 = vrot.slane %v917, 1
      %v1776 = vsel %vm1758, %v1774, %v1775
      %v1777 = vrot.slane %v918, 1
      %v1778 = vrot.slane %v919, 1
      %v1779 = vsel %vm1758, %v1777, %v1778
      %v1780 = vrot.slane %v920, 1
      %v1781 = vrot.slane %v921, 1
      %v1782 = vsel %vm1758, %v1780, %v1781
      %v1783 = vrot.slane %v922, 1
      %v1784 = vrot.slane %v923, 1
      %v1785 = vsel %vm1758, %v1783, %v1784
      %v1786 = vrot.slane %v924, 1
      %v1787 = vrot.slane %v925, 1
      %v1788 = vsel %vm1758, %v1786, %v1787
      %v1789 = vrot.slane %v926, 1
      %v1790 = vrot.slane %v927, 1
      %v1791 = vsel %vm1758, %v1789, %v1790
      %v1792 = vrot.slane %v928, 1
      %v1793 = vrot.slane %v929, 1
      %v1794 = vsel %vm1758, %v1792, %v1793
      %v1795 = vrot.slane %v930, 1
      %v1796 = vrot.slane %v931, 1
      %v1797 = vsel %vm1758, %v1795, %v1796
      %v1798 = vrot.slane %v932, 1
      %v1799 = vrot.slane %v933, 1
      %v1800 = vsel %vm1758, %v1798, %v1799
      %v1801 = vrot.slane %v934, 1
      %v1802 = vrot.slane %v935, 1
      %v1803 = vsel %vm1758, %v1801, %v1802
      %v1804 = vrot.slane %v936, 1
      %v1805 = vrot.slane %v937, 1
      %v1806 = vsel %vm1758, %v1804, %v1805
      %1807 = vrot.lane.b32.xlu0 %v1761, 16
      %v1808 = vpop.permute.xlu0 %1807
      %1809 = vrot.lane.b32.xlu0 %v1764, 16
      %v1810 = vpop.permute.xlu0 %1809
      %1811 = vrot.lane.b32.xlu0 %v1767, 16
      %v1812 = vpop.permute.xlu0 %1811
      %1813 = vrot.lane.b32.xlu0 %v1770, 16
      %v1814 = vpop.permute.xlu0 %1813
      %1815 = vrot.lane.b32.xlu0 %v1773, 16
      %v1816 = vpop.permute.xlu0 %1815
      %1817 = vrot.lane.b32.xlu0 %v1776, 16
      %v1818 = vpop.permute.xlu0 %1817
      %1819 = vrot.lane.b32.xlu0 %v1779, 16
      %v1820 = vpop.permute.xlu0 %1819
      %1821 = vrot.lane.b32.xlu0 %v1782, 16
      %v1822 = vpop.permute.xlu0 %1821
      %1823 = vrot.lane.b32.xlu0 %v1785, 16
      %v1824 = vpop.permute.xlu0 %1823
      %1825 = vrot.lane.b32.xlu0 %v1788, 16
      %v1826 = vpop.permute.xlu0 %1825
      %1827 = vrot.lane.b32.xlu0 %v1791, 16
      %v1828 = vpop.permute.xlu0 %1827
      %1829 = vrot.lane.b32.xlu0 %v1794, 16
      %v1830 = vpop.permute.xlu0 %1829
      %1831 = vrot.lane.b32.xlu0 %v1797, 16
      %v1832 = vpop.permute.xlu0 %1831
      %1833 = vrot.lane.b32.xlu0 %v1800, 16
      %v1834 = vpop.permute.xlu0 %1833
      %1835 = vrot.lane.b32.xlu0 %v1803, 16
      %v1836 = vpop.permute.xlu0 %1835
      %1837 = vrot.lane.b32.xlu0 %v1806, 16
      %v1838 = vpop.permute.xlu0 %1837
      %v1854 = vrot.slane 0, 1
      %v1855 = vsel %vm1758, %v1854, %v1854
      %v1856 = vrot.slane %v1201, 1
      %v1857 = vrot.slane %v1217, 1
      %v1858 = vsel %vm1758, %v1856, %v1857
      %v1859 = vrot.slane %v1202, 1
      %v1860 = vrot.slane %v1218, 1
      %v1861 = vsel %vm1758, %v1859, %v1860
      %v1862 = vrot.slane %v1203, 1
      %v1863 = vrot.slane %v1219, 1
      %v1864 = vsel %vm1758, %v1862, %v1863
      %v1865 = vrot.slane %v1204, 1
      %v1866 = vrot.slane %v1220, 1
      %v1867 = vsel %vm1758, %v1865, %v1866
      %v1868 = vrot.slane %v1205, 1
      %v1869 = vrot.slane %v1221, 1
      %v1870 = vsel %vm1758, %v1868, %v1869
      %v1871 = vrot.slane %v1206, 1
      %v1872 = vrot.slane %v1222, 1
      %v1873 = vsel %vm1758, %v1871, %v1872
      %v1874 = vrot.slane %v1207, 1
      %v1875 = vrot.slane %v1223, 1
      %v1876 = vsel %vm1758, %v1874, %v1875
      %v1877 = vrot.slane %v1208, 1
      %v1878 = vrot.slane %v1224, 1
      %v1879 = vsel %vm1758, %v1877, %v1878
      %v1880 = vrot.slane %v1209, 1
      %v1881 = vrot.slane %v1225, 1
      %v1882 = vsel %vm1758, %v1880, %v1881
      %v1883 = vrot.slane %v1210, 1
      %v1884 = vrot.slane %v1226, 1
      %v1885 = vsel %vm1758, %v1883, %v1884
      %v1886 = vrot.slane %v1211, 1
      %v1887 = vrot.slane %v1227, 1
      %v1888 = vsel %vm1758, %v1886, %v1887
      %v1889 = vrot.slane %v1212, 1
      %v1890 = vrot.slane %v1228, 1
      %v1891 = vsel %vm1758, %v1889, %v1890
      %v1892 = vrot.slane %v1213, 1
      %v1893 = vrot.slane %v1229, 1
      %v1894 = vsel %vm1758, %v1892, %v1893
      %v1895 = vrot.slane %v1214, 1
      %v1896 = vrot.slane %v1230, 1
      %v1897 = vsel %vm1758, %v1895, %v1896
      %v1898 = vrot.slane %v1215, 1
      %v1899 = vrot.slane %v1231, 1
      %v1900 = vsel %vm1758, %v1898, %v1899
      %1901 = vrot.lane.b32.xlu0 %v1855, 20
      %v1902 = vpop.permute.xlu0 %1901
      %1903 = vrot.lane.b32.xlu0 %v1858, 20
      %v1904 = vpop.permute.xlu0 %1903
      %1905 = vrot.lane.b32.xlu0 %v1861, 20
      %v1906 = vpop.permute.xlu0 %1905
      %1907 = vrot.lane.b32.xlu0 %v1864, 20
      %v1908 = vpop.permute.xlu0 %1907
      %1909 = vrot.lane.b32.xlu0 %v1867, 20
      %v1910 = vpop.permute.xlu0 %1909
      %1911 = vrot.lane.b32.xlu0 %v1870, 20
      %v1912 = vpop.permute.xlu0 %1911
      %1913 = vrot.lane.b32.xlu0 %v1873, 20
      %v1914 = vpop.permute.xlu0 %1913
      %1915 = vrot.lane.b32.xlu0 %v1876, 20
      %v1916 = vpop.permute.xlu0 %1915
      %1917 = vrot.lane.b32.xlu0 %v1879, 20
      %v1918 = vpop.permute.xlu0 %1917
      %1919 = vrot.lane.b32.xlu0 %v1882, 20
      %v1920 = vpop.permute.xlu0 %1919
      %1921 = vrot.lane.b32.xlu0 %v1885, 20
      %v1922 = vpop.permute.xlu0 %1921
      %1923 = vrot.lane.b32.xlu0 %v1888, 20
      %v1924 = vpop.permute.xlu0 %1923
      %1925 = vrot.lane.b32.xlu0 %v1891, 20
      %v1926 = vpop.permute.xlu0 %1925
      %1927 = vrot.lane.b32.xlu0 %v1894, 20
      %v1928 = vpop.permute.xlu0 %1927
      %1929 = vrot.lane.b32.xlu0 %v1897, 20
      %v1930 = vpop.permute.xlu0 %1929
      %1931 = vrot.lane.b32.xlu0 %v1900, 20
      %v1932 = vpop.permute.xlu0 %1931
      %1934 = vrot.lane.b32.xlu0 %v908, 24
      %v1935 = vpop.permute.xlu0 %1934
      %1936 = vrot.lane.b32.xlu0 %v910, 24
      %v1937 = vpop.permute.xlu0 %1936
      %1938 = vrot.lane.b32.xlu0 %v912, 24
      %v1939 = vpop.permute.xlu0 %1938
      %1940 = vrot.lane.b32.xlu0 %v914, 24
      %v1941 = vpop.permute.xlu0 %1940
      %1942 = vrot.lane.b32.xlu0 %v916, 24
      %v1943 = vpop.permute.xlu0 %1942
      %1944 = vrot.lane.b32.xlu0 %v918, 24
      %v1945 = vpop.permute.xlu0 %1944
      %1946 = vrot.lane.b32.xlu0 %v920, 24
      %v1947 = vpop.permute.xlu0 %1946
      %1948 = vrot.lane.b32.xlu0 %v922, 24
      %v1949 = vpop.permute.xlu0 %1948
      %1950 = vrot.lane.b32.xlu0 %v924, 24
      %v1951 = vpop.permute.xlu0 %1950
      %1952 = vrot.lane.b32.xlu0 %v926, 24
      %v1953 = vpop.permute.xlu0 %1952
      %1954 = vrot.lane.b32.xlu0 %v928, 24
      %v1955 = vpop.permute.xlu0 %1954
      %1956 = vrot.lane.b32.xlu0 %v930, 24
      %v1957 = vpop.permute.xlu0 %1956
      %1958 = vrot.lane.b32.xlu0 %v932, 24
      %v1959 = vpop.permute.xlu0 %1958
      %1960 = vrot.lane.b32.xlu0 %v934, 24
      %v1961 = vpop.permute.xlu0 %1960
      %1962 = vrot.lane.b32.xlu0 %v936, 24
      %v1963 = vpop.permute.xlu0 %1962
      %1964 = vrot.lane.b32.xlu0 %v938, 24
      %v1965 = vpop.permute.xlu0 %1964
      %1967 = vrot.lane.b32.xlu0 %v1201, 28
      %v1968 = vpop.permute.xlu0 %1967
      %1969 = vrot.lane.b32.xlu0 %v1202, 28
      %v1970 = vpop.permute.xlu0 %1969
      %1971 = vrot.lane.b32.xlu0 %v1203, 28
      %v1972 = vpop.permute.xlu0 %1971
      %1973 = vrot.lane.b32.xlu0 %v1204, 28
      %v1974 = vpop.permute.xlu0 %1973
      %1975 = vrot.lane.b32.xlu0 %v1205, 28
      %v1976 = vpop.permute.xlu0 %1975
      %1977 = vrot.lane.b32.xlu0 %v1206, 28
      %v1978 = vpop.permute.xlu0 %1977
      %1979 = vrot.lane.b32.xlu0 %v1207, 28
      %v1980 = vpop.permute.xlu0 %1979
      %1981 = vrot.lane.b32.xlu0 %v1208, 28
      %v1982 = vpop.permute.xlu0 %1981
      %1983 = vrot.lane.b32.xlu0 %v1209, 28
      %v1984 = vpop.permute.xlu0 %1983
      %1985 = vrot.lane.b32.xlu0 %v1210, 28
      %v1986 = vpop.permute.xlu0 %1985
      %1987 = vrot.lane.b32.xlu0 %v1211, 28
      %v1988 = vpop.permute.xlu0 %1987
      %1989 = vrot.lane.b32.xlu0 %v1212, 28
      %v1990 = vpop.permute.xlu0 %1989
      %1991 = vrot.lane.b32.xlu0 %v1213, 28
      %v1992 = vpop.permute.xlu0 %1991
      %1993 = vrot.lane.b32.xlu0 %v1214, 28
      %v1994 = vpop.permute.xlu0 %1993
      %1995 = vrot.lane.b32.xlu0 %v1215, 28
      %v1996 = vpop.permute.xlu0 %1995
      %1997 = vrot.lane.b32.xlu0 %v1216, 28
      %v1998 = vpop.permute.xlu0 %1997
      %v2000 = vshrl.u32 %v938, 16
      %v2002 = vshll.u32 %v938, 16
      %v2004 = vrot.slane %v2002, 1
      %v2005 = vor.u32 %v2000, %v2004
      %v2007 = vshll.u32 %v939, 16
      %v2009 = vrot.slane %v2007, 1
      %v2010 = vsel %vm1281, %v2005, %v2009
      %2011 = vrot.lane.b32.xlu0 %v1305, 32
      %v2012 = vpop.permute.xlu0 %2011
      %2013 = vrot.lane.b32.xlu0 %v1317, 32
      %v2014 = vpop.permute.xlu0 %2013
      %2015 = vrot.lane.b32.xlu0 %v1329, 32
      %v2016 = vpop.permute.xlu0 %2015
      %2017 = vrot.lane.b32.xlu0 %v1341, 32
      %v2018 = vpop.permute.xlu0 %2017
      %2019 = vrot.lane.b32.xlu0 %v1353, 32
      %v2020 = vpop.permute.xlu0 %2019
      %2021 = vrot.lane.b32.xlu0 %v1365, 32
      %v2022 = vpop.permute.xlu0 %2021
      %2023 = vrot.lane.b32.xlu0 %v1377, 32
      %v2024 = vpop.permute.xlu0 %2023
      %2025 = vrot.lane.b32.xlu0 %v1389, 32
      %v2026 = vpop.permute.xlu0 %2025
      %2027 = vrot.lane.b32.xlu0 %v1401, 32
      %v2028 = vpop.permute.xlu0 %2027
      %2029 = vrot.lane.b32.xlu0 %v1413, 32
      %v2030 = vpop.permute.xlu0 %2029
      %2031 = vrot.lane.b32.xlu0 %v1425, 32
      %v2032 = vpop.permute.xlu0 %2031
      %2033 = vrot.lane.b32.xlu0 %v1437, 32
      %v2034 = vpop.permute.xlu0 %2033
      %2035 = vrot.lane.b32.xlu0 %v1449, 32
      %v2036 = vpop.permute.xlu0 %2035
      %2037 = vrot.lane.b32.xlu0 %v1461, 32
      %v2038 = vpop.permute.xlu0 %2037
      %2039 = vrot.lane.b32.xlu0 %v1473, 32
      %v2040 = vpop.permute.xlu0 %2039
      %2041 = vrot.lane.b32.xlu0 %v2010, 32
      %v2042 = vpop.permute.xlu0 %2041
      %v2044 = vshrl.u32 %v1216, 16
      %v2046 = vshll.u32 %v1216, 16
      %v2048 = vrot.slane %v2046, 1
      %v2049 = vor.u32 %v2044, %v2048
      %v2051 = vshll.u32 %v1232, 16
      %v2053 = vrot.slane %v2051, 1
      %v2054 = vsel %vm1281, %v2049, %v2053
      %2055 = vrot.lane.b32.xlu0 %v1525, 36
      %v2056 = vpop.permute.xlu0 %2055
      %2057 = vrot.lane.b32.xlu0 %v1537, 36
      %v2058 = vpop.permute.xlu0 %2057
      %2059 = vrot.lane.b32.xlu0 %v1549, 36
      %v2060 = vpop.permute.xlu0 %2059
      %2061 = vrot.lane.b32.xlu0 %v1561, 36
      %v2062 = vpop.permute.xlu0 %2061
      %2063 = vrot.lane.b32.xlu0 %v1573, 36
      %v2064 = vpop.permute.xlu0 %2063
      %2065 = vrot.lane.b32.xlu0 %v1585, 36
      %v2066 = vpop.permute.xlu0 %2065
      %2067 = vrot.lane.b32.xlu0 %v1597, 36
      %v2068 = vpop.permute.xlu0 %2067
      %2069 = vrot.lane.b32.xlu0 %v1609, 36
      %v2070 = vpop.permute.xlu0 %2069
      %2071 = vrot.lane.b32.xlu0 %v1621, 36
      %v2072 = vpop.permute.xlu0 %2071
      %2073 = vrot.lane.b32.xlu0 %v1633, 36
      %v2074 = vpop.permute.xlu0 %2073
      %2075 = vrot.lane.b32.xlu0 %v1645, 36
      %v2076 = vpop.permute.xlu0 %2075
      %2077 = vrot.lane.b32.xlu0 %v1657, 36
      %v2078 = vpop.permute.xlu0 %2077
      %2079 = vrot.lane.b32.xlu0 %v1669, 36
      %v2080 = vpop.permute.xlu0 %2079
      %2081 = vrot.lane.b32.xlu0 %v1681, 36
      %v2082 = vpop.permute.xlu0 %2081
      %2083 = vrot.lane.b32.xlu0 %v1693, 36
      %v2084 = vpop.permute.xlu0 %2083
      %2085 = vrot.lane.b32.xlu0 %v2054, 36
      %v2086 = vpop.permute.xlu0 %2085
      %v2088 = vrot.slane %v938, 1
      %v2089 = vrot.slane %v939, 1
      %v2090 = vsel %vm1758, %v2088, %v2089
      %2091 = vrot.lane.b32.xlu0 %v1764, 40
      %v2092 = vpop.permute.xlu0 %2091
      %2093 = vrot.lane.b32.xlu0 %v1767, 40
      %v2094 = vpop.permute.xlu0 %2093
      %2095 = vrot.lane.b32.xlu0 %v1770, 40
      %v2096 = vpop.permute.xlu0 %2095
      %2097 = vrot.lane.b32.xlu0 %v1773, 40
      %v2098 = vpop.permute.xlu0 %2097
      %2099 = vrot.lane.b32.xlu0 %v1776, 40
      %v2100 = vpop.permute.xlu0 %2099
      %2101 = vrot.lane.b32.xlu0 %v1779, 40
      %v2102 = vpop.permute.xlu0 %2101
      %2103 = vrot.lane.b32.xlu0 %v1782, 40
      %v2104 = vpop.permute.xlu0 %2103
      %2105 = vrot.lane.b32.xlu0 %v1785, 40
      %v2106 = vpop.permute.xlu0 %2105
      %2107 = vrot.lane.b32.xlu0 %v1788, 40
      %v2108 = vpop.permute.xlu0 %2107
      %2109 = vrot.lane.b32.xlu0 %v1791, 40
      %v2110 = vpop.permute.xlu0 %2109
      %2111 = vrot.lane.b32.xlu0 %v1794, 40
      %v2112 = vpop.permute.xlu0 %2111
      %2113 = vrot.lane.b32.xlu0 %v1797, 40
      %v2114 = vpop.permute.xlu0 %2113
      %2115 = vrot.lane.b32.xlu0 %v1800, 40
      %v2116 = vpop.permute.xlu0 %2115
      %2117 = vrot.lane.b32.xlu0 %v1803, 40
      %v2118 = vpop.permute.xlu0 %2117
      %2119 = vrot.lane.b32.xlu0 %v1806, 40
      %v2120 = vpop.permute.xlu0 %2119
      %2121 = vrot.lane.b32.xlu0 %v2090, 40
      %v2122 = vpop.permute.xlu0 %2121
      %v2124 = vrot.slane %v1216, 1
      %v2125 = vrot.slane %v1232, 1
      %v2126 = vsel %vm1758, %v2124, %v2125
      %2127 = vrot.lane.b32.xlu0 %v1858, 44
      %v2128 = vpop.permute.xlu0 %2127
      %2129 = vrot.lane.b32.xlu0 %v1861, 44
      %v2130 = vpop.permute.xlu0 %2129
      %2131 = vrot.lane.b32.xlu0 %v1864, 44
      %v2132 = vpop.permute.xlu0 %2131
      %2133 = vrot.lane.b32.xlu0 %v1867, 44
      %v2134 = vpop.permute.xlu0 %2133
      %2135 = vrot.lane.b32.xlu0 %v1870, 44
      %v2136 = vpop.permute.xlu0 %2135
      %2137 = vrot.lane.b32.xlu0 %v1873, 44
      %v2138 = vpop.permute.xlu0 %2137
      %2139 = vrot.lane.b32.xlu0 %v1876, 44
      %v2140 = vpop.permute.xlu0 %2139
      %2141 = vrot.lane.b32.xlu0 %v1879, 44
      %v2142 = vpop.permute.xlu0 %2141
      %2143 = vrot.lane.b32.xlu0 %v1882, 44
      %v2144 = vpop.permute.xlu0 %2143
      %2145 = vrot.lane.b32.xlu0 %v1885, 44
      %v2146 = vpop.permute.xlu0 %2145
      %2147 = vrot.lane.b32.xlu0 %v1888, 44
      %v2148 = vpop.permute.xlu0 %2147
      %2149 = vrot.lane.b32.xlu0 %v1891, 44
      %v2150 = vpop.permute.xlu0 %2149
      %2151 = vrot.lane.b32.xlu0 %v1894, 44
      %v2152 = vpop.permute.xlu0 %2151
      %2153 = vrot.lane.b32.xlu0 %v1897, 44
      %v2154 = vpop.permute.xlu0 %2153
      %2155 = vrot.lane.b32.xlu0 %v1900, 44
      %v2156 = vpop.permute.xlu0 %2155
      %2157 = vrot.lane.b32.xlu0 %v2126, 44
      %v2158 = vpop.permute.xlu0 %2157
      %2160 = vrot.lane.b32.xlu0 %v910, 48
      %v2161 = vpop.permute.xlu0 %2160
      %2162 = vrot.lane.b32.xlu0 %v912, 48
      %v2163 = vpop.permute.xlu0 %2162
      %2164 = vrot.lane.b32.xlu0 %v914, 48
      %v2165 = vpop.permute.xlu0 %2164
      %2166 = vrot.lane.b32.xlu0 %v916, 48
      %v2167 = vpop.permute.xlu0 %2166
      %2168 = vrot.lane.b32.xlu0 %v918, 48
      %v2169 = vpop.permute.xlu0 %2168
      %2170 = vrot.lane.b32.xlu0 %v920, 48
      %v2171 = vpop.permute.xlu0 %2170
      %2172 = vrot.lane.b32.xlu0 %v922, 48
      %v2173 = vpop.permute.xlu0 %2172
      %2174 = vrot.lane.b32.xlu0 %v924, 48
      %v2175 = vpop.permute.xlu0 %2174
      %2176 = vrot.lane.b32.xlu0 %v926, 48
      %v2177 = vpop.permute.xlu0 %2176
      %2178 = vrot.lane.b32.xlu0 %v928, 48
      %v2179 = vpop.permute.xlu0 %2178
      %2180 = vrot.lane.b32.xlu0 %v930, 48
      %v2181 = vpop.permute.xlu0 %2180
      %2182 = vrot.lane.b32.xlu0 %v932, 48
      %v2183 = vpop.permute.xlu0 %2182
      %2184 = vrot.lane.b32.xlu0 %v934, 48
      %v2185 = vpop.permute.xlu0 %2184
      %2186 = vrot.lane.b32.xlu0 %v936, 48
      %v2187 = vpop.permute.xlu0 %2186
      %2188 = vrot.lane.b32.xlu0 %v938, 48
      %v2189 = vpop.permute.xlu0 %2188
      %2190 = vrot.lane.b32.xlu0 %v940, 48
      %v2191 = vpop.permute.xlu0 %2190
      %2192 = vrot.lane.b32.xlu0 %v1202, 52
      %v2193 = vpop.permute.xlu0 %2192
      %2194 = vrot.lane.b32.xlu0 %v1203, 52
      %v2195 = vpop.permute.xlu0 %2194
      %2196 = vrot.lane.b32.xlu0 %v1204, 52
      %v2197 = vpop.permute.xlu0 %2196
      %2198 = vrot.lane.b32.xlu0 %v1205, 52
      %v2199 = vpop.permute.xlu0 %2198
      %2200 = vrot.lane.b32.xlu0 %v1206, 52
      %v2201 = vpop.permute.xlu0 %2200
      %2202 = vrot.lane.b32.xlu0 %v1207, 52
      %v2203 = vpop.permute.xlu0 %2202
      %2204 = vrot.lane.b32.xlu0 %v1208, 52
      %v2205 = vpop.permute.xlu0 %2204
      %2206 = vrot.lane.b32.xlu0 %v1209, 52
      %v2207 = vpop.permute.xlu0 %2206
      %2208 = vrot.lane.b32.xlu0 %v1210, 52
      %v2209 = vpop.permute.xlu0 %2208
      %2210 = vrot.lane.b32.xlu0 %v1211, 52
      %v2211 = vpop.permute.xlu0 %2210
      %2212 = vrot.lane.b32.xlu0 %v1212, 52
      %v2213 = vpop.permute.xlu0 %2212
      %2214 = vrot.lane.b32.xlu0 %v1213, 52
      %v2215 = vpop.permute.xlu0 %2214
      %2216 = vrot.lane.b32.xlu0 %v1214, 52
      %v2217 = vpop.permute.xlu0 %2216
      %2218 = vrot.lane.b32.xlu0 %v1215, 52
      %v2219 = vpop.permute.xlu0 %2218
      %2220 = vrot.lane.b32.xlu0 %v1216, 52
      %v2221 = vpop.permute.xlu0 %2220
      %2222 = vrot.lane.b32.xlu0 0, 52
      %v2223 = vpop.permute.xlu0 %2222
      %v2225 = vshrl.u32 %v940, 16
      %v2227 = vshll.u32 %v940, 16
      %v2229 = vrot.slane %v2227, 1
      %v2230 = vor.u32 %v2225, %v2229
      %v2232 = vshll.u32 %v941, 16
      %v2234 = vrot.slane %v2232, 1
      %v2235 = vsel %vm1281, %v2230, %v2234
      %2236 = vrot.lane.b32.xlu0 %v1317, 56
      %v2237 = vpop.permute.xlu0 %2236
      %2238 = vrot.lane.b32.xlu0 %v1329, 56
      %v2239 = vpop.permute.xlu0 %2238
      %2240 = vrot.lane.b32.xlu0 %v1341, 56
      %v2241 = vpop.permute.xlu0 %2240
      %2242 = vrot.lane.b32.xlu0 %v1353, 56
      %v2243 = vpop.permute.xlu0 %2242
      %2244 = vrot.lane.b32.xlu0 %v1365, 56
      %v2245 = vpop.permute.xlu0 %2244
      %2246 = vrot.lane.b32.xlu0 %v1377, 56
      %v2247 = vpop.permute.xlu0 %2246
      %2248 = vrot.lane.b32.xlu0 %v1389, 56
      %v2249 = vpop.permute.xlu0 %2248
      %2250 = vrot.lane.b32.xlu0 %v1401, 56
      %v2251 = vpop.permute.xlu0 %2250
      %2252 = vrot.lane.b32.xlu0 %v1413, 56
      %v2253 = vpop.permute.xlu0 %2252
      %2254 = vrot.lane.b32.xlu0 %v1425, 56
      %v2255 = vpop.permute.xlu0 %2254
      %2256 = vrot.lane.b32.xlu0 %v1437, 56
      %v2257 = vpop.permute.xlu0 %2256
      %2258 = vrot.lane.b32.xlu0 %v1449, 56
      %v2259 = vpop.permute.xlu0 %2258
      %2260 = vrot.lane.b32.xlu0 %v1461, 56
      %v2261 = vpop.permute.xlu0 %2260
      %2262 = vrot.lane.b32.xlu0 %v1473, 56
      %v2263 = vpop.permute.xlu0 %2262
      %2264 = vrot.lane.b32.xlu0 %v2010, 56
      %v2265 = vpop.permute.xlu0 %2264
      %2266 = vrot.lane.b32.xlu0 %v2235, 56
      %v2267 = vpop.permute.xlu0 %2266
      %2268 = vrot.lane.b32.xlu0 %v1537, 60
      %v2269 = vpop.permute.xlu0 %2268
      %2270 = vrot.lane.b32.xlu0 %v1549, 60
      %v2271 = vpop.permute.xlu0 %2270
      %2272 = vrot.lane.b32.xlu0 %v1561, 60
      %v2273 = vpop.permute.xlu0 %2272
      %2274 = vrot.lane.b32.xlu0 %v1573, 60
      %v2275 = vpop.permute.xlu0 %2274
      %2276 = vrot.lane.b32.xlu0 %v1585, 60
      %v2277 = vpop.permute.xlu0 %2276
      %2278 = vrot.lane.b32.xlu0 %v1597, 60
      %v2279 = vpop.permute.xlu0 %2278
      %2280 = vrot.lane.b32.xlu0 %v1609, 60
      %v2281 = vpop.permute.xlu0 %2280
      %2282 = vrot.lane.b32.xlu0 %v1621, 60
      %v2283 = vpop.permute.xlu0 %2282
      %2284 = vrot.lane.b32.xlu0 %v1633, 60
      %v2285 = vpop.permute.xlu0 %2284
      %2286 = vrot.lane.b32.xlu0 %v1645, 60
      %v2287 = vpop.permute.xlu0 %2286
      %2288 = vrot.lane.b32.xlu0 %v1657, 60
      %v2289 = vpop.permute.xlu0 %2288
      %2290 = vrot.lane.b32.xlu0 %v1669, 60
      %v2291 = vpop.permute.xlu0 %2290
      %2292 = vrot.lane.b32.xlu0 %v1681, 60
      %v2293 = vpop.permute.xlu0 %2292
      %2294 = vrot.lane.b32.xlu0 %v1693, 60
      %v2295 = vpop.permute.xlu0 %2294
      %2296 = vrot.lane.b32.xlu0 %v2054, 60
      %v2297 = vpop.permute.xlu0 %2296
      %2298 = vrot.lane.b32.xlu0 %v1513, 60
      %v2299 = vpop.permute.xlu0 %2298
      %vm2300 = vcmask 31744
      %v2302 = vsel %vm2300, %v906, %v1250
      %v2304 = vsel %vm2300, %v908, %v1252
      %v2306 = vsel %vm2300, %v910, %v1254
      %v2308 = vsel %vm2300, %v912, %v1256
      %v2310 = vsel %vm2300, %v914, %v1258
      %v2312 = vsel %vm2300, %v916, %v1260
      %v2314 = vsel %vm2300, %v918, %v1262
      %v2316 = vsel %vm2300, %v920, %v1264
      %v2318 = vsel %vm2300, %v922, %v1266
      %v2320 = vsel %vm2300, %v924, %v1268
      %v2322 = vsel %vm2300, %v926, %v1270
      %v2324 = vsel %vm2300, %v928, %v1272
      %v2326 = vsel %vm2300, %v930, %v1274
      %v2328 = vsel %vm2300, %v932, %v1276
      %v2330 = vsel %vm2300, %v934, %v1278
      %v2332 = vsel %vm2300, %v936, %v1280
      %vm2333 = vcmask 64512
      %v2335 = vsel %vm2333, %v2302, %v1475
      %v2337 = vsel %vm2333, %v2304, %v1477
      %v2339 = vsel %vm2333, %v2306, %v1479
      %v2341 = vsel %vm2333, %v2308, %v1481
      %v2343 = vsel %vm2333, %v2310, %v1483
      %v2345 = vsel %vm2333, %v2312, %v1485
      %v2347 = vsel %vm2333, %v2314, %v1487
      %v2349 = vsel %vm2333, %v2316, %v1489
      %v2351 = vsel %vm2333, %v2318, %v1491
      %v2353 = vsel %vm2333, %v2320, %v1493
      %v2355 = vsel %vm2333, %v2322, %v1495
      %v2357 = vsel %vm2333, %v2324, %v1497
      %v2359 = vsel %vm2333, %v2326, %v1499
      %v2361 = vsel %vm2333, %v2328, %v1501
      %v2363 = vsel %vm2333, %v2330, %v1503
      %v2365 = vsel %vm2333, %v2332, %v1505
      %vm2366 = vcmask 97280
      %v2368 = vsel %vm2366, %v2335, %v1695
      %v2370 = vsel %vm2366, %v2337, %v1697
      %v2372 = vsel %vm2366, %v2339, %v1699
      %v2374 = vsel %vm2366, %v2341, %v1701
      %v2376 = vsel %vm2366, %v2343, %v1703
      %v2378 = vsel %vm2366, %v2345, %v1705
      %v2380 = vsel %vm2366, %v2347, %v1707
      %v2382 = vsel %vm2366, %v2349, %v1709
      %v2384 = vsel %vm2366, %v2351, %v1711
      %v2386 = vsel %vm2366, %v2353, %v1713
      %v2388 = vsel %vm2366, %v2355, %v1715
      %v2390 = vsel %vm2366, %v2357, %v1717
      %v2392 = vsel %vm2366, %v2359, %v1719
      %v2394 = vsel %vm2366, %v2361, %v1721
      %v2396 = vsel %vm2366, %v2363, %v1723
      %v2398 = vsel %vm2366, %v2365, %v1725
      %vm2399 = vcmask 130048
      %v2401 = vsel %vm2399, %v2368, %v1808
      %v2403 = vsel %vm2399, %v2370, %v1810
      %v2405 = vsel %vm2399, %v2372, %v1812
      %v2407 = vsel %vm2399, %v2374, %v1814
      %v2409 = vsel %vm2399, %v2376, %v1816
      %v2411 = vsel %vm2399, %v2378, %v1818
      %v2413 = vsel %vm2399, %v2380, %v1820
      %v2415 = vsel %vm2399, %v2382, %v1822
      %v2417 = vsel %vm2399, %v2384, %v1824
      %v2419 = vsel %vm2399, %v2386, %v1826
      %v2421 = vsel %vm2399, %v2388, %v1828
      %v2423 = vsel %vm2399, %v2390, %v1830
      %v2425 = vsel %vm2399, %v2392, %v1832
      %v2427 = vsel %vm2399, %v2394, %v1834
      %v2429 = vsel %vm2399, %v2396, %v1836
      %v2431 = vsel %vm2399, %v2398, %v1838
      %vm2432 = vcmask 162816
      %v2434 = vsel %vm2432, %v2401, %v1902
      %v2436 = vsel %vm2432, %v2403, %v1904
      %v2438 = vsel %vm2432, %v2405, %v1906
      %v2440 = vsel %vm2432, %v2407, %v1908
      %v2442 = vsel %vm2432, %v2409, %v1910
      %v2444 = vsel %vm2432, %v2411, %v1912
      %v2446 = vsel %vm2432, %v2413, %v1914
      %v2448 = vsel %vm2432, %v2415, %v1916
      %v2450 = vsel %vm2432, %v2417, %v1918
      %v2452 = vsel %vm2432, %v2419, %v1920
      %v2454 = vsel %vm2432, %v2421, %v1922
      %v2456 = vsel %vm2432, %v2423, %v1924
      %v2458 = vsel %vm2432, %v2425, %v1926
      %v2460 = vsel %vm2432, %v2427, %v1928
      %v2462 = vsel %vm2432, %v2429, %v1930
      %v2464 = vsel %vm2432, %v2431, %v1932
      %vm2465 = vcmask 195584
      %v2467 = vsel %vm2465, %v2434, %v1935
      %v2469 = vsel %vm2465, %v2436, %v1937
      %v2471 = vsel %vm2465, %v2438, %v1939
      %v2473 = vsel %vm2465, %v2440, %v1941
      %v2475 = vsel %vm2465, %v2442, %v1943
      %v2477 = vsel %vm2465, %v2444, %v1945
      %v2479 = vsel %vm2465, %v2446, %v1947
      %v2481 = vsel %vm2465, %v2448, %v1949
      %v2483 = vsel %vm2465, %v2450, %v1951
      %v2485 = vsel %vm2465, %v2452, %v1953
      %v2487 = vsel %vm2465, %v2454, %v1955
      %v2489 = vsel %vm2465, %v2456, %v1957
      %v2491 = vsel %vm2465, %v2458, %v1959
      %v2493 = vsel %vm2465, %v2460, %v1961
      %v2495 = vsel %vm2465, %v2462, %v1963
      %v2497 = vsel %vm2465, %v2464, %v1965
      %vm2498 = vcmask 228352
      %v2500 = vsel %vm2498, %v2467, %v1968
      %v2502 = vsel %vm2498, %v2469, %v1970
      %v2504 = vsel %vm2498, %v2471, %v1972
      %v2506 = vsel %vm2498, %v2473, %v1974
      %v2508 = vsel %vm2498, %v2475, %v1976
      %v2510 = vsel %vm2498, %v2477, %v1978
      %v2512 = vsel %vm2498, %v2479, %v1980
      %v2514 = vsel %vm2498, %v2481, %v1982
      %v2516 = vsel %vm2498, %v2483, %v1984
      %v2518 = vsel %vm2498, %v2485, %v1986
      %v2520 = vsel %vm2498, %v2487, %v1988
      %v2522 = vsel %vm2498, %v2489, %v1990
      %v2524 = vsel %vm2498, %v2491, %v1992
      %v2526 = vsel %vm2498, %v2493, %v1994
      %v2528 = vsel %vm2498, %v2495, %v1996
      %v2530 = vsel %vm2498, %v2497, %v1998
      %vm2531 = vcmask 261120
      %v2533 = vsel %vm2531, %v2500, %v2012
      %v2535 = vsel %vm2531, %v2502, %v2014
      %v2537 = vsel %vm2531, %v2504, %v2016
      %v2539 = vsel %vm2531, %v2506, %v2018
      %v2541 = vsel %vm2531, %v2508, %v2020
      %v2543 = vsel %vm2531, %v2510, %v2022
      %v2545 = vsel %vm2531, %v2512, %v2024
      %v2547 = vsel %vm2531, %v2514, %v2026
      %v2549 = vsel %vm2531, %v2516, %v2028
      %v2551 = vsel %vm2531, %v2518, %v2030
      %v2553 = vsel %vm2531, %v2520, %v2032
      %v2555 = vsel %vm2531, %v2522, %v2034
      %v2557 = vsel %vm2531, %v2524, %v2036
      %v2559 = vsel %vm2531, %v2526, %v2038
      %v2561 = vsel %vm2531, %v2528, %v2040
      %v2563 = vsel %vm2531, %v2530, %v2042
      %vm2564 = vcmask 293888
      %v2566 = vsel %vm2564, %v2533, %v2056
      %v2568 = vsel %vm2564, %v2535, %v2058
      %v2570 = vsel %vm2564, %v2537, %v2060
      %v2572 = vsel %vm2564, %v2539, %v2062
      %v2574 = vsel %vm2564, %v2541, %v2064
      %v2576 = vsel %vm2564, %v2543, %v2066
      %v2578 = vsel %vm2564, %v2545, %v2068
      %v2580 = vsel %vm2564, %v2547, %v2070
      %v2582 = vsel %vm2564, %v2549, %v2072
      %v2584 = vsel %vm2564, %v2551, %v2074
      %v2586 = vsel %vm2564, %v2553, %v2076
      %v2588 = vsel %vm2564, %v2555, %v2078
      %v2590 = vsel %vm2564, %v2557, %v2080
      %v2592 = vsel %vm2564, %v2559, %v2082
      %v2594 = vsel %vm2564, %v2561, %v2084
      %v2596 = vsel %vm2564, %v2563, %v2086
      %vm2597 = vcmask 326656
      %v2599 = vsel %vm2597, %v2566, %v2092
      %v2601 = vsel %vm2597, %v2568, %v2094
      %v2603 = vsel %vm2597, %v2570, %v2096
      %v2605 = vsel %vm2597, %v2572, %v2098
      %v2607 = vsel %vm2597, %v2574, %v2100
      %v2609 = vsel %vm2597, %v2576, %v2102
      %v2611 = vsel %vm2597, %v2578, %v2104
      %v2613 = vsel %vm2597, %v2580, %v2106
      %v2615 = vsel %vm2597, %v2582, %v2108
      %v2617 = vsel %vm2597, %v2584, %v2110
      %v2619 = vsel %vm2597, %v2586, %v2112
      %v2621 = vsel %vm2597, %v2588, %v2114
      %v2623 = vsel %vm2597, %v2590, %v2116
      %v2625 = vsel %vm2597, %v2592, %v2118
      %v2627 = vsel %vm2597, %v2594, %v2120
      %v2629 = vsel %vm2597, %v2596, %v2122
      %vm2630 = vcmask 359424
      %v2632 = vsel %vm2630, %v2599, %v2128
      %v2634 = vsel %vm2630, %v2601, %v2130
      %v2636 = vsel %vm2630, %v2603, %v2132
      %v2638 = vsel %vm2630, %v2605, %v2134
      %v2640 = vsel %vm2630, %v2607, %v2136
      %v2642 = vsel %vm2630, %v2609, %v2138
      %v2644 = vsel %vm2630, %v2611, %v2140
      %v2646 = vsel %vm2630, %v2613, %v2142
      %v2648 = vsel %vm2630, %v2615, %v2144
      %v2650 = vsel %vm2630, %v2617, %v2146
      %v2652 = vsel %vm2630, %v2619, %v2148
      %v2654 = vsel %vm2630, %v2621, %v2150
      %v2656 = vsel %vm2630, %v2623, %v2152
      %v2658 = vsel %vm2630, %v2625, %v2154
      %v2660 = vsel %vm2630, %v2627, %v2156
      %v2662 = vsel %vm2630, %v2629, %v2158
      %vm2663 = vcmask 392192
      %v2665 = vsel %vm2663, %v2632, %v2161
      %v2667 = vsel %vm2663, %v2634, %v2163
      %v2669 = vsel %vm2663, %v2636, %v2165
      %v2671 = vsel %vm2663, %v2638, %v2167
      %v2673 = vsel %vm2663, %v2640, %v2169
      %v2675 = vsel %vm2663, %v2642, %v2171
      %v2677 = vsel %vm2663, %v2644, %v2173
      %v2679 = vsel %vm2663, %v2646, %v2175
      %v2681 = vsel %vm2663, %v2648, %v2177
      %v2683 = vsel %vm2663, %v2650, %v2179
      %v2685 = vsel %vm2663, %v2652, %v2181
      %v2687 = vsel %vm2663, %v2654, %v2183
      %v2689 = vsel %vm2663, %v2656, %v2185
      %v2691 = vsel %vm2663, %v2658, %v2187
      %v2693 = vsel %vm2663, %v2660, %v2189
      %v2695 = vsel %vm2663, %v2662, %v2191
      %vm2696 = vcmask 424960
      %v2698 = vsel %vm2696, %v2665, %v2193
      %v2700 = vsel %vm2696, %v2667, %v2195
      %v2702 = vsel %vm2696, %v2669, %v2197
      %v2704 = vsel %vm2696, %v2671, %v2199
      %v2706 = vsel %vm2696, %v2673, %v2201
      %v2708 = vsel %vm2696, %v2675, %v2203
      %v2710 = vsel %vm2696, %v2677, %v2205
      %v2712 = vsel %vm2696, %v2679, %v2207
      %v2714 = vsel %vm2696, %v2681, %v2209
      %v2716 = vsel %vm2696, %v2683, %v2211
      %v2718 = vsel %vm2696, %v2685, %v2213
      %v2720 = vsel %vm2696, %v2687, %v2215
      %v2722 = vsel %vm2696, %v2689, %v2217
      %v2724 = vsel %vm2696, %v2691, %v2219
      %v2726 = vsel %vm2696, %v2693, %v2221
      %v2728 = vsel %vm2696, %v2695, %v2223
      %vm2729 = vcmask 457728
      %v2731 = vsel %vm2729, %v2698, %v2237
      %v2733 = vsel %vm2729, %v2700, %v2239
      %v2735 = vsel %vm2729, %v2702, %v2241
      %v2737 = vsel %vm2729, %v2704, %v2243
      %v2739 = vsel %vm2729, %v2706, %v2245
      %v2741 = vsel %vm2729, %v2708, %v2247
      %v2743 = vsel %vm2729, %v2710, %v2249
      %v2745 = vsel %vm2729, %v2712, %v2251
      %v2747 = vsel %vm2729, %v2714, %v2253
      %v2749 = vsel %vm2729, %v2716, %v2255
      %v2751 = vsel %vm2729, %v2718, %v2257
      %v2753 = vsel %vm2729, %v2720, %v2259
      %v2755 = vsel %vm2729, %v2722, %v2261
      %v2757 = vsel %vm2729, %v2724, %v2263
      %v2759 = vsel %vm2729, %v2726, %v2265
      %v2761 = vsel %vm2729, %v2728, %v2267
      %vm2762 = vcmask 490496
      %v2764 = vsel %vm2762, %v2731, %v2269
      %v2766 = vsel %vm2762, %v2733, %v2271
      %v2768 = vsel %vm2762, %v2735, %v2273
      %v2770 = vsel %vm2762, %v2737, %v2275
      %v2772 = vsel %vm2762, %v2739, %v2277
      %v2774 = vsel %vm2762, %v2741, %v2279
      %v2776 = vsel %vm2762, %v2743, %v2281
      %v2778 = vsel %vm2762, %v2745, %v2283
      %v2780 = vsel %vm2762, %v2747, %v2285
      %v2782 = vsel %vm2762, %v2749, %v2287
      %v2784 = vsel %vm2762, %v2751, %v2289
      %v2786 = vsel %vm2762, %v2753, %v2291
      %v2788 = vsel %vm2762, %v2755, %v2293
      %v2790 = vsel %vm2762, %v2757, %v2295
      %v2792 = vsel %vm2762, %v2759, %v2297
      %v2794 = vsel %vm2762, %v2761, %v2299
      %2795 = vrot.lane.b32.xlu0 %v1218, 4
      %v2796 = vpop.permute.xlu0 %2795
      %2797 = vrot.lane.b32.xlu0 %v1219, 4
      %v2798 = vpop.permute.xlu0 %2797
      %2799 = vrot.lane.b32.xlu0 %v1220, 4
      %v2800 = vpop.permute.xlu0 %2799
      %2801 = vrot.lane.b32.xlu0 %v1221, 4
      %v2802 = vpop.permute.xlu0 %2801
      %2803 = vrot.lane.b32.xlu0 %v1222, 4
      %v2804 = vpop.permute.xlu0 %2803
      %2805 = vrot.lane.b32.xlu0 %v1223, 4
      %v2806 = vpop.permute.xlu0 %2805
      %2807 = vrot.lane.b32.xlu0 %v1224, 4
      %v2808 = vpop.permute.xlu0 %2807
      %2809 = vrot.lane.b32.xlu0 %v1225, 4
      %v2810 = vpop.permute.xlu0 %2809
      %2811 = vrot.lane.b32.xlu0 %v1226, 4
      %v2812 = vpop.permute.xlu0 %2811
      %2813 = vrot.lane.b32.xlu0 %v1227, 4
      %v2814 = vpop.permute.xlu0 %2813
      %2815 = vrot.lane.b32.xlu0 %v1228, 4
      %v2816 = vpop.permute.xlu0 %2815
      %2817 = vrot.lane.b32.xlu0 %v1229, 4
      %v2818 = vpop.permute.xlu0 %2817
      %2819 = vrot.lane.b32.xlu0 %v1230, 4
      %v2820 = vpop.permute.xlu0 %2819
      %2821 = vrot.lane.b32.xlu0 %v1231, 4
      %v2822 = vpop.permute.xlu0 %2821
      %2823 = vrot.lane.b32.xlu0 %v1216, 4
      %v2824 = vpop.permute.xlu0 %2823
      %2825 = vrot.lane.b32.xlu0 %v1232, 4
      %v2826 = vpop.permute.xlu0 %2825
      %v2828 = vsel %vm2300, %v911, %v2796
      %v2830 = vsel %vm2300, %v913, %v2798
      %v2832 = vsel %vm2300, %v915, %v2800
      %v2834 = vsel %vm2300, %v917, %v2802
      %v2836 = vsel %vm2300, %v919, %v2804
      %v2838 = vsel %vm2300, %v921, %v2806
      %v2840 = vsel %vm2300, %v923, %v2808
      %v2842 = vsel %vm2300, %v925, %v2810
      %v2844 = vsel %vm2300, %v927, %v2812
      %v2846 = vsel %vm2300, %v929, %v2814
      %v2848 = vsel %vm2300, %v931, %v2816
      %v2850 = vsel %vm2300, %v933, %v2818
      %v2852 = vsel %vm2300, %v935, %v2820
      %v2854 = vsel %vm2300, %v937, %v2822
      %v2856 = vsel %vm2300, %v938, %v2824
      %v2858 = vsel %vm2300, %v939, %v2826
      %v2859 = vsel %vm2300, %v940, %v1250
      %v2860 = vsel %vm2300, %v941, %v1250
      %v2893 = vrot.slane %v2306, 1
      %v2894 = vrot.slane %v2828, 1
      %v2895 = vsel %vm1758, %v2893, %v2894
      %v2896 = vrot.slane %v2308, 1
      %v2897 = vrot.slane %v2830, 1
      %v2898 = vsel %vm1758, %v2896, %v2897
      %v2899 = vrot.slane %v2310, 1
      %v2900 = vrot.slane %v2832, 1
      %v2901 = vsel %vm1758, %v2899, %v2900
      %v2902 = vrot.slane %v2312, 1
      %v2903 = vrot.slane %v2834, 1
      %v2904 = vsel %vm1758, %v2902, %v2903
      %v2905 = vrot.slane %v2314, 1
      %v2906 = vrot.slane %v2836, 1
      %v2907 = vsel %vm1758, %v2905, %v2906
      %v2908 = vrot.slane %v2316, 1
      %v2909 = vrot.slane %v2838, 1
      %v2910 = vsel %vm1758, %v2908, %v2909
      %v2911 = vrot.slane %v2318, 1
      %v2912 = vrot.slane %v2840, 1
      %v2913 = vsel %vm1758, %v2911, %v2912
      %v2914 = vrot.slane %v2320, 1
      %v2915 = vrot.slane %v2842, 1
      %v2916 = vsel %vm1758, %v2914, %v2915
      %v2917 = vrot.slane %v2322, 1
      %v2918 = vrot.slane %v2844, 1
      %v2919 = vsel %vm1758, %v2917, %v2918
      %v2920 = vrot.slane %v2324, 1
      %v2921 = vrot.slane %v2846, 1
      %v2922 = vsel %vm1758, %v2920, %v2921
      %v2923 = vrot.slane %v2326, 1
      %v2924 = vrot.slane %v2848, 1
      %v2925 = vsel %vm1758, %v2923, %v2924
      %v2926 = vrot.slane %v2328, 1
      %v2927 = vrot.slane %v2850, 1
      %v2928 = vsel %vm1758, %v2926, %v2927
      %v2929 = vrot.slane %v2330, 1
      %v2930 = vrot.slane %v2852, 1
      %v2931 = vsel %vm1758, %v2929, %v2930
      %v2932 = vrot.slane %v2332, 1
      %v2933 = vrot.slane %v2854, 1
      %v2934 = vsel %vm1758, %v2932, %v2933
      %v2935 = vrot.slane %v2856, 1
      %v2936 = vrot.slane %v2858, 1
      %v2937 = vsel %vm1758, %v2935, %v2936
      %v2938 = vrot.slane %v2859, 1
      %v2939 = vrot.slane %v2860, 1
      %v2940 = vsel %vm1758, %v2938, %v2939
      %2941 = vrot.lane.b32.xlu0 %v2895, 64
      %v2942 = vpop.permute.xlu0 %2941
      %2943 = vrot.lane.b32.xlu0 %v2898, 64
      %v2944 = vpop.permute.xlu0 %2943
      %2945 = vrot.lane.b32.xlu0 %v2901, 64
      %v2946 = vpop.permute.xlu0 %2945
      %2947 = vrot.lane.b32.xlu0 %v2904, 64
      %v2948 = vpop.permute.xlu0 %2947
      %2949 = vrot.lane.b32.xlu0 %v2907, 64
      %v2950 = vpop.permute.xlu0 %2949
      %2951 = vrot.lane.b32.xlu0 %v2910, 64
      %v2952 = vpop.permute.xlu0 %2951
      %2953 = vrot.lane.b32.xlu0 %v2913, 64
      %v2954 = vpop.permute.xlu0 %2953
      %2955 = vrot.lane.b32.xlu0 %v2916, 64
      %v2956 = vpop.permute.xlu0 %2955
      %2957 = vrot.lane.b32.xlu0 %v2919, 64
      %v2958 = vpop.permute.xlu0 %2957
      %2959 = vrot.lane.b32.xlu0 %v2922, 64
      %v2960 = vpop.permute.xlu0 %2959
      %2961 = vrot.lane.b32.xlu0 %v2925, 64
      %v2962 = vpop.permute.xlu0 %2961
      %2963 = vrot.lane.b32.xlu0 %v2928, 64
      %v2964 = vpop.permute.xlu0 %2963
      %2965 = vrot.lane.b32.xlu0 %v2931, 64
      %v2966 = vpop.permute.xlu0 %2965
      %2967 = vrot.lane.b32.xlu0 %v2934, 64
      %v2968 = vpop.permute.xlu0 %2967
      %2969 = vrot.lane.b32.xlu0 %v2937, 64
      %v2970 = vpop.permute.xlu0 %2969
      %2971 = vrot.lane.b32.xlu0 %v2940, 64
      %v2972 = vpop.permute.xlu0 %2971
      %v2974 = vsel %vm575, %v2764, %v2942
      %v2976 = vsel %vm575, %v2766, %v2944
      %v2978 = vsel %vm575, %v2768, %v2946
      %v2980 = vsel %vm575, %v2770, %v2948
      %v2982 = vsel %vm575, %v2772, %v2950
      %v2984 = vsel %vm575, %v2774, %v2952
      %v2986 = vsel %vm575, %v2776, %v2954
      %v2988 = vsel %vm575, %v2778, %v2956
      %v2990 = vsel %vm575, %v2780, %v2958
      %v2992 = vsel %vm575, %v2782, %v2960
      %v2994 = vsel %vm575, %v2784, %v2962
      %v2996 = vsel %vm575, %v2786, %v2964
      %v2998 = vsel %vm575, %v2788, %v2966
      %v3000 = vsel %vm575, %v2790, %v2968
      %v3002 = vsel %vm575, %v2792, %v2970
      %v3004 = vsel %vm575, %v2794, %v2972
      %v3005 = vld [vmem:[%s3] sm:$0xf]
      %v3006 = vld [vmem:[%s3 + $0x4] sm:$0xf]
      %v3007 = vld [vmem:[%s3 + $0x8] sm:$0xf]
      %v3008 = vld [vmem:[%s3 + $0xc] sm:$0xf]
      %v3009 = vld [vmem:[%s3 + $0x10] sm:$0xf]
      %v3010 = vld [vmem:[%s3 + $0x14] sm:$0xf]
      %v3011 = vld [vmem:[%s3 + $0x18] sm:$0xf]
      %v3012 = vld [vmem:[%s3 + $0x1c] sm:$0xf]
      %v3013 = vld [vmem:[%s3 + $0x20] sm:$0xf]
      %v3023 = vunpack.c.l.b16 %v3005
      %v3024 = vunpack.c.l.b16 %v3006
      %v3025 = vunpack.c.l.b16 %v3007
      %v3026 = vunpack.c.l.b16 %v3008
      %v3027 = vunpack.c.l.b16 %v3009
      %v3028 = vunpack.c.l.b16 %v3010
      %v3029 = vunpack.c.l.b16 %v3011
      %v3030 = vunpack.c.l.b16 %v3012
      %v3031 = vunpack.c.l.b16 %v3013
      %v3032 = vpack.c.b16 %v3024, %v3023
      %v3033 = vpack.c.b16 %v3026, %v3025
      %v3034 = vpack.c.b16 %v3028, %v3027
      %v3035 = vpack.c.b16 %v3030, %v3029
      %v3036 = vpack.c.b16 %v3031, %v3031
      %vm3041 = vcmask 588800
      %v3042 = vsel %vm3041, %v2974, 0
      %v3044 = vsel %vm3041, %v2976, 0
      %v3046 = vsel %vm3041, %v2978, 0
      %v3048 = vsel %vm3041, %v2980, 0
      %v3050 = vsel %vm3041, %v2982, 0
      %v3052 = vsel %vm3041, %v2984, 0
      %v3054 = vsel %vm3041, %v2986, 0
      %v3056 = vsel %vm3041, %v2988, 0
      %v3058 = vsel %vm3041, %v2990, 0
      %v3060 = vsel %vm3041, %v2992, 0
      %v3062 = vsel %vm3041, %v2994, 0
      %v3064 = vsel %vm3041, %v2996, 0
      %v3066 = vsel %vm3041, %v2998, 0
      %v3068 = vsel %vm3041, %v3000, 0
      %v3070 = vsel %vm3041, %v3002, 0
      %v3072 = vsel %vm3041, %v3004, 0
      %vm3074 = vcmask 1043456
      %v3076 = vsel %vm3074, %v3036, 0
      %3078 = vmatprep.subr.bf16.mxu0 0
      %3079 = vmatpush1.bf16.msra.mxu0 0
      %3080 = vmatprep.subr.bf16.mxu0 0
      %3081 = vmatpush1.bf16.msra.mxu0 0
      %3082 = vmatprep.subr.bf16.mxu0 0
      %3083 = vmatpush1.bf16.msra.mxu0 0
      %3084 = vmatprep.subr.bf16.mxu0 0
      %3085 = vmatpush1.bf16.msra.mxu0 %v3076
      %3086 = vmatprep.subr.bf16.mxu0 0
      %3087 = vmatpush1.bf16.msra.mxu0 %v3035
      %3088 = vmatprep.subr.bf16.mxu0 0
      %3089 = vmatpush1.bf16.msra.mxu0 %v3034
      %3090 = vmatprep.subr.bf16.mxu0 0
      %3091 = vmatpush1.bf16.msra.mxu0 %v3033
      %3092 = vmatprep.subr.bf16.mxu0 0
      %3093 = vmatpush1.bf16.msra.mxu0 %v3032
      %3094 = vmatprep.subr.bf16.mxu0 0
      %3095 = vmatpush2.bf16.msra.mxu0 0
      %3096 = vmatprep.subr.bf16.mxu0 0
      %3097 = vmatpush2.bf16.msra.mxu0 0
      %3098 = vmatprep.subr.bf16.mxu0 0
      %3099 = vmatpush2.bf16.msra.mxu0 0
      %3100 = vmatprep.subr.bf16.mxu0 0
      %3101 = vmatpush2.bf16.msra.mxu0 0
      %3102 = vmatprep.subr.bf16.mxu0 0
      %3103 = vmatpush2.bf16.msra.mxu0 0
      %3104 = vmatprep.subr.bf16.mxu0 0
      %3105 = vmatpush2.bf16.msra.mxu0 0
      %3106 = vmatprep.subr.bf16.mxu0 0
      %3107 = vmatpush2.bf16.msra.mxu0 0
      %3108 = vmatprep.subr.bf16.mxu0 0
      %3109 = vmatpush2.bf16.msra.mxu0 0
      %3110 = vmatprep.mubr.bf16.mxu0 0
      %3111 = vmatmul.mubr.bf16.gmra.mxu0 %v3042
      %v3112 = vpop.f32.mrf.mxu0
      %v3113 = vadd.f32 0.0, %v3112
      %v3114 = vpop.f32.mrf.mxu0
      %v3115 = vpop.f32.mrf.mxu0
      %v3116 = vadd.f32 0.0, %v3115
      %v3117 = vpop.f32.mrf.mxu0
      %3118 = vmatprep.mubr.bf16.mxu0 0
      %3119 = vmatmul.mubr.bf16.gmra.mxu0 %v3044
      %v3120 = vpop.f32.mrf.mxu0
      %v3121 = vadd.f32 0.0, %v3120
      %v3122 = vpop.f32.mrf.mxu0
      %v3123 = vpop.f32.mrf.mxu0
      %v3124 = vadd.f32 0.0, %v3123
      %v3125 = vpop.f32.mrf.mxu0
      %3126 = vmatprep.mubr.bf16.mxu0 0
      %3127 = vmatmul.mubr.bf16.gmra.mxu0 %v3046
      %v3128 = vpop.f32.mrf.mxu0
      %v3129 = vadd.f32 0.0, %v3128
      %v3130 = vpop.f32.mrf.mxu0
      %v3131 = vpop.f32.mrf.mxu0
      %v3132 = vadd.f32 0.0, %v3131
      %v3133 = vpop.f32.mrf.mxu0
      %3134 = vmatprep.mubr.bf16.mxu0 0
      %3135 = vmatmul.mubr.bf16.gmra.mxu0 %v3048
      %v3136 = vpop.f32.mrf.mxu0
      %v3137 = vadd.f32 0.0, %v3136
      %v3138 = vpop.f32.mrf.mxu0
      %v3139 = vpop.f32.mrf.mxu0
      %v3140 = vadd.f32 0.0, %v3139
      %v3141 = vpop.f32.mrf.mxu0
      %3142 = vmatprep.mubr.bf16.mxu0 0
      %3143 = vmatmul.mubr.bf16.gmra.mxu0 %v3050
      %v3144 = vpop.f32.mrf.mxu0
      %v3145 = vadd.f32 0.0, %v3144
      %v3146 = vpop.f32.mrf.mxu0
      %v3147 = vpop.f32.mrf.mxu0
      %v3148 = vadd.f32 0.0, %v3147
      %v3149 = vpop.f32.mrf.mxu0
      %3150 = vmatprep.mubr.bf16.mxu0 0
      %3151 = vmatmul.mubr.bf16.gmra.mxu0 %v3052
      %v3152 = vpop.f32.mrf.mxu0
      %v3153 = vadd.f32 0.0, %v3152
      %v3154 = vpop.f32.mrf.mxu0
      %v3155 = vpop.f32.mrf.mxu0
      %v3156 = vadd.f32 0.0, %v3155
      %v3157 = vpop.f32.mrf.mxu0
      %3158 = vmatprep.mubr.bf16.mxu0 0
      %3159 = vmatmul.mubr.bf16.gmra.mxu0 %v3054
      %v3160 = vpop.f32.mrf.mxu0
      %v3161 = vadd.f32 0.0, %v3160
      %v3162 = vpop.f32.mrf.mxu0
      %v3163 = vpop.f32.mrf.mxu0
      %v3164 = vadd.f32 0.0, %v3163
      %v3165 = vpop.f32.mrf.mxu0
      %3166 = vmatprep.mubr.bf16.mxu0 0
      %3167 = vmatmul.mubr.bf16.gmra.mxu0 %v3056
      %v3168 = vpop.f32.mrf.mxu0
      %v3169 = vadd.f32 0.0, %v3168
      %v3170 = vpop.f32.mrf.mxu0
      %v3171 = vpop.f32.mrf.mxu0
      %v3172 = vadd.f32 0.0, %v3171
      %v3173 = vpop.f32.mrf.mxu0
      %3174 = vmatprep.mubr.bf16.mxu0 0
      %3175 = vmatmul.mubr.bf16.gmra.mxu0 %v3058
      %v3176 = vpop.f32.mrf.mxu0
      %v3177 = vadd.f32 0.0, %v3176
      %v3178 = vpop.f32.mrf.mxu0
      %v3179 = vpop.f32.mrf.mxu0
      %v3180 = vadd.f32 0.0, %v3179
      %v3181 = vpop.f32.mrf.mxu0
      %3182 = vmatprep.mubr.bf16.mxu0 0
      %3183 = vmatmul.mubr.bf16.gmra.mxu0 %v3060
      %v3184 = vpop.f32.mrf.mxu0
      %v3185 = vadd.f32 0.0, %v3184
      %v3186 = vpop.f32.mrf.mxu0
      %v3187 = vpop.f32.mrf.mxu0
      %v3188 = vadd.f32 0.0, %v3187
      %v3189 = vpop.f32.mrf.mxu0
      %3190 = vmatprep.mubr.bf16.mxu0 0
      %3191 = vmatmul.mubr.bf16.gmra.mxu0 %v3062
      %v3192 = vpop.f32.mrf.mxu0
      %v3193 = vadd.f32 0.0, %v3192
      %v3194 = vpop.f32.mrf.mxu0
      %v3195 = vpop.f32.mrf.mxu0
      %v3196 = vadd.f32 0.0, %v3195
      %v3197 = vpop.f32.mrf.mxu0
      %3198 = vmatprep.mubr.bf16.mxu0 0
      %3199 = vmatmul.mubr.bf16.gmra.mxu0 %v3064
      %v3200 = vpop.f32.mrf.mxu0
      %v3201 = vadd.f32 0.0, %v3200
      %v3202 = vpop.f32.mrf.mxu0
      %v3203 = vpop.f32.mrf.mxu0
      %v3204 = vadd.f32 0.0, %v3203
      %v3205 = vpop.f32.mrf.mxu0
      %3206 = vmatprep.mubr.bf16.mxu0 0
      %3207 = vmatmul.mubr.bf16.gmra.mxu0 %v3066
      %v3208 = vpop.f32.mrf.mxu0
      %v3209 = vadd.f32 0.0, %v3208
      %v3210 = vpop.f32.mrf.mxu0
      %v3211 = vpop.f32.mrf.mxu0
      %v3212 = vadd.f32 0.0, %v3211
      %v3213 = vpop.f32.mrf.mxu0
      %3214 = vmatprep.mubr.bf16.mxu0 0
      %3215 = vmatmul.mubr.bf16.gmra.mxu0 %v3068
      %v3216 = vpop.f32.mrf.mxu0
      %v3217 = vadd.f32 0.0, %v3216
      %v3218 = vpop.f32.mrf.mxu0
      %v3219 = vpop.f32.mrf.mxu0
      %v3220 = vadd.f32 0.0, %v3219
      %v3221 = vpop.f32.mrf.mxu0
      %3222 = vmatprep.mubr.bf16.mxu0 0
      %3223 = vmatmul.mubr.bf16.gmra.mxu0 %v3070
      %v3224 = vpop.f32.mrf.mxu0
      %v3225 = vadd.f32 0.0, %v3224
      %v3226 = vpop.f32.mrf.mxu0
      %v3227 = vpop.f32.mrf.mxu0
      %v3228 = vadd.f32 0.0, %v3227
      %v3229 = vpop.f32.mrf.mxu0
      %3230 = vmatprep.mubr.bf16.mxu0 0
      %3231 = vmatmul.mubr.bf16.gmra.mxu0 %v3072
      %v3232 = vpop.f32.mrf.mxu0
      %v3233 = vadd.f32 0.0, %v3232
      %v3234 = vpop.f32.mrf.mxu0
      %v3235 = vpop.f32.mrf.mxu0
      %v3236 = vadd.f32 0.0, %v3235
      %v3237 = vpop.f32.mrf.mxu0
      %3238 = vdwg.mxu0
      %v3239 = vld [vmem:[%s4] sm:$0x1]
      %v3241 = vlaneseq
      %v3242 = vshrl.u32 %v3241, 7
      %v3243 = vsub.s32 0, %v3242
      %v3244 = vrot.slane %v3239, %v3243
      %v3246 = vmul.f32 %v3113, %v3244
      %v3247 = vmul.f32 %v3116, %v3244
      %v3248 = vmul.f32 %v3121, %v3244
      %v3249 = vmul.f32 %v3124, %v3244
      %v3250 = vmul.f32 %v3129, %v3244
      %v3251 = vmul.f32 %v3132, %v3244
      %v3252 = vmul.f32 %v3137, %v3244
      %v3253 = vmul.f32 %v3140, %v3244
      %v3254 = vmul.f32 %v3145, %v3244
      %v3255 = vmul.f32 %v3148, %v3244
      %v3256 = vmul.f32 %v3153, %v3244
      %v3257 = vmul.f32 %v3156, %v3244
      %v3258 = vmul.f32 %v3161, %v3244
      %v3259 = vmul.f32 %v3164, %v3244
      %v3260 = vmul.f32 %v3169, %v3244
      %v3261 = vmul.f32 %v3172, %v3244
      %v3262 = vmul.f32 %v3177, %v3244
      %v3263 = vmul.f32 %v3180, %v3244
      %v3264 = vmul.f32 %v3185, %v3244
      %v3265 = vmul.f32 %v3188, %v3244
      %v3266 = vmul.f32 %v3193, %v3244
      %v3267 = vmul.f32 %v3196, %v3244
      %v3268 = vmul.f32 %v3201, %v3244
      %v3269 = vmul.f32 %v3204, %v3244
      %v3270 = vmul.f32 %v3209, %v3244
      %v3271 = vmul.f32 %v3212, %v3244
      %v3272 = vmul.f32 %v3217, %v3244
      %v3273 = vmul.f32 %v3220, %v3244
      %v3274 = vmul.f32 %v3225, %v3244
      %v3275 = vmul.f32 %v3228, %v3244
      %v3276 = vmul.f32 %v3233, %v3244
      %v3277 = vmul.f32 %v3236, %v3244
      %v3278 = vld [vmem:[%s5] sm:$0x1]
      %v3280 = vlaneseq
      %v3281 = vshrl.u32 %v3280, 7
      %v3282 = vsub.s32 0, %v3281
      %v3283 = vrot.slane %v3278, %v3282
      %v3285 = vadd.f32 %v3246, %v3283
      %v3286 = vadd.f32 %v3247, %v3283
      %v3287 = vadd.f32 %v3248, %v3283
      %v3288 = vadd.f32 %v3249, %v3283
      %v3289 = vadd.f32 %v3250, %v3283
      %v3290 = vadd.f32 %v3251, %v3283
      %v3291 = vadd.f32 %v3252, %v3283
      %v3292 = vadd.f32 %v3253, %v3283
      %v3293 = vadd.f32 %v3254, %v3283
      %v3294 = vadd.f32 %v3255, %v3283
      %v3295 = vadd.f32 %v3256, %v3283
      %v3296 = vadd.f32 %v3257, %v3283
      %v3297 = vadd.f32 %v3258, %v3283
      %v3298 = vadd.f32 %v3259, %v3283
      %v3299 = vadd.f32 %v3260, %v3283
      %v3300 = vadd.f32 %v3261, %v3283
      %v3301 = vadd.f32 %v3262, %v3283
      %v3302 = vadd.f32 %v3263, %v3283
      %v3303 = vadd.f32 %v3264, %v3283
      %v3304 = vadd.f32 %v3265, %v3283
      %v3305 = vadd.f32 %v3266, %v3283
      %v3306 = vadd.f32 %v3267, %v3283
      %v3307 = vadd.f32 %v3268, %v3283
      %v3308 = vadd.f32 %v3269, %v3283
      %v3309 = vadd.f32 %v3270, %v3283
      %v3310 = vadd.f32 %v3271, %v3283
      %v3311 = vadd.f32 %v3272, %v3283
      %v3312 = vadd.f32 %v3273, %v3283
      %v3313 = vadd.f32 %v3274, %v3283
      %v3314 = vadd.f32 %v3275, %v3283
      %v3315 = vadd.f32 %v3276, %v3283
      %v3316 = vadd.f32 %v3277, %v3283
      %v3317 = vmax.f32 %v3285, 0.0
      %v3318 = vmax.f32 %v3286, 0.0
      %v3319 = vmax.f32 %v3287, 0.0
      %v3320 = vmax.f32 %v3288, 0.0
      %v3321 = vmax.f32 %v3289, 0.0
      %v3322 = vmax.f32 %v3290, 0.0
      %v3323 = vmax.f32 %v3291, 0.0
      %v3324 = vmax.f32 %v3292, 0.0
      %v3325 = vmax.f32 %v3293, 0.0
      %v3326 = vmax.f32 %v3294, 0.0
      %v3327 = vmax.f32 %v3295, 0.0
      %v3328 = vmax.f32 %v3296, 0.0
      %v3329 = vmax.f32 %v3297, 0.0
      %v3330 = vmax.f32 %v3298, 0.0
      %v3331 = vmax.f32 %v3299, 0.0
      %v3332 = vmax.f32 %v3300, 0.0
      %v3333 = vmax.f32 %v3301, 0.0
      %v3334 = vmax.f32 %v3302, 0.0
      %v3335 = vmax.f32 %v3303, 0.0
      %v3336 = vmax.f32 %v3304, 0.0
      %v3337 = vmax.f32 %v3305, 0.0
      %v3338 = vmax.f32 %v3306, 0.0
      %v3339 = vmax.f32 %v3307, 0.0
      %v3340 = vmax.f32 %v3308, 0.0
      %v3341 = vmax.f32 %v3309, 0.0
      %v3342 = vmax.f32 %v3310, 0.0
      %v3343 = vmax.f32 %v3311, 0.0
      %v3344 = vmax.f32 %v3312, 0.0
      %v3345 = vmax.f32 %v3313, 0.0
      %v3346 = vmax.f32 %v3314, 0.0
      %v3347 = vmax.f32 %v3315, 0.0
      %v3348 = vmax.f32 %v3316, 0.0
      %3349 = vst [vmem:[#allocation2] sm:$0xff] 0.0
      %3350 = vst [vmem:[#allocation2 + $0x8] sm:$0xff] 0.0
      %3351 = vst [vmem:[#allocation2 + $0x10] sm:$0xff] 0.0
      %3352 = vst [vmem:[#allocation2 + $0x18] sm:$0xff] 0.0
      %3353 = vst [vmem:[#allocation2 + $0x20] sm:$0xff] 0.0
      %3354 = vst [vmem:[#allocation2 + $0x28] sm:$0xff] 0.0
      %3355 = vst [vmem:[#allocation2 + $0x30] sm:$0xff] 0.0
      %3356 = vst [vmem:[#allocation2 + $0x38] sm:$0xff] 0.0
      %3357 = vst [vmem:[#allocation2 + $0x40] sm:$0xff] 0.0
      %3358 = vst [vmem:[#allocation2 + $0x48] sm:$0xff] 0.0
      %3359 = vst [vmem:[#allocation2 + $0x50] sm:$0xff] 0.0
      %3360 = vst [vmem:[#allocation2 + $0x58] sm:$0xff] 0.0
      %3361 = vst [vmem:[#allocation2 + $0x60] sm:$0xff] 0.0
      %3362 = vst [vmem:[#allocation2 + $0x68] sm:$0xff] 0.0
      %3363 = vst [vmem:[#allocation2 + $0x70] sm:$0xff] 0.0
      %3364 = vst [vmem:[#allocation2 + $0x78] sm:$0xff] 0.0
      %3365 = vst [vmem:[#allocation2 + $0x80] sm:$0xff] 0.0
      %3366 = vst [vmem:[#allocation2 + $0x88] sm:$0xff] 0.0
      %3367 = vst [vmem:[#allocation2 + $0x90] sm:$0xff] 0.0
      %3368 = vst [vmem:[#allocation2 + $0x98] sm:$0xff] 0.0
      %3369 = vst [vmem:[#allocation2 + $0xa0] sm:$0xff] 0.0
      %3370 = vst [vmem:[#allocation2 + $0xa8] sm:$0xff] 0.0
      %3371 = vst [vmem:[#allocation2 + $0xb0] sm:$0xff] 0.0
      %3372 = vst [vmem:[#allocation2 + $0xb8] sm:$0xff] 0.0
      %3373 = vst [vmem:[#allocation2 + $0xc0] sm:$0xff] 0.0
      %3374 = vst [vmem:[#allocation2 + $0xc8] sm:$0xff] 0.0
      %3375 = vst [vmem:[#allocation2 + $0xd0] sm:$0xff] 0.0
      %3376 = vst [vmem:[#allocation2 + $0xd8] sm:$0xff] 0.0
      %3377 = vst [vmem:[#allocation2 + $0xe0] sm:$0xff] 0.0
      %3378 = vst [vmem:[#allocation2 + $0xe8] sm:$0xff] 0.0
      %3379 = vst [vmem:[#allocation2 + $0xf0] sm:$0xff] 0.0
      %3380 = vst [vmem:[#allocation2 + $0xf8] sm:$0xff] 0.0
      %3381 = vst [vmem:[#allocation2 + $0x100] sm:$0xff] 0.0
      %3382 = vst [vmem:[#allocation2 + $0x108] sm:$0xff] 0.0
      %3383 = vst [vmem:[#allocation2 + $0x110] sm:$0xff] 0.0
      %3384 = vst [vmem:[#allocation2 + $0x118] sm:$0xff] 0.0
      %3385 = vst [vmem:[#allocation2 + $0x120] sm:$0xff] 0.0
      %3386 = vst [vmem:[#allocation2 + $0x128] sm:$0xff] 0.0
      %3387 = vst [vmem:[#allocation2 + $0x130] sm:$0xff] 0.0
      %3388 = vst [vmem:[#allocation2 + $0x138] sm:$0xff] 0.0
      %3389 = vst [vmem:[#allocation2 + $0x140] sm:$0xff] 0.0
      %3390 = vst [vmem:[#allocation2 + $0x148] sm:$0xff] 0.0
      %3391 = vst [vmem:[#allocation2 + $0x150] sm:$0xff] 0.0
      %3392 = vst [vmem:[#allocation2 + $0x158] sm:$0xff] 0.0
      %3393 = vst [vmem:[#allocation2 + $0x160] sm:$0xff] 0.0
      %3394 = vst [vmem:[#allocation2 + $0x168] sm:$0xff] 0.0
      %3395 = vst [vmem:[#allocation2 + $0x170] sm:$0xff] 0.0
      %3396 = vst [vmem:[#allocation2 + $0x178] sm:$0xff] 0.0
      %3397 = vst [vmem:[#allocation2 + $0x180] sm:$0xff] 0.0
      %3398 = vst [vmem:[#allocation2 + $0x188] sm:$0xff] 0.0
      %3399 = vst [vmem:[#allocation2 + $0x190] sm:$0xff] 0.0
      %3400 = vst [vmem:[#allocation2 + $0x198] sm:$0xff] 0.0
      %3401 = vst [vmem:[#allocation2 + $0x1a0] sm:$0xff] 0.0
      %3402 = vst [vmem:[#allocation2 + $0x1a8] sm:$0xff] 0.0
      %s3403 = scalar_lea.vmem [#allocation2], 24
      %3404 = vst [vmem:[%s3403 + $0x1] sm:$0xff] %v3317
      %3405 = vst [vmem:[%s3403 + $0x9] sm:$0xff] %v3318
      %3406 = vst [vmem:[%s3403 + $0x19] sm:$0xff] %v3319
      %3407 = vst [vmem:[%s3403 + $0x21] sm:$0xff] %v3320
      %3408 = vst [vmem:[%s3403 + $0x31] sm:$0xff] %v3321
      %3409 = vst [vmem:[%s3403 + $0x39] sm:$0xff] %v3322
      %3410 = vst [vmem:[%s3403 + $0x49] sm:$0xff] %v3323
      %3411 = vst [vmem:[%s3403 + $0x51] sm:$0xff] %v3324
      %3412 = vst [vmem:[%s3403 + $0x61] sm:$0xff] %v3325
      %3413 = vst [vmem:[%s3403 + $0x69] sm:$0xff] %v3326
      %3414 = vst [vmem:[%s3403 + $0x79] sm:$0xff] %v3327
      %3415 = vst [vmem:[%s3403 + $0x81] sm:$0xff] %v3328
      %3416 = vst [vmem:[%s3403 + $0x91] sm:$0xff] %v3329
      %3417 = vst [vmem:[%s3403 + $0x99] sm:$0xff] %v3330
      %3418 = vst [vmem:[%s3403 + $0xa9] sm:$0xff] %v3331
      %3419 = vst [vmem:[%s3403 + $0xb1] sm:$0xff] %v3332
      %3420 = vst [vmem:[%s3403 + $0xc1] sm:$0xff] %v3333
      %3421 = vst [vmem:[%s3403 + $0xc9] sm:$0xff] %v3334
      %3422 = vst [vmem:[%s3403 + $0xd9] sm:$0xff] %v3335
      %3423 = vst [vmem:[%s3403 + $0xe1] sm:$0xff] %v3336
      %3424 = vst [vmem:[%s3403 + $0xf1] sm:$0xff] %v3337
      %3425 = vst [vmem:[%s3403 + $0xf9] sm:$0xff] %v3338
      %3426 = vst [vmem:[%s3403 + $0x109] sm:$0xff] %v3339
      %3427 = vst [vmem:[%s3403 + $0x111] sm:$0xff] %v3340
      %3428 = vst [vmem:[%s3403 + $0x121] sm:$0xff] %v3341
      %3429 = vst [vmem:[%s3403 + $0x129] sm:$0xff] %v3342
      %3430 = vst [vmem:[%s3403 + $0x139] sm:$0xff] %v3343
      %3431 = vst [vmem:[%s3403 + $0x141] sm:$0xff] %v3344
      %3432 = vst [vmem:[%s3403 + $0x151] sm:$0xff] %v3345
      %3433 = vst [vmem:[%s3403 + $0x159] sm:$0xff] %v3346
      %3434 = vst [vmem:[%s3403 + $0x169] sm:$0xff] %v3347
      %3435 = vst [vmem:[%s3403 + $0x171] sm:$0xff] %v3348
      %v3436 = vld [vmem:[#allocation2] sm:$0xff]
      %v3437 = vld [vmem:[#allocation2 + $0x8] sm:$0xff]
      %v3438 = vld [vmem:[#allocation2 + $0x18] sm:$0xff]
      %v3439 = vld [vmem:[#allocation2 + $0x20] sm:$0xff]
      %v3440 = vld [vmem:[#allocation2 + $0x30] sm:$0xff]
      %v3441 = vld [vmem:[#allocation2 + $0x38] sm:$0xff]
      %v3442 = vld [vmem:[#allocation2 + $0x48] sm:$0xff]
      %v3443 = vld [vmem:[#allocation2 + $0x50] sm:$0xff]
      %v3444 = vld [vmem:[#allocation2 + $0x60] sm:$0xff]
      %v3445 = vld [vmem:[#allocation2 + $0x68] sm:$0xff]
      %v3446 = vld [vmem:[#allocation2 + $0x78] sm:$0xff]
      %v3447 = vld [vmem:[#allocation2 + $0x80] sm:$0xff]
      %v3448 = vld [vmem:[#allocation2 + $0x90] sm:$0xff]
      %v3449 = vld [vmem:[#allocation2 + $0x98] sm:$0xff]
      %v3450 = vld [vmem:[#allocation2 + $0xa8] sm:$0xff]
      %v3451 = vld [vmem:[#allocation2 + $0xb0] sm:$0xff]
      %v3452 = vld [vmem:[#allocation2 + $0xc0] sm:$0xff]
      %v3453 = vld [vmem:[#allocation2 + $0xc8] sm:$0xff]
      %v3454 = vld [vmem:[#allocation2 + $0xd8] sm:$0xff]
      %v3455 = vld [vmem:[#allocation2 + $0xe0] sm:$0xff]
      %v3456 = vld [vmem:[#allocation2 + $0xf0] sm:$0xff]
      %v3457 = vld [vmem:[#allocation2 + $0xf8] sm:$0xff]
      %v3458 = vld [vmem:[#allocation2 + $0x108] sm:$0xff]
      %v3459 = vld [vmem:[#allocation2 + $0x110] sm:$0xff]
      %v3460 = vld [vmem:[#allocation2 + $0x120] sm:$0xff]
      %v3461 = vld [vmem:[#allocation2 + $0x128] sm:$0xff]
      %v3462 = vld [vmem:[#allocation2 + $0x138] sm:$0xff]
      %v3463 = vld [vmem:[#allocation2 + $0x140] sm:$0xff]
      %v3464 = vld [vmem:[#allocation2 + $0x150] sm:$0xff]
      %v3465 = vld [vmem:[#allocation2 + $0x158] sm:$0xff]
      %v3466 = vld [vmem:[#allocation2 + $0x168] sm:$0xff]
      %v3467 = vld [vmem:[#allocation2 + $0x170] sm:$0xff]
      %v3468 = vld [vmem:[#allocation2 + $0x1] sm:$0xff]
      %v3469 = vld [vmem:[#allocation2 + $0x9] sm:$0xff]
      %v3470 = vld [vmem:[#allocation2 + $0x19] sm:$0xff]
      %v3471 = vld [vmem:[#allocation2 + $0x21] sm:$0xff]
      %v3472 = vld [vmem:[#allocation2 + $0x31] sm:$0xff]
      %v3473 = vld [vmem:[#allocation2 + $0x39] sm:$0xff]
      %v3474 = vld [vmem:[#allocation2 + $0x49] sm:$0xff]
      %v3475 = vld [vmem:[#allocation2 + $0x51] sm:$0xff]
      %v3476 = vld [vmem:[#allocation2 + $0x61] sm:$0xff]
      %v3477 = vld [vmem:[#allocation2 + $0x69] sm:$0xff]
      %v3478 = vld [vmem:[#allocation2 + $0x79] sm:$0xff]
      %v3479 = vld [vmem:[#allocation2 + $0x81] sm:$0xff]
      %v3480 = vld [vmem:[#allocation2 + $0x91] sm:$0xff]
      %v3481 = vld [vmem:[#allocation2 + $0x99] sm:$0xff]
      %v3482 = vld [vmem:[#allocation2 + $0xa9] sm:$0xff]
      %v3483 = vld [vmem:[#allocation2 + $0xb1] sm:$0xff]
      %v3484 = vld [vmem:[#allocation2 + $0xc1] sm:$0xff]
      %v3485 = vld [vmem:[#allocation2 + $0xc9] sm:$0xff]
      %v3486 = vld [vmem:[#allocation2 + $0xd9] sm:$0xff]
      %v3487 = vld [vmem:[#allocation2 + $0xe1] sm:$0xff]
      %v3488 = vld [vmem:[#allocation2 + $0xf1] sm:$0xff]
      %v3489 = vld [vmem:[#allocation2 + $0xf9] sm:$0xff]
      %v3490 = vld [vmem:[#allocation2 + $0x109] sm:$0xff]
      %v3491 = vld [vmem:[#allocation2 + $0x111] sm:$0xff]
      %v3492 = vld [vmem:[#allocation2 + $0x121] sm:$0xff]
      %v3493 = vld [vmem:[#allocation2 + $0x129] sm:$0xff]
      %v3494 = vld [vmem:[#allocation2 + $0x139] sm:$0xff]
      %v3495 = vld [vmem:[#allocation2 + $0x141] sm:$0xff]
      %v3496 = vld [vmem:[#allocation2 + $0x151] sm:$0xff]
      %v3497 = vld [vmem:[#allocation2 + $0x159] sm:$0xff]
      %v3498 = vld [vmem:[#allocation2 + $0x169] sm:$0xff]
      %v3499 = vld [vmem:[#allocation2 + $0x171] sm:$0xff]
      %v3500 = vld [vmem:[#allocation2 + $0x2] sm:$0xff]
      %v3501 = vld [vmem:[#allocation2 + $0xa] sm:$0xff]
      %v3502 = vld [vmem:[#allocation2 + $0x1a] sm:$0xff]
      %v3503 = vld [vmem:[#allocation2 + $0x22] sm:$0xff]
      %v3504 = vld [vmem:[#allocation2 + $0x32] sm:$0xff]
      %v3505 = vld [vmem:[#allocation2 + $0x3a] sm:$0xff]
      %v3506 = vld [vmem:[#allocation2 + $0x4a] sm:$0xff]
      %v3507 = vld [vmem:[#allocation2 + $0x52] sm:$0xff]
      %v3508 = vld [vmem:[#allocation2 + $0x62] sm:$0xff]
      %v3509 = vld [vmem:[#allocation2 + $0x6a] sm:$0xff]
      %v3510 = vld [vmem:[#allocation2 + $0x7a] sm:$0xff]
      %v3511 = vld [vmem:[#allocation2 + $0x82] sm:$0xff]
      %v3512 = vld [vmem:[#allocation2 + $0x92] sm:$0xff]
      %v3513 = vld [vmem:[#allocation2 + $0x9a] sm:$0xff]
      %v3514 = vld [vmem:[#allocation2 + $0xaa] sm:$0xff]
      %v3515 = vld [vmem:[#allocation2 + $0xb2] sm:$0xff]
      %v3516 = vld [vmem:[#allocation2 + $0xc2] sm:$0xff]
      %v3517 = vld [vmem:[#allocation2 + $0xca] sm:$0xff]
      %v3518 = vld [vmem:[#allocation2 + $0xda] sm:$0xff]
      %v3519 = vld [vmem:[#allocation2 + $0xe2] sm:$0xff]
      %v3520 = vld [vmem:[#allocation2 + $0xf2] sm:$0xff]
      %v3521 = vld [vmem:[#allocation2 + $0xfa] sm:$0xff]
      %v3522 = vld [vmem:[#allocation2 + $0x10a] sm:$0xff]
      %v3523 = vld [vmem:[#allocation2 + $0x112] sm:$0xff]
      %v3524 = vld [vmem:[#allocation2 + $0x122] sm:$0xff]
      %v3525 = vld [vmem:[#allocation2 + $0x12a] sm:$0xff]
      %v3526 = vld [vmem:[#allocation2 + $0x13a] sm:$0xff]
      %v3527 = vld [vmem:[#allocation2 + $0x142] sm:$0xff]
      %v3528 = vld [vmem:[#allocation2 + $0x152] sm:$0xff]
      %v3529 = vld [vmem:[#allocation2 + $0x15a] sm:$0xff]
      %v3530 = vld [vmem:[#allocation2 + $0x16a] sm:$0xff]
      %v3531 = vld [vmem:[#allocation2 + $0x172] sm:$0xff]
      %v3532 = vld [vmem:[%s3403] sm:$0xff]
      %v3533 = vld [vmem:[%s3403 + $0x8] sm:$0xff]
      %v3534 = vld [vmem:[%s3403 + $0x18] sm:$0xff]
      %v3535 = vld [vmem:[%s3403 + $0x20] sm:$0xff]
      %v3536 = vld [vmem:[%s3403 + $0x30] sm:$0xff]
      %v3537 = vld [vmem:[%s3403 + $0x38] sm:$0xff]
      %v3538 = vld [vmem:[%s3403 + $0x48] sm:$0xff]
      %v3539 = vld [vmem:[%s3403 + $0x50] sm:$0xff]
      %v3540 = vld [vmem:[%s3403 + $0x60] sm:$0xff]
      %v3541 = vld [vmem:[%s3403 + $0x68] sm:$0xff]
      %v3542 = vld [vmem:[%s3403 + $0x78] sm:$0xff]
      %v3543 = vld [vmem:[%s3403 + $0x80] sm:$0xff]
      %v3544 = vld [vmem:[%s3403 + $0x90] sm:$0xff]
      %v3545 = vld [vmem:[%s3403 + $0x98] sm:$0xff]
      %v3546 = vld [vmem:[%s3403 + $0xa8] sm:$0xff]
      %v3547 = vld [vmem:[%s3403 + $0xb0] sm:$0xff]
      %v3548 = vld [vmem:[%s3403 + $0xc0] sm:$0xff]
      %v3549 = vld [vmem:[%s3403 + $0xc8] sm:$0xff]
      %v3550 = vld [vmem:[%s3403 + $0xd8] sm:$0xff]
      %v3551 = vld [vmem:[%s3403 + $0xe0] sm:$0xff]
      %v3552 = vld [vmem:[%s3403 + $0xf0] sm:$0xff]
      %v3553 = vld [vmem:[%s3403 + $0xf8] sm:$0xff]
      %v3554 = vld [vmem:[%s3403 + $0x108] sm:$0xff]
      %v3555 = vld [vmem:[%s3403 + $0x110] sm:$0xff]
      %v3556 = vld [vmem:[%s3403 + $0x120] sm:$0xff]
      %v3557 = vld [vmem:[%s3403 + $0x128] sm:$0xff]
      %v3558 = vld [vmem:[%s3403 + $0x138] sm:$0xff]
      %v3559 = vld [vmem:[%s3403 + $0x140] sm:$0xff]
      %v3560 = vld [vmem:[%s3403 + $0x150] sm:$0xff]
      %v3561 = vld [vmem:[%s3403 + $0x158] sm:$0xff]
      %v3562 = vld [vmem:[%s3403 + $0x168] sm:$0xff]
      %v3563 = vld [vmem:[%s3403 + $0x170] sm:$0xff]
      %v3564 = vld [vmem:[%s3403 + $0x1] sm:$0xff]
      %v3565 = vld [vmem:[%s3403 + $0x9] sm:$0xff]
      %v3566 = vld [vmem:[%s3403 + $0x19] sm:$0xff]
      %v3567 = vld [vmem:[%s3403 + $0x21] sm:$0xff]
      %v3568 = vld [vmem:[%s3403 + $0x31] sm:$0xff]
      %v3569 = vld [vmem:[%s3403 + $0x39] sm:$0xff]
      %v3570 = vld [vmem:[%s3403 + $0x49] sm:$0xff]
      %v3571 = vld [vmem:[%s3403 + $0x51] sm:$0xff]
      %v3572 = vld [vmem:[%s3403 + $0x61] sm:$0xff]
      %v3573 = vld [vmem:[%s3403 + $0x69] sm:$0xff]
      %v3574 = vld [vmem:[%s3403 + $0x79] sm:$0xff]
      %v3575 = vld [vmem:[%s3403 + $0x81] sm:$0xff]
      %v3576 = vld [vmem:[%s3403 + $0x91] sm:$0xff]
      %v3577 = vld [vmem:[%s3403 + $0x99] sm:$0xff]
      %v3578 = vld [vmem:[%s3403 + $0xa9] sm:$0xff]
      %v3579 = vld [vmem:[%s3403 + $0xb1] sm:$0xff]
      %v3580 = vld [vmem:[%s3403 + $0xc1] sm:$0xff]
      %v3581 = vld [vmem:[%s3403 + $0xc9] sm:$0xff]
      %v3582 = vld [vmem:[%s3403 + $0xd9] sm:$0xff]
      %v3583 = vld [vmem:[%s3403 + $0xe1] sm:$0xff]
      %v3584 = vld [vmem:[%s3403 + $0xf1] sm:$0xff]
      %v3585 = vld [vmem:[%s3403 + $0xf9] sm:$0xff]
      %v3586 = vld [vmem:[%s3403 + $0x109] sm:$0xff]
      %v3587 = vld [vmem:[%s3403 + $0x111] sm:$0xff]
      %v3588 = vld [vmem:[%s3403 + $0x121] sm:$0xff]
      %v3589 = vld [vmem:[%s3403 + $0x129] sm:$0xff]
      %v3590 = vld [vmem:[%s3403 + $0x139] sm:$0xff]
      %v3591 = vld [vmem:[%s3403 + $0x141] sm:$0xff]
      %v3592 = vld [vmem:[%s3403 + $0x151] sm:$0xff]
      %v3593 = vld [vmem:[%s3403 + $0x159] sm:$0xff]
      %v3594 = vld [vmem:[%s3403 + $0x169] sm:$0xff]
      %v3595 = vld [vmem:[%s3403 + $0x171] sm:$0xff]
      %v3596 = vld [vmem:[%s3403 + $0x2] sm:$0xff]
      %v3597 = vld [vmem:[%s3403 + $0xa] sm:$0xff]
      %v3598 = vld [vmem:[%s3403 + $0x1a] sm:$0xff]
      %v3599 = vld [vmem:[%s3403 + $0x22] sm:$0xff]
      %v3600 = vld [vmem:[%s3403 + $0x32] sm:$0xff]
      %v3601 = vld [vmem:[%s3403 + $0x3a] sm:$0xff]
      %v3602 = vld [vmem:[%s3403 + $0x4a] sm:$0xff]
      %v3603 = vld [vmem:[%s3403 + $0x52] sm:$0xff]
      %v3604 = vld [vmem:[%s3403 + $0x62] sm:$0xff]
      %v3605 = vld [vmem:[%s3403 + $0x6a] sm:$0xff]
      %v3606 = vld [vmem:[%s3403 + $0x7a] sm:$0xff]
      %v3607 = vld [vmem:[%s3403 + $0x82] sm:$0xff]
      %v3608 = vld [vmem:[%s3403 + $0x92] sm:$0xff]
      %v3609 = vld [vmem:[%s3403 + $0x9a] sm:$0xff]
      %v3610 = vld [vmem:[%s3403 + $0xaa] sm:$0xff]
      %v3611 = vld [vmem:[%s3403 + $0xb2] sm:$0xff]
      %v3612 = vld [vmem:[%s3403 + $0xc2] sm:$0xff]
      %v3613 = vld [vmem:[%s3403 + $0xca] sm:$0xff]
      %v3614 = vld [vmem:[%s3403 + $0xda] sm:$0xff]
      %v3615 = vld [vmem:[%s3403 + $0xe2] sm:$0xff]
      %v3616 = vld [vmem:[%s3403 + $0xf2] sm:$0xff]
      %v3617 = vld [vmem:[%s3403 + $0xfa] sm:$0xff]
      %v3618 = vld [vmem:[%s3403 + $0x10a] sm:$0xff]
      %v3619 = vld [vmem:[%s3403 + $0x112] sm:$0xff]
      %v3620 = vld [vmem:[%s3403 + $0x122] sm:$0xff]
      %v3621 = vld [vmem:[%s3403 + $0x12a] sm:$0xff]
      %v3622 = vld [vmem:[%s3403 + $0x13a] sm:$0xff]
      %v3623 = vld [vmem:[%s3403 + $0x142] sm:$0xff]
      %v3624 = vld [vmem:[%s3403 + $0x152] sm:$0xff]
      %v3625 = vld [vmem:[%s3403 + $0x15a] sm:$0xff]
      %v3626 = vld [vmem:[%s3403 + $0x16a] sm:$0xff]
      %v3627 = vld [vmem:[%s3403 + $0x172] sm:$0xff]
      %s3628 = scalar_lea.vmem [#allocation2], 48
      %v3629 = vld [vmem:[%s3628] sm:$0xff]
      %v3630 = vld [vmem:[%s3628 + $0x8] sm:$0xff]
      %v3631 = vld [vmem:[%s3628 + $0x18] sm:$0xff]
      %v3632 = vld [vmem:[%s3628 + $0x20] sm:$0xff]
      %v3633 = vld [vmem:[%s3628 + $0x30] sm:$0xff]
      %v3634 = vld [vmem:[%s3628 + $0x38] sm:$0xff]
      %v3635 = vld [vmem:[%s3628 + $0x48] sm:$0xff]
      %v3636 = vld [vmem:[%s3628 + $0x50] sm:$0xff]
      %v3637 = vld [vmem:[%s3628 + $0x60] sm:$0xff]
      %v3638 = vld [vmem:[%s3628 + $0x68] sm:$0xff]
      %v3639 = vld [vmem:[%s3628 + $0x78] sm:$0xff]
      %v3640 = vld [vmem:[%s3628 + $0x80] sm:$0xff]
      %v3641 = vld [vmem:[%s3628 + $0x90] sm:$0xff]
      %v3642 = vld [vmem:[%s3628 + $0x98] sm:$0xff]
      %v3643 = vld [vmem:[%s3628 + $0xa8] sm:$0xff]
      %v3644 = vld [vmem:[%s3628 + $0xb0] sm:$0xff]
      %v3645 = vld [vmem:[%s3628 + $0xc0] sm:$0xff]
      %v3646 = vld [vmem:[%s3628 + $0xc8] sm:$0xff]
      %v3647 = vld [vmem:[%s3628 + $0xd8] sm:$0xff]
      %v3648 = vld [vmem:[%s3628 + $0xe0] sm:$0xff]
      %v3649 = vld [vmem:[%s3628 + $0xf0] sm:$0xff]
      %v3650 = vld [vmem:[%s3628 + $0xf8] sm:$0xff]
      %v3651 = vld [vmem:[%s3628 + $0x108] sm:$0xff]
      %v3652 = vld [vmem:[%s3628 + $0x110] sm:$0xff]
      %v3653 = vld [vmem:[%s3628 + $0x120] sm:$0xff]
      %v3654 = vld [vmem:[%s3628 + $0x128] sm:$0xff]
      %v3655 = vld [vmem:[%s3628 + $0x138] sm:$0xff]
      %v3656 = vld [vmem:[%s3628 + $0x140] sm:$0xff]
      %v3657 = vld [vmem:[%s3628 + $0x150] sm:$0xff]
      %v3658 = vld [vmem:[%s3628 + $0x158] sm:$0xff]
      %v3659 = vld [vmem:[%s3628 + $0x168] sm:$0xff]
      %v3660 = vld [vmem:[%s3628 + $0x170] sm:$0xff]
      %v3661 = vld [vmem:[%s3628 + $0x1] sm:$0xff]
      %v3662 = vld [vmem:[%s3628 + $0x9] sm:$0xff]
      %v3663 = vld [vmem:[%s3628 + $0x19] sm:$0xff]
      %v3664 = vld [vmem:[%s3628 + $0x21] sm:$0xff]
      %v3665 = vld [vmem:[%s3628 + $0x31] sm:$0xff]
      %v3666 = vld [vmem:[%s3628 + $0x39] sm:$0xff]
      %v3667 = vld [vmem:[%s3628 + $0x49] sm:$0xff]
      %v3668 = vld [vmem:[%s3628 + $0x51] sm:$0xff]
      %v3669 = vld [vmem:[%s3628 + $0x61] sm:$0xff]
      %v3670 = vld [vmem:[%s3628 + $0x69] sm:$0xff]
      %v3671 = vld [vmem:[%s3628 + $0x79] sm:$0xff]
      %v3672 = vld [vmem:[%s3628 + $0x81] sm:$0xff]
      %v3673 = vld [vmem:[%s3628 + $0x91] sm:$0xff]
      %v3674 = vld [vmem:[%s3628 + $0x99] sm:$0xff]
      %v3675 = vld [vmem:[%s3628 + $0xa9] sm:$0xff]
      %v3676 = vld [vmem:[%s3628 + $0xb1] sm:$0xff]
      %v3677 = vld [vmem:[%s3628 + $0xc1] sm:$0xff]
      %v3678 = vld [vmem:[%s3628 + $0xc9] sm:$0xff]
      %v3679 = vld [vmem:[%s3628 + $0xd9] sm:$0xff]
      %v3680 = vld [vmem:[%s3628 + $0xe1] sm:$0xff]
      %v3681 = vld [vmem:[%s3628 + $0xf1] sm:$0xff]
      %v3682 = vld [vmem:[%s3628 + $0xf9] sm:$0xff]
      %v3683 = vld [vmem:[%s3628 + $0x109] sm:$0xff]
      %v3684 = vld [vmem:[%s3628 + $0x111] sm:$0xff]
      %v3685 = vld [vmem:[%s3628 + $0x121] sm:$0xff]
      %v3686 = vld [vmem:[%s3628 + $0x129] sm:$0xff]
      %v3687 = vld [vmem:[%s3628 + $0x139] sm:$0xff]
      %v3688 = vld [vmem:[%s3628 + $0x141] sm:$0xff]
      %v3689 = vld [vmem:[%s3628 + $0x151] sm:$0xff]
      %v3690 = vld [vmem:[%s3628 + $0x159] sm:$0xff]
      %v3691 = vld [vmem:[%s3628 + $0x169] sm:$0xff]
      %v3692 = vld [vmem:[%s3628 + $0x171] sm:$0xff]
      %v3693 = vld [vmem:[%s3628 + $0x2] sm:$0xff]
      %v3694 = vld [vmem:[%s3628 + $0xa] sm:$0xff]
      %v3695 = vld [vmem:[%s3628 + $0x1a] sm:$0xff]
      %v3696 = vld [vmem:[%s3628 + $0x22] sm:$0xff]
      %v3697 = vld [vmem:[%s3628 + $0x32] sm:$0xff]
      %v3698 = vld [vmem:[%s3628 + $0x3a] sm:$0xff]
      %v3699 = vld [vmem:[%s3628 + $0x4a] sm:$0xff]
      %v3700 = vld [vmem:[%s3628 + $0x52] sm:$0xff]
      %v3701 = vld [vmem:[%s3628 + $0x62] sm:$0xff]
      %v3702 = vld [vmem:[%s3628 + $0x6a] sm:$0xff]
      %v3703 = vld [vmem:[%s3628 + $0x7a] sm:$0xff]
      %v3704 = vld [vmem:[%s3628 + $0x82] sm:$0xff]
      %v3705 = vld [vmem:[%s3628 + $0x92] sm:$0xff]
      %v3706 = vld [vmem:[%s3628 + $0x9a] sm:$0xff]
      %v3707 = vld [vmem:[%s3628 + $0xaa] sm:$0xff]
      %v3708 = vld [vmem:[%s3628 + $0xb2] sm:$0xff]
      %v3709 = vld [vmem:[%s3628 + $0xc2] sm:$0xff]
      %v3710 = vld [vmem:[%s3628 + $0xca] sm:$0xff]
      %v3711 = vld [vmem:[%s3628 + $0xda] sm:$0xff]
      %v3712 = vld [vmem:[%s3628 + $0xe2] sm:$0xff]
      %v3713 = vld [vmem:[%s3628 + $0xf2] sm:$0xff]
      %v3714 = vld [vmem:[%s3628 + $0xfa] sm:$0xff]
      %v3715 = vld [vmem:[%s3628 + $0x10a] sm:$0xff]
      %v3716 = vld [vmem:[%s3628 + $0x112] sm:$0xff]
      %v3717 = vld [vmem:[%s3628 + $0x122] sm:$0xff]
      %v3718 = vld [vmem:[%s3628 + $0x12a] sm:$0xff]
      %v3719 = vld [vmem:[%s3628 + $0x13a] sm:$0xff]
      %v3720 = vld [vmem:[%s3628 + $0x142] sm:$0xff]
      %v3721 = vld [vmem:[%s3628 + $0x152] sm:$0xff]
      %v3722 = vld [vmem:[%s3628 + $0x15a] sm:$0xff]
      %v3723 = vld [vmem:[%s3628 + $0x16a] sm:$0xff]
      %v3724 = vld [vmem:[%s3628 + $0x172] sm:$0xff]
      %v3725 = vpack.c.bf16 %v3437, %v3436
      %v3726 = vpack.c.bf16 %v3469, %v3468
      %v3727 = vpack.c.bf16 %v3501, %v3500
      %v3728 = vpack.c.bf16 %v3533, %v3532
      %v3729 = vpack.c.bf16 %v3565, %v3564
      %v3730 = vpack.c.bf16 %v3597, %v3596
      %v3731 = vpack.c.bf16 %v3630, %v3629
      %v3732 = vpack.c.bf16 %v3662, %v3661
      %v3733 = vpack.c.bf16 %v3694, %v3693
      %v3734 = vpack.c.bf16 %v3439, %v3438
      %v3735 = vpack.c.bf16 %v3471, %v3470
      %v3736 = vpack.c.bf16 %v3503, %v3502
      %v3737 = vpack.c.bf16 %v3535, %v3534
      %v3738 = vpack.c.bf16 %v3567, %v3566
      %v3739 = vpack.c.bf16 %v3599, %v3598
      %v3740 = vpack.c.bf16 %v3632, %v3631
      %v3741 = vpack.c.bf16 %v3664, %v3663
      %v3742 = vpack.c.bf16 %v3696, %v3695
      %v3743 = vpack.c.bf16 %v3441, %v3440
      %v3744 = vpack.c.bf16 %v3473, %v3472
      %v3745 = vpack.c.bf16 %v3505, %v3504
      %v3746 = vpack.c.bf16 %v3537, %v3536
      %v3747 = vpack.c.bf16 %v3569, %v3568
      %v3748 = vpack.c.bf16 %v3601, %v3600
      %v3749 = vpack.c.bf16 %v3634, %v3633
      %v3750 = vpack.c.bf16 %v3666, %v3665
      %v3751 = vpack.c.bf16 %v3698, %v3697
      %v3752 = vpack.c.bf16 %v3443, %v3442
      %v3753 = vpack.c.bf16 %v3475, %v3474
      %v3754 = vpack.c.bf16 %v3507, %v3506
      %v3755 = vpack.c.bf16 %v3539, %v3538
      %v3756 = vpack.c.bf16 %v3571, %v3570
      %v3757 = vpack.c.bf16 %v3603, %v3602
      %v3758 = vpack.c.bf16 %v3636, %v3635
      %v3759 = vpack.c.bf16 %v3668, %v3667
      %v3760 = vpack.c.bf16 %v3700, %v3699
      %v3761 = vpack.c.bf16 %v3445, %v3444
      %v3762 = vpack.c.bf16 %v3477, %v3476
      %v3763 = vpack.c.bf16 %v3509, %v3508
      %v3764 = vpack.c.bf16 %v3541, %v3540
      %v3765 = vpack.c.bf16 %v3573, %v3572
      %v3766 = vpack.c.bf16 %v3605, %v3604
      %v3767 = vpack.c.bf16 %v3638, %v3637
      %v3768 = vpack.c.bf16 %v3670, %v3669
      %v3769 = vpack.c.bf16 %v3702, %v3701
      %v3770 = vpack.c.bf16 %v3447, %v3446
      %v3771 = vpack.c.bf16 %v3479, %v3478
      %v3772 = vpack.c.bf16 %v3511, %v3510
      %v3773 = vpack.c.bf16 %v3543, %v3542
      %v3774 = vpack.c.bf16 %v3575, %v3574
      %v3775 = vpack.c.bf16 %v3607, %v3606
      %v3776 = vpack.c.bf16 %v3640, %v3639
      %v3777 = vpack.c.bf16 %v3672, %v3671
      %v3778 = vpack.c.bf16 %v3704, %v3703
      %v3779 = vpack.c.bf16 %v3449, %v3448
      %v3780 = vpack.c.bf16 %v3481, %v3480
      %v3781 = vpack.c.bf16 %v3513, %v3512
      %v3782 = vpack.c.bf16 %v3545, %v3544
      %v3783 = vpack.c.bf16 %v3577, %v3576
      %v3784 = vpack.c.bf16 %v3609, %v3608
      %v3785 = vpack.c.bf16 %v3642, %v3641
      %v3786 = vpack.c.bf16 %v3674, %v3673
      %v3787 = vpack.c.bf16 %v3706, %v3705
      %v3788 = vpack.c.bf16 %v3451, %v3450
      %v3789 = vpack.c.bf16 %v3483, %v3482
      %v3790 = vpack.c.bf16 %v3515, %v3514
      %v3791 = vpack.c.bf16 %v3547, %v3546
      %v3792 = vpack.c.bf16 %v3579, %v3578
      %v3793 = vpack.c.bf16 %v3611, %v3610
      %v3794 = vpack.c.bf16 %v3644, %v3643
      %v3795 = vpack.c.bf16 %v3676, %v3675
      %v3796 = vpack.c.bf16 %v3708, %v3707
      %v3797 = vpack.c.bf16 %v3453, %v3452
      %v3798 = vpack.c.bf16 %v3485, %v3484
      %v3799 = vpack.c.bf16 %v3517, %v3516
      %v3800 = vpack.c.bf16 %v3549, %v3548
      %v3801 = vpack.c.bf16 %v3581, %v3580
      %v3802 = vpack.c.bf16 %v3613, %v3612
      %v3803 = vpack.c.bf16 %v3646, %v3645
      %v3804 = vpack.c.bf16 %v3678, %v3677
      %v3805 = vpack.c.bf16 %v3710, %v3709
      %v3806 = vpack.c.bf16 %v3455, %v3454
      %v3807 = vpack.c.bf16 %v3487, %v3486
      %v3808 = vpack.c.bf16 %v3519, %v3518
      %v3809 = vpack.c.bf16 %v3551, %v3550
      %v3810 = vpack.c.bf16 %v3583, %v3582
      %v3811 = vpack.c.bf16 %v3615, %v3614
      %v3812 = vpack.c.bf16 %v3648, %v3647
      %v3813 = vpack.c.bf16 %v3680, %v3679
      %v3814 = vpack.c.bf16 %v3712, %v3711
      %v3815 = vpack.c.bf16 %v3457, %v3456
      %v3816 = vpack.c.bf16 %v3489, %v3488
      %v3817 = vpack.c.bf16 %v3521, %v3520
      %v3818 = vpack.c.bf16 %v3553, %v3552
      %v3819 = vpack.c.bf16 %v3585, %v3584
      %v3820 = vpack.c.bf16 %v3617, %v3616
      %v3821 = vpack.c.bf16 %v3650, %v3649
      %v3822 = vpack.c.bf16 %v3682, %v3681
      %v3823 = vpack.c.bf16 %v3714, %v3713
      %v3824 = vpack.c.bf16 %v3459, %v3458
      %v3825 = vpack.c.bf16 %v3491, %v3490
      %v3826 = vpack.c.bf16 %v3523, %v3522
      %v3827 = vpack.c.bf16 %v3555, %v3554
      %v3828 = vpack.c.bf16 %v3587, %v3586
      %v3829 = vpack.c.bf16 %v3619, %v3618
      %v3830 = vpack.c.bf16 %v3652, %v3651
      %v3831 = vpack.c.bf16 %v3684, %v3683
      %v3832 = vpack.c.bf16 %v3716, %v3715
      %v3833 = vpack.c.bf16 %v3461, %v3460
      %v3834 = vpack.c.bf16 %v3493, %v3492
      %v3835 = vpack.c.bf16 %v3525, %v3524
      %v3836 = vpack.c.bf16 %v3557, %v3556
      %v3837 = vpack.c.bf16 %v3589, %v3588
      %v3838 = vpack.c.bf16 %v3621, %v3620
      %v3839 = vpack.c.bf16 %v3654, %v3653
      %v3840 = vpack.c.bf16 %v3686, %v3685
      %v3841 = vpack.c.bf16 %v3718, %v3717
      %v3842 = vpack.c.bf16 %v3463, %v3462
      %v3843 = vpack.c.bf16 %v3495, %v3494
      %v3844 = vpack.c.bf16 %v3527, %v3526
      %v3845 = vpack.c.bf16 %v3559, %v3558
      %v3846 = vpack.c.bf16 %v3591, %v3590
      %v3847 = vpack.c.bf16 %v3623, %v3622
      %v3848 = vpack.c.bf16 %v3656, %v3655
      %v3849 = vpack.c.bf16 %v3688, %v3687
      %v3850 = vpack.c.bf16 %v3720, %v3719
      %v3851 = vpack.c.bf16 %v3465, %v3464
      %v3852 = vpack.c.bf16 %v3497, %v3496
      %v3853 = vpack.c.bf16 %v3529, %v3528
      %v3854 = vpack.c.bf16 %v3561, %v3560
      %v3855 = vpack.c.bf16 %v3593, %v3592
      %v3856 = vpack.c.bf16 %v3625, %v3624
      %v3857 = vpack.c.bf16 %v3658, %v3657
      %v3858 = vpack.c.bf16 %v3690, %v3689
      %v3859 = vpack.c.bf16 %v3722, %v3721
      %v3860 = vpack.c.bf16 %v3467, %v3466
      %v3861 = vpack.c.bf16 %v3499, %v3498
      %v3862 = vpack.c.bf16 %v3531, %v3530
      %v3863 = vpack.c.bf16 %v3563, %v3562
      %v3864 = vpack.c.bf16 %v3595, %v3594
      %v3865 = vpack.c.bf16 %v3627, %v3626
      %v3866 = vpack.c.bf16 %v3660, %v3659
      %v3867 = vpack.c.bf16 %v3692, %v3691
      %v3868 = vpack.c.bf16 %v3724, %v3723
      %v3869 = vld [vmem:[%s6] sm:$0xf]
      %v3870 = vld [vmem:[%s6 + $0x4] sm:$0xf]
      %v3871 = vld [vmem:[%s6 + $0x8] sm:$0xf]
      %v3872 = vld [vmem:[%s6 + $0xc] sm:$0xf]
      %v3873 = vld [vmem:[%s6 + $0x10] sm:$0xf]
      %v3874 = vld [vmem:[%s6 + $0x14] sm:$0xf]
      %v3875 = vld [vmem:[%s6 + $0x18] sm:$0xf]
      %v3876 = vld [vmem:[%s6 + $0x1c] sm:$0xf]
      %v3877 = vld [vmem:[%s6 + $0x20] sm:$0xf]
      %v3878 = vld [vmem:[%s6 + $0x24] sm:$0xf]
      %v3879 = vld [vmem:[%s6 + $0x28] sm:$0xf]
      %v3880 = vld [vmem:[%s6 + $0x2c] sm:$0xf]
      %v3881 = vld [vmem:[%s6 + $0x30] sm:$0xf]
      %v3882 = vld [vmem:[%s6 + $0x34] sm:$0xf]
      %v3883 = vld [vmem:[%s6 + $0x38] sm:$0xf]
      %v3884 = vld [vmem:[%s6 + $0x3c] sm:$0xf]
      %v3885 = vld [vmem:[%s6 + $0x40] sm:$0xf]
      %v3886 = vld [vmem:[%s6 + $0x44] sm:$0xf]
      %v3887 = vld [vmem:[%s6 + $0x48] sm:$0xf]
      %v3888 = vld [vmem:[%s6 + $0x4c] sm:$0xf]
      %v3889 = vld [vmem:[%s6 + $0x50] sm:$0xf]
      %v3890 = vld [vmem:[%s6 + $0x54] sm:$0xf]
      %v3891 = vld [vmem:[%s6 + $0x58] sm:$0xf]
      %v3892 = vld [vmem:[%s6 + $0x5c] sm:$0xf]
      %v3893 = vld [vmem:[%s6 + $0x60] sm:$0xf]
      %v3894 = vld [vmem:[%s6 + $0x64] sm:$0xf]
      %v3895 = vld [vmem:[%s6 + $0x68] sm:$0xf]
      %v3896 = vld [vmem:[%s6 + $0x6c] sm:$0xf]
      %v3897 = vld [vmem:[%s6 + $0x70] sm:$0xf]
      %v3898 = vld [vmem:[%s6 + $0x74] sm:$0xf]
      %v3899 = vld [vmem:[%s6 + $0x78] sm:$0xf]
      %v3900 = vld [vmem:[%s6 + $0x7c] sm:$0xf]
      %v3901 = vld [vmem:[%s6 + $0x80] sm:$0xf]
      %v3902 = vld [vmem:[%s6 + $0x84] sm:$0xf]
      %v3903 = vld [vmem:[%s6 + $0x88] sm:$0xf]
      %v3904 = vld [vmem:[%s6 + $0x8c] sm:$0xf]
      %v3905 = vld [vmem:[%s6 + $0x90] sm:$0xf]
      %v3906 = vld [vmem:[%s6 + $0x94] sm:$0xf]
      %v3907 = vld [vmem:[%s6 + $0x98] sm:$0xf]
      %v3908 = vld [vmem:[%s6 + $0x9c] sm:$0xf]
      %v3909 = vld [vmem:[%s6 + $0xa0] sm:$0xf]
      %v3910 = vld [vmem:[%s6 + $0xa4] sm:$0xf]
      %v3911 = vld [vmem:[%s6 + $0xa8] sm:$0xf]
      %v3912 = vld [vmem:[%s6 + $0xac] sm:$0xf]
      %v3913 = vld [vmem:[%s6 + $0xb0] sm:$0xf]
      %v3914 = vld [vmem:[%s6 + $0xb4] sm:$0xf]
      %v3915 = vld [vmem:[%s6 + $0xb8] sm:$0xf]
      %v3916 = vld [vmem:[%s6 + $0xbc] sm:$0xf]
      %v3917 = vld [vmem:[%s6 + $0xc0] sm:$0xf]
      %v3918 = vld [vmem:[%s6 + $0xc4] sm:$0xf]
      %v3919 = vld [vmem:[%s6 + $0xc8] sm:$0xf]
      %v3920 = vld [vmem:[%s6 + $0xcc] sm:$0xf]
      %v3921 = vld [vmem:[%s6 + $0xd0] sm:$0xf]
      %v3922 = vld [vmem:[%s6 + $0xd4] sm:$0xf]
      %v3923 = vld [vmem:[%s6 + $0xd8] sm:$0xf]
      %v3924 = vld [vmem:[%s6 + $0xdc] sm:$0xf]
      %v3925 = vld [vmem:[%s6 + $0xe0] sm:$0xf]
      %v3926 = vld [vmem:[%s6 + $0xe4] sm:$0xf]
      %v3927 = vld [vmem:[%s6 + $0xe8] sm:$0xf]
      %v3928 = vld [vmem:[%s6 + $0xec] sm:$0xf]
      %v3929 = vld [vmem:[%s6 + $0xf0] sm:$0xf]
      %v3930 = vld [vmem:[%s6 + $0xf4] sm:$0xf]
      %v3931 = vld [vmem:[%s6 + $0xf8] sm:$0xf]
      %v3932 = vld [vmem:[%s6 + $0xfc] sm:$0xf]
      %v3933 = vld [vmem:[%s6 + $0x100] sm:$0xf]
      %v3934 = vld [vmem:[%s6 + $0x104] sm:$0xf]
      %v3935 = vld [vmem:[%s6 + $0x108] sm:$0xf]
      %v3936 = vld [vmem:[%s6 + $0x10c] sm:$0xf]
      %v3937 = vld [vmem:[%s6 + $0x110] sm:$0xf]
      %v3938 = vld [vmem:[%s6 + $0x114] sm:$0xf]
      %v3939 = vld [vmem:[%s6 + $0x118] sm:$0xf]
      %v3940 = vld [vmem:[%s6 + $0x11c] sm:$0xf]
      %v3941 = vld [vmem:[%s6 + $0x120] sm:$0xf]
      %v3942 = vld [vmem:[%s6 + $0x124] sm:$0xf]
      %v3943 = vld [vmem:[%s6 + $0x128] sm:$0xf]
      %v3944 = vld [vmem:[%s6 + $0x12c] sm:$0xf]
      %v3945 = vld [vmem:[%s6 + $0x130] sm:$0xf]
      %v3946 = vld [vmem:[%s6 + $0x134] sm:$0xf]
      %v3947 = vld [vmem:[%s6 + $0x138] sm:$0xf]
      %v3948 = vld [vmem:[%s6 + $0x13c] sm:$0xf]
      %v3949 = vld [vmem:[%s6 + $0x140] sm:$0xf]
      %v3950 = vld [vmem:[%s6 + $0x144] sm:$0xf]
      %v3951 = vld [vmem:[%s6 + $0x148] sm:$0xf]
      %v3952 = vld [vmem:[%s6 + $0x14c] sm:$0xf]
      %v3953 = vld [vmem:[%s6 + $0x150] sm:$0xf]
      %v3954 = vld [vmem:[%s6 + $0x154] sm:$0xf]
      %v3955 = vld [vmem:[%s6 + $0x158] sm:$0xf]
      %v3956 = vld [vmem:[%s6 + $0x15c] sm:$0xf]
      %v3957 = vld [vmem:[%s6 + $0x160] sm:$0xf]
      %v3958 = vld [vmem:[%s6 + $0x164] sm:$0xf]
      %v3959 = vld [vmem:[%s6 + $0x168] sm:$0xf]
      %v3960 = vld [vmem:[%s6 + $0x16c] sm:$0xf]
      %v3961 = vld [vmem:[%s6 + $0x170] sm:$0xf]
      %v3962 = vld [vmem:[%s6 + $0x174] sm:$0xf]
      %v3963 = vld [vmem:[%s6 + $0x178] sm:$0xf]
      %v3964 = vld [vmem:[%s6 + $0x17c] sm:$0xf]
      %v3965 = vld [vmem:[%s6 + $0x180] sm:$0xf]
      %v3966 = vld [vmem:[%s6 + $0x184] sm:$0xf]
      %v3967 = vld [vmem:[%s6 + $0x188] sm:$0xf]
      %v3968 = vld [vmem:[%s6 + $0x18c] sm:$0xf]
      %v3969 = vld [vmem:[%s6 + $0x190] sm:$0xf]
      %v3970 = vld [vmem:[%s6 + $0x194] sm:$0xf]
      %v3971 = vld [vmem:[%s6 + $0x198] sm:$0xf]
      %v3972 = vld [vmem:[%s6 + $0x19c] sm:$0xf]
      %v3973 = vld [vmem:[%s6 + $0x1a0] sm:$0xf]
      %v3974 = vld [vmem:[%s6 + $0x1a4] sm:$0xf]
      %v3975 = vld [vmem:[%s6 + $0x1a8] sm:$0xf]
      %v3976 = vld [vmem:[%s6 + $0x1ac] sm:$0xf]
      %v3977 = vld [vmem:[%s6 + $0x1b0] sm:$0xf]
      %v3978 = vld [vmem:[%s6 + $0x1b4] sm:$0xf]
      %v3979 = vld [vmem:[%s6 + $0x1b8] sm:$0xf]
      %v3980 = vld [vmem:[%s6 + $0x1bc] sm:$0xf]
      %v3981 = vld [vmem:[%s6 + $0x1c0] sm:$0xf]
      %v3982 = vld [vmem:[%s6 + $0x1c4] sm:$0xf]
      %v3983 = vld [vmem:[%s6 + $0x1c8] sm:$0xf]
      %v3984 = vld [vmem:[%s6 + $0x1cc] sm:$0xf]
      %v3985 = vld [vmem:[%s6 + $0x1d0] sm:$0xf]
      %v3986 = vld [vmem:[%s6 + $0x1d4] sm:$0xf]
      %v3987 = vld [vmem:[%s6 + $0x1d8] sm:$0xf]
      %v3988 = vld [vmem:[%s6 + $0x1dc] sm:$0xf]
      %v3989 = vld [vmem:[%s6 + $0x1e0] sm:$0xf]
      %v3990 = vld [vmem:[%s6 + $0x1e4] sm:$0xf]
      %v3991 = vld [vmem:[%s6 + $0x1e8] sm:$0xf]
      %v3992 = vld [vmem:[%s6 + $0x1ec] sm:$0xf]
      %v3993 = vld [vmem:[%s6 + $0x1f0] sm:$0xf]
      %v3994 = vld [vmem:[%s6 + $0x1f4] sm:$0xf]
      %v3995 = vld [vmem:[%s6 + $0x1f8] sm:$0xf]
      %v3996 = vld [vmem:[%s6 + $0x1fc] sm:$0xf]
      %v3997 = vld [vmem:[%s6 + $0x200] sm:$0xf]
      %v3998 = vld [vmem:[%s6 + $0x204] sm:$0xf]
      %v3999 = vld [vmem:[%s6 + $0x208] sm:$0xf]
      %v4000 = vld [vmem:[%s6 + $0x20c] sm:$0xf]
      %v4001 = vld [vmem:[%s6 + $0x210] sm:$0xf]
      %v4002 = vld [vmem:[%s6 + $0x214] sm:$0xf]
      %v4003 = vld [vmem:[%s6 + $0x218] sm:$0xf]
      %v4004 = vld [vmem:[%s6 + $0x21c] sm:$0xf]
      %v4005 = vld [vmem:[%s6 + $0x220] sm:$0xf]
      %v4006 = vld [vmem:[%s6 + $0x224] sm:$0xf]
      %v4007 = vld [vmem:[%s6 + $0x228] sm:$0xf]
      %v4008 = vld [vmem:[%s6 + $0x22c] sm:$0xf]
      %v4009 = vld [vmem:[%s6 + $0x230] sm:$0xf]
      %v4010 = vld [vmem:[%s6 + $0x234] sm:$0xf]
      %v4011 = vld [vmem:[%s6 + $0x238] sm:$0xf]
      %v4012 = vld [vmem:[%s6 + $0x23c] sm:$0xf]
      %v4157 = vunpack.c.l.b16 %v3869
      %v4158 = vunpack.c.l.b16 %v3870
      %v4159 = vunpack.c.l.b16 %v3871
      %v4160 = vunpack.c.l.b16 %v3872
      %v4161 = vunpack.c.l.b16 %v3873
      %v4162 = vunpack.c.l.b16 %v3874
      %v4163 = vunpack.c.l.b16 %v3875
      %v4164 = vunpack.c.l.b16 %v3876
      %v4165 = vunpack.c.l.b16 %v3877
      %v4166 = vunpack.c.l.b16 %v3878
      %v4167 = vunpack.c.l.b16 %v3879
      %v4168 = vunpack.c.l.b16 %v3880
      %v4169 = vunpack.c.l.b16 %v3881
      %v4170 = vunpack.c.l.b16 %v3882
      %v4171 = vunpack.c.l.b16 %v3883
      %v4172 = vunpack.c.l.b16 %v3884
      %v4173 = vunpack.c.l.b16 %v3885
      %v4174 = vunpack.c.l.b16 %v3886
      %v4175 = vunpack.c.l.b16 %v3887
      %v4176 = vunpack.c.l.b16 %v3888
      %v4177 = vunpack.c.l.b16 %v3889
      %v4178 = vunpack.c.l.b16 %v3890
      %v4179 = vunpack.c.l.b16 %v3891
      %v4180 = vunpack.c.l.b16 %v3892
      %v4181 = vunpack.c.l.b16 %v3893
      %v4182 = vunpack.c.l.b16 %v3894
      %v4183 = vunpack.c.l.b16 %v3895
      %v4184 = vunpack.c.l.b16 %v3896
      %v4185 = vunpack.c.l.b16 %v3897
      %v4186 = vunpack.c.l.b16 %v3898
      %v4187 = vunpack.c.l.b16 %v3899
      %v4188 = vunpack.c.l.b16 %v3900
      %v4189 = vunpack.c.l.b16 %v3901
      %v4190 = vunpack.c.l.b16 %v3902
      %v4191 = vunpack.c.l.b16 %v3903
      %v4192 = vunpack.c.l.b16 %v3904
      %v4193 = vunpack.c.l.b16 %v3905
      %v4194 = vunpack.c.l.b16 %v3906
      %v4195 = vunpack.c.l.b16 %v3907
      %v4196 = vunpack.c.l.b16 %v3908
      %v4197 = vunpack.c.l.b16 %v3909
      %v4198 = vunpack.c.l.b16 %v3910
      %v4199 = vunpack.c.l.b16 %v3911
      %v4200 = vunpack.c.l.b16 %v3912
      %v4201 = vunpack.c.l.b16 %v3913
      %v4202 = vunpack.c.l.b16 %v3914
      %v4203 = vunpack.c.l.b16 %v3915
      %v4204 = vunpack.c.l.b16 %v3916
      %v4205 = vunpack.c.l.b16 %v3917
      %v4206 = vunpack.c.l.b16 %v3918
      %v4207 = vunpack.c.l.b16 %v3919
      %v4208 = vunpack.c.l.b16 %v3920
      %v4209 = vunpack.c.l.b16 %v3921
      %v4210 = vunpack.c.l.b16 %v3922
      %v4211 = vunpack.c.l.b16 %v3923
      %v4212 = vunpack.c.l.b16 %v3924
      %v4213 = vunpack.c.l.b16 %v3925
      %v4214 = vunpack.c.l.b16 %v3926
      %v4215 = vunpack.c.l.b16 %v3927
      %v4216 = vunpack.c.l.b16 %v3928
      %v4217 = vunpack.c.l.b16 %v3929
      %v4218 = vunpack.c.l.b16 %v3930
      %v4219 = vunpack.c.l.b16 %v3931
      %v4220 = vunpack.c.l.b16 %v3932
      %v4221 = vunpack.c.l.b16 %v3933
      %v4222 = vunpack.c.l.b16 %v3934
      %v4223 = vunpack.c.l.b16 %v3935
      %v4224 = vunpack.c.l.b16 %v3936
      %v4225 = vunpack.c.l.b16 %v3937
      %v4226 = vunpack.c.l.b16 %v3938
      %v4227 = vunpack.c.l.b16 %v3939
      %v4228 = vunpack.c.l.b16 %v3940
      %v4229 = vunpack.c.l.b16 %v3941
      %v4230 = vunpack.c.l.b16 %v3942
      %v4231 = vunpack.c.l.b16 %v3943
      %v4232 = vunpack.c.l.b16 %v3944
      %v4233 = vunpack.c.l.b16 %v3945
      %v4234 = vunpack.c.l.b16 %v3946
      %v4235 = vunpack.c.l.b16 %v3947
      %v4236 = vunpack.c.l.b16 %v3948
      %v4237 = vunpack.c.l.b16 %v3949
      %v4238 = vunpack.c.l.b16 %v3950
      %v4239 = vunpack.c.l.b16 %v3951
      %v4240 = vunpack.c.l.b16 %v3952
      %v4241 = vunpack.c.l.b16 %v3953
      %v4242 = vunpack.c.l.b16 %v3954
      %v4243 = vunpack.c.l.b16 %v3955
      %v4244 = vunpack.c.l.b16 %v3956
      %v4245 = vunpack.c.l.b16 %v3957
      %v4246 = vunpack.c.l.b16 %v3958
      %v4247 = vunpack.c.l.b16 %v3959
      %v4248 = vunpack.c.l.b16 %v3960
      %v4249 = vunpack.c.l.b16 %v3961
      %v4250 = vunpack.c.l.b16 %v3962
      %v4251 = vunpack.c.l.b16 %v3963
      %v4252 = vunpack.c.l.b16 %v3964
      %v4253 = vunpack.c.l.b16 %v3965
      %v4254 = vunpack.c.l.b16 %v3966
      %v4255 = vunpack.c.l.b16 %v3967
      %v4256 = vunpack.c.l.b16 %v3968
      %v4257 = vunpack.c.l.b16 %v3969
      %v4258 = vunpack.c.l.b16 %v3970
      %v4259 = vunpack.c.l.b16 %v3971
      %v4260 = vunpack.c.l.b16 %v3972
      %v4261 = vunpack.c.l.b16 %v3973
      %v4262 = vunpack.c.l.b16 %v3974
      %v4263 = vunpack.c.l.b16 %v3975
      %v4264 = vunpack.c.l.b16 %v3976
      %v4265 = vunpack.c.l.b16 %v3977
      %v4266 = vunpack.c.l.b16 %v3978
      %v4267 = vunpack.c.l.b16 %v3979
      %v4268 = vunpack.c.l.b16 %v3980
      %v4269 = vunpack.c.l.b16 %v3981
      %v4270 = vunpack.c.l.b16 %v3982
      %v4271 = vunpack.c.l.b16 %v3983
      %v4272 = vunpack.c.l.b16 %v3984
      %v4273 = vunpack.c.l.b16 %v3985
      %v4274 = vunpack.c.l.b16 %v3986
      %v4275 = vunpack.c.l.b16 %v3987
      %v4276 = vunpack.c.l.b16 %v3988
      %v4277 = vunpack.c.l.b16 %v3989
      %v4278 = vunpack.c.l.b16 %v3990
      %v4279 = vunpack.c.l.b16 %v3991
      %v4280 = vunpack.c.l.b16 %v3992
      %v4281 = vunpack.c.l.b16 %v3993
      %v4282 = vunpack.c.l.b16 %v3994
      %v4283 = vunpack.c.l.b16 %v3995
      %v4284 = vunpack.c.l.b16 %v3996
      %v4285 = vunpack.c.l.b16 %v3997
      %v4286 = vunpack.c.l.b16 %v3998
      %v4287 = vunpack.c.l.b16 %v3999
      %v4288 = vunpack.c.l.b16 %v4000
      %v4289 = vunpack.c.l.b16 %v4001
      %v4290 = vunpack.c.l.b16 %v4002
      %v4291 = vunpack.c.l.b16 %v4003
      %v4292 = vunpack.c.l.b16 %v4004
      %v4293 = vunpack.c.l.b16 %v4005
      %v4294 = vunpack.c.l.b16 %v4006
      %v4295 = vunpack.c.l.b16 %v4007
      %v4296 = vunpack.c.l.b16 %v4008
      %v4297 = vunpack.c.l.b16 %v4009
      %v4298 = vunpack.c.l.b16 %v4010
      %v4299 = vunpack.c.l.b16 %v4011
      %v4300 = vunpack.c.l.b16 %v4012
      %v4301 = vpack.c.b16 %v4158, %v4157
      %v4302 = vpack.c.b16 %v4160, %v4159
      %v4303 = vpack.c.b16 %v4162, %v4161
      %v4304 = vpack.c.b16 %v4164, %v4163
      %v4305 = vpack.c.b16 %v4166, %v4165
      %v4306 = vpack.c.b16 %v4168, %v4167
      %v4307 = vpack.c.b16 %v4170, %v4169
      %v4308 = vpack.c.b16 %v4172, %v4171
      %v4309 = vpack.c.b16 %v4174, %v4173
      %v4310 = vpack.c.b16 %v4176, %v4175
      %v4311 = vpack.c.b16 %v4178, %v4177
      %v4312 = vpack.c.b16 %v4180, %v4179
      %v4313 = vpack.c.b16 %v4182, %v4181
      %v4314 = vpack.c.b16 %v4184, %v4183
      %v4315 = vpack.c.b16 %v4186, %v4185
      %v4316 = vpack.c.b16 %v4188, %v4187
      %v4317 = vpack.c.b16 %v4190, %v4189
      %v4318 = vpack.c.b16 %v4192, %v4191
      %v4319 = vpack.c.b16 %v4194, %v4193
      %v4320 = vpack.c.b16 %v4196, %v4195
      %v4321 = vpack.c.b16 %v4198, %v4197
      %v4322 = vpack.c.b16 %v4200, %v4199
      %v4323 = vpack.c.b16 %v4202, %v4201
      %v4324 = vpack.c.b16 %v4204, %v4203
      %v4325 = vpack.c.b16 %v4206, %v4205
      %v4326 = vpack.c.b16 %v4208, %v4207
      %v4327 = vpack.c.b16 %v4210, %v4209
      %v4328 = vpack.c.b16 %v4212, %v4211
      %v4329 = vpack.c.b16 %v4214, %v4213
      %v4330 = vpack.c.b16 %v4216, %v4215
      %v4331 = vpack.c.b16 %v4218, %v4217
      %v4332 = vpack.c.b16 %v4220, %v4219
      %v4333 = vpack.c.b16 %v4222, %v4221
      %v4334 = vpack.c.b16 %v4224, %v4223
      %v4335 = vpack.c.b16 %v4226, %v4225
      %v4336 = vpack.c.b16 %v4228, %v4227
      %v4337 = vpack.c.b16 %v4230, %v4229
      %v4338 = vpack.c.b16 %v4232, %v4231
      %v4339 = vpack.c.b16 %v4234, %v4233
      %v4340 = vpack.c.b16 %v4236, %v4235
      %v4341 = vpack.c.b16 %v4238, %v4237
      %v4342 = vpack.c.b16 %v4240, %v4239
      %v4343 = vpack.c.b16 %v4242, %v4241
      %v4344 = vpack.c.b16 %v4244, %v4243
      %v4345 = vpack.c.b16 %v4246, %v4245
      %v4346 = vpack.c.b16 %v4248, %v4247
      %v4347 = vpack.c.b16 %v4250, %v4249
      %v4348 = vpack.c.b16 %v4252, %v4251
      %v4349 = vpack.c.b16 %v4254, %v4253
      %v4350 = vpack.c.b16 %v4256, %v4255
      %v4351 = vpack.c.b16 %v4258, %v4257
      %v4352 = vpack.c.b16 %v4260, %v4259
      %v4353 = vpack.c.b16 %v4262, %v4261
      %v4354 = vpack.c.b16 %v4264, %v4263
      %v4355 = vpack.c.b16 %v4266, %v4265
      %v4356 = vpack.c.b16 %v4268, %v4267
      %v4357 = vpack.c.b16 %v4270, %v4269
      %v4358 = vpack.c.b16 %v4272, %v4271
      %v4359 = vpack.c.b16 %v4274, %v4273
      %v4360 = vpack.c.b16 %v4276, %v4275
      %v4361 = vpack.c.b16 %v4278, %v4277
      %v4362 = vpack.c.b16 %v4280, %v4279
      %v4363 = vpack.c.b16 %v4282, %v4281
      %v4364 = vpack.c.b16 %v4284, %v4283
      %v4365 = vpack.c.b16 %v4286, %v4285
      %v4366 = vpack.c.b16 %v4288, %v4287
      %v4367 = vpack.c.b16 %v4290, %v4289
      %v4368 = vpack.c.b16 %v4292, %v4291
      %v4369 = vpack.c.b16 %v4294, %v4293
      %v4370 = vpack.c.b16 %v4296, %v4295
      %v4371 = vpack.c.b16 %v4298, %v4297
      %v4372 = vpack.c.b16 %v4300, %v4299
      %4445 = vmatprep.subr.bf16.mxu0 0
      %4446 = vmatpush1.bf16.msra.mxu0 %v4308
      %4447 = vmatprep.subr.bf16.mxu0 0
      %4448 = vmatpush1.bf16.msra.mxu0 %v4307
      %4449 = vmatprep.subr.bf16.mxu0 0
      %4450 = vmatpush1.bf16.msra.mxu0 %v4306
      %4451 = vmatprep.subr.bf16.mxu0 0
      %4452 = vmatpush1.bf16.msra.mxu0 %v4305
      %4453 = vmatprep.subr.bf16.mxu0 0
      %4454 = vmatpush1.bf16.msra.mxu0 %v4304
      %4455 = vmatprep.subr.bf16.mxu0 0
      %4456 = vmatpush1.bf16.msra.mxu0 %v4303
      %4457 = vmatprep.subr.bf16.mxu0 0
      %4458 = vmatpush1.bf16.msra.mxu0 %v4302
      %4459 = vmatprep.subr.bf16.mxu0 0
      %4460 = vmatpush1.bf16.msra.mxu0 %v4301
      %4461 = vmatprep.subr.bf16.mxu0 0
      %4462 = vmatpush2.bf16.msra.mxu0 %v4316
      %4463 = vmatprep.subr.bf16.mxu0 0
      %4464 = vmatpush2.bf16.msra.mxu0 %v4315
      %4465 = vmatprep.subr.bf16.mxu0 0
      %4466 = vmatpush2.bf16.msra.mxu0 %v4314
      %4467 = vmatprep.subr.bf16.mxu0 0
      %4468 = vmatpush2.bf16.msra.mxu0 %v4313
      %4469 = vmatprep.subr.bf16.mxu0 0
      %4470 = vmatpush2.bf16.msra.mxu0 %v4312
      %4471 = vmatprep.subr.bf16.mxu0 0
      %4472 = vmatpush2.bf16.msra.mxu0 %v4311
      %4473 = vmatprep.subr.bf16.mxu0 0
      %4474 = vmatpush2.bf16.msra.mxu0 %v4310
      %4475 = vmatprep.subr.bf16.mxu0 0
      %4476 = vmatpush2.bf16.msra.mxu0 %v4309
      %4477 = vmatprep.mubr.bf16.mxu0 %v3726
      %4478 = vmatmul.mubr.bf16.gmra.mxu0 %v3725
      %v4479 = vpop.f32.mrf.mxu0
      %v4480 = vadd.f32 0.0, %v4479
      %v4481 = vpop.f32.mrf.mxu0
      %v4482 = vpop.f32.mrf.mxu0
      %v4483 = vadd.f32 0.0, %v4482
      %v4484 = vpop.f32.mrf.mxu0
      %4485 = vmatprep.mubr.bf16.mxu0 %v3735
      %4486 = vmatmul.mubr.bf16.gmra.mxu0 %v3734
      %v4487 = vpop.f32.mrf.mxu0
      %v4488 = vadd.f32 0.0, %v4487
      %v4489 = vpop.f32.mrf.mxu0
      %v4490 = vpop.f32.mrf.mxu0
      %v4491 = vadd.f32 0.0, %v4490
      %v4492 = vpop.f32.mrf.mxu0
      %4493 = vmatprep.mubr.bf16.mxu0 %v3744
      %4494 = vmatmul.mubr.bf16.gmra.mxu0 %v3743
      %v4495 = vpop.f32.mrf.mxu0
      %v4496 = vadd.f32 0.0, %v4495
      %v4497 = vpop.f32.mrf.mxu0
      %v4498 = vpop.f32.mrf.mxu0
      %v4499 = vadd.f32 0.0, %v4498
      %v4500 = vpop.f32.mrf.mxu0
      %4501 = vmatprep.mubr.bf16.mxu0 %v3753
      %4502 = vmatmul.mubr.bf16.gmra.mxu0 %v3752
      %v4503 = vpop.f32.mrf.mxu0
      %v4504 = vadd.f32 0.0, %v4503
      %v4505 = vpop.f32.mrf.mxu0
      %v4506 = vpop.f32.mrf.mxu0
      %v4507 = vadd.f32 0.0, %v4506
      %v4508 = vpop.f32.mrf.mxu0
      %4509 = vmatprep.mubr.bf16.mxu0 %v3762
      %4510 = vmatmul.mubr.bf16.gmra.mxu0 %v3761
      %v4511 = vpop.f32.mrf.mxu0
      %v4512 = vadd.f32 0.0, %v4511
      %v4513 = vpop.f32.mrf.mxu0
      %v4514 = vpop.f32.mrf.mxu0
      %v4515 = vadd.f32 0.0, %v4514
      %v4516 = vpop.f32.mrf.mxu0
      %4517 = vmatprep.mubr.bf16.mxu0 %v3771
      %4518 = vmatmul.mubr.bf16.gmra.mxu0 %v3770
      %v4519 = vpop.f32.mrf.mxu0
      %v4520 = vadd.f32 0.0, %v4519
      %v4521 = vpop.f32.mrf.mxu0
      %v4522 = vpop.f32.mrf.mxu0
      %v4523 = vadd.f32 0.0, %v4522
      %v4524 = vpop.f32.mrf.mxu0
      %4525 = vmatprep.mubr.bf16.mxu0 %v3780
      %4526 = vmatmul.mubr.bf16.gmra.mxu0 %v3779
      %v4527 = vpop.f32.mrf.mxu0
      %v4528 = vadd.f32 0.0, %v4527
      %v4529 = vpop.f32.mrf.mxu0
      %v4530 = vpop.f32.mrf.mxu0
      %v4531 = vadd.f32 0.0, %v4530
      %v4532 = vpop.f32.mrf.mxu0
      %4533 = vmatprep.mubr.bf16.mxu0 %v3789
      %4534 = vmatmul.mubr.bf16.gmra.mxu0 %v3788
      %v4535 = vpop.f32.mrf.mxu0
      %v4536 = vadd.f32 0.0, %v4535
      %v4537 = vpop.f32.mrf.mxu0
      %v4538 = vpop.f32.mrf.mxu0
      %v4539 = vadd.f32 0.0, %v4538
      %v4540 = vpop.f32.mrf.mxu0
      %4541 = vmatprep.mubr.bf16.mxu0 %v3798
      %4542 = vmatmul.mubr.bf16.gmra.mxu0 %v3797
      %v4543 = vpop.f32.mrf.mxu0
      %v4544 = vadd.f32 0.0, %v4543
      %v4545 = vpop.f32.mrf.mxu0
      %v4546 = vpop.f32.mrf.mxu0
      %v4547 = vadd.f32 0.0, %v4546
      %v4548 = vpop.f32.mrf.mxu0
      %4549 = vmatprep.mubr.bf16.mxu0 %v3807
      %4550 = vmatmul.mubr.bf16.gmra.mxu0 %v3806
      %v4551 = vpop.f32.mrf.mxu0
      %v4552 = vadd.f32 0.0, %v4551
      %v4553 = vpop.f32.mrf.mxu0
      %v4554 = vpop.f32.mrf.mxu0
      %v4555 = vadd.f32 0.0, %v4554
      %v4556 = vpop.f32.mrf.mxu0
      %4557 = vmatprep.mubr.bf16.mxu0 %v3816
      %4558 = vmatmul.mubr.bf16.gmra.mxu0 %v3815
      %v4559 = vpop.f32.mrf.mxu0
      %v4560 = vadd.f32 0.0, %v4559
      %v4561 = vpop.f32.mrf.mxu0
      %v4562 = vpop.f32.mrf.mxu0
      %v4563 = vadd.f32 0.0, %v4562
      %v4564 = vpop.f32.mrf.mxu0
      %4565 = vmatprep.mubr.bf16.mxu0 %v3825
      %4566 = vmatmul.mubr.bf16.gmra.mxu0 %v3824
      %v4567 = vpop.f32.mrf.mxu0
      %v4568 = vadd.f32 0.0, %v4567
      %v4569 = vpop.f32.mrf.mxu0
      %v4570 = vpop.f32.mrf.mxu0
      %v4571 = vadd.f32 0.0, %v4570
      %v4572 = vpop.f32.mrf.mxu0
      %4573 = vmatprep.mubr.bf16.mxu0 %v3834
      %4574 = vmatmul.mubr.bf16.gmra.mxu0 %v3833
      %v4575 = vpop.f32.mrf.mxu0
      %v4576 = vadd.f32 0.0, %v4575
      %v4577 = vpop.f32.mrf.mxu0
      %v4578 = vpop.f32.mrf.mxu0
      %v4579 = vadd.f32 0.0, %v4578
      %v4580 = vpop.f32.mrf.mxu0
      %4581 = vmatprep.mubr.bf16.mxu0 %v3843
      %4582 = vmatmul.mubr.bf16.gmra.mxu0 %v3842
      %v4583 = vpop.f32.mrf.mxu0
      %v4584 = vadd.f32 0.0, %v4583
      %v4585 = vpop.f32.mrf.mxu0
      %v4586 = vpop.f32.mrf.mxu0
      %v4587 = vadd.f32 0.0, %v4586
      %v4588 = vpop.f32.mrf.mxu0
      %4589 = vmatprep.mubr.bf16.mxu0 %v3852
      %4590 = vmatmul.mubr.bf16.gmra.mxu0 %v3851
      %v4591 = vpop.f32.mrf.mxu0
      %v4592 = vadd.f32 0.0, %v4591
      %v4593 = vpop.f32.mrf.mxu0
      %v4594 = vpop.f32.mrf.mxu0
      %v4595 = vadd.f32 0.0, %v4594
      %v4596 = vpop.f32.mrf.mxu0
      %4597 = vmatprep.mubr.bf16.mxu0 %v3861
      %4598 = vmatmul.mubr.bf16.gmra.mxu0 %v3860
      %v4599 = vpop.f32.mrf.mxu0
      %v4600 = vadd.f32 0.0, %v4599
      %v4601 = vpop.f32.mrf.mxu0
      %v4602 = vpop.f32.mrf.mxu0
      %v4603 = vadd.f32 0.0, %v4602
      %v4604 = vpop.f32.mrf.mxu0
      %4605 = vdwg.mxu0
      %4606 = vmatprep.subr.bf16.mxu0 0
      %4607 = vmatpush1.bf16.msra.mxu0 %v4324
      %4608 = vmatprep.subr.bf16.mxu0 0
      %4609 = vmatpush1.bf16.msra.mxu0 %v4323
      %4610 = vmatprep.subr.bf16.mxu0 0
      %4611 = vmatpush1.bf16.msra.mxu0 %v4322
      %4612 = vmatprep.subr.bf16.mxu0 0
      %4613 = vmatpush1.bf16.msra.mxu0 %v4321
      %4614 = vmatprep.subr.bf16.mxu0 0
      %4615 = vmatpush1.bf16.msra.mxu0 %v4320
      %4616 = vmatprep.subr.bf16.mxu0 0
      %4617 = vmatpush1.bf16.msra.mxu0 %v4319
      %4618 = vmatprep.subr.bf16.mxu0 0
      %4619 = vmatpush1.bf16.msra.mxu0 %v4318
      %4620 = vmatprep.subr.bf16.mxu0 0
      %4621 = vmatpush1.bf16.msra.mxu0 %v4317
      %4622 = vmatprep.subr.bf16.mxu0 0
      %4623 = vmatpush2.bf16.msra.mxu0 %v4332
      %4624 = vmatprep.subr.bf16.mxu0 0
      %4625 = vmatpush2.bf16.msra.mxu0 %v4331
      %4626 = vmatprep.subr.bf16.mxu0 0
      %4627 = vmatpush2.bf16.msra.mxu0 %v4330
      %4628 = vmatprep.subr.bf16.mxu0 0
      %4629 = vmatpush2.bf16.msra.mxu0 %v4329
      %4630 = vmatprep.subr.bf16.mxu0 0
      %4631 = vmatpush2.bf16.msra.mxu0 %v4328
      %4632 = vmatprep.subr.bf16.mxu0 0
      %4633 = vmatpush2.bf16.msra.mxu0 %v4327
      %4634 = vmatprep.subr.bf16.mxu0 0
      %4635 = vmatpush2.bf16.msra.mxu0 %v4326
      %4636 = vmatprep.subr.bf16.mxu0 0
      %4637 = vmatpush2.bf16.msra.mxu0 %v4325
      %4638 = vmatprep.mubr.bf16.mxu0 %v3728
      %4639 = vmatmul.mubr.bf16.gmra.mxu0 %v3727
      %v4640 = vpop.f32.mrf.mxu0
      %v4641 = vadd.f32 %v4480, %v4640
      %v4642 = vpop.f32.mrf.mxu0
      %v4643 = vpop.f32.mrf.mxu0
      %v4644 = vadd.f32 %v4483, %v4643
      %v4645 = vpop.f32.mrf.mxu0
      %4646 = vmatprep.mubr.bf16.mxu0 %v3737
      %4647 = vmatmul.mubr.bf16.gmra.mxu0 %v3736
      %v4648 = vpop.f32.mrf.mxu0
      %v4649 = vadd.f32 %v4488, %v4648
      %v4650 = vpop.f32.mrf.mxu0
      %v4651 = vpop.f32.mrf.mxu0
      %v4652 = vadd.f32 %v4491, %v4651
      %v4653 = vpop.f32.mrf.mxu0
      %4654 = vmatprep.mubr.bf16.mxu0 %v3746
      %4655 = vmatmul.mubr.bf16.gmra.mxu0 %v3745
      %v4656 = vpop.f32.mrf.mxu0
      %v4657 = vadd.f32 %v4496, %v4656
      %v4658 = vpop.f32.mrf.mxu0
      %v4659 = vpop.f32.mrf.mxu0
      %v4660 = vadd.f32 %v4499, %v4659
      %v4661 = vpop.f32.mrf.mxu0
      %4662 = vmatprep.mubr.bf16.mxu0 %v3755
      %4663 = vmatmul.mubr.bf16.gmra.mxu0 %v3754
      %v4664 = vpop.f32.mrf.mxu0
      %v4665 = vadd.f32 %v4504, %v4664
      %v4666 = vpop.f32.mrf.mxu0
      %v4667 = vpop.f32.mrf.mxu0
      %v4668 = vadd.f32 %v4507, %v4667
      %v4669 = vpop.f32.mrf.mxu0
      %4670 = vmatprep.mubr.bf16.mxu0 %v3764
      %4671 = vmatmul.mubr.bf16.gmra.mxu0 %v3763
      %v4672 = vpop.f32.mrf.mxu0
      %v4673 = vadd.f32 %v4512, %v4672
      %v4674 = vpop.f32.mrf.mxu0
      %v4675 = vpop.f32.mrf.mxu0
      %v4676 = vadd.f32 %v4515, %v4675
      %v4677 = vpop.f32.mrf.mxu0
      %4678 = vmatprep.mubr.bf16.mxu0 %v3773
      %4679 = vmatmul.mubr.bf16.gmra.mxu0 %v3772
      %v4680 = vpop.f32.mrf.mxu0
      %v4681 = vadd.f32 %v4520, %v4680
      %v4682 = vpop.f32.mrf.mxu0
      %v4683 = vpop.f32.mrf.mxu0
      %v4684 = vadd.f32 %v4523, %v4683
      %v4685 = vpop.f32.mrf.mxu0
      %4686 = vmatprep.mubr.bf16.mxu0 %v3782
      %4687 = vmatmul.mubr.bf16.gmra.mxu0 %v3781
      %v4688 = vpop.f32.mrf.mxu0
      %v4689 = vadd.f32 %v4528, %v4688
      %v4690 = vpop.f32.mrf.mxu0
      %v4691 = vpop.f32.mrf.mxu0
      %v4692 = vadd.f32 %v4531, %v4691
      %v4693 = vpop.f32.mrf.mxu0
      %4694 = vmatprep.mubr.bf16.mxu0 %v3791
      %4695 = vmatmul.mubr.bf16.gmra.mxu0 %v3790
      %v4696 = vpop.f32.mrf.mxu0
      %v4697 = vadd.f32 %v4536, %v4696
      %v4698 = vpop.f32.mrf.mxu0
      %v4699 = vpop.f32.mrf.mxu0
      %v4700 = vadd.f32 %v4539, %v4699
      %v4701 = vpop.f32.mrf.mxu0
      %4702 = vmatprep.mubr.bf16.mxu0 %v3800
      %4703 = vmatmul.mubr.bf16.gmra.mxu0 %v3799
      %v4704 = vpop.f32.mrf.mxu0
      %v4705 = vadd.f32 %v4544, %v4704
      %v4706 = vpop.f32.mrf.mxu0
      %v4707 = vpop.f32.mrf.mxu0
      %v4708 = vadd.f32 %v4547, %v4707
      %v4709 = vpop.f32.mrf.mxu0
      %4710 = vmatprep.mubr.bf16.mxu0 %v3809
      %4711 = vmatmul.mubr.bf16.gmra.mxu0 %v3808
      %v4712 = vpop.f32.mrf.mxu0
      %v4713 = vadd.f32 %v4552, %v4712
      %v4714 = vpop.f32.mrf.mxu0
      %v4715 = vpop.f32.mrf.mxu0
      %v4716 = vadd.f32 %v4555, %v4715
      %v4717 = vpop.f32.mrf.mxu0
      %4718 = vmatprep.mubr.bf16.mxu0 %v3818
      %4719 = vmatmul.mubr.bf16.gmra.mxu0 %v3817
      %v4720 = vpop.f32.mrf.mxu0
      %v4721 = vadd.f32 %v4560, %v4720
      %v4722 = vpop.f32.mrf.mxu0
      %v4723 = vpop.f32.mrf.mxu0
      %v4724 = vadd.f32 %v4563, %v4723
      %v4725 = vpop.f32.mrf.mxu0
      %4726 = vmatprep.mubr.bf16.mxu0 %v3827
      %4727 = vmatmul.mubr.bf16.gmra.mxu0 %v3826
      %v4728 = vpop.f32.mrf.mxu0
      %v4729 = vadd.f32 %v4568, %v4728
      %v4730 = vpop.f32.mrf.mxu0
      %v4731 = vpop.f32.mrf.mxu0
      %v4732 = vadd.f32 %v4571, %v4731
      %v4733 = vpop.f32.mrf.mxu0
      %4734 = vmatprep.mubr.bf16.mxu0 %v3836
      %4735 = vmatmul.mubr.bf16.gmra.mxu0 %v3835
      %v4736 = vpop.f32.mrf.mxu0
      %v4737 = vadd.f32 %v4576, %v4736
      %v4738 = vpop.f32.mrf.mxu0
      %v4739 = vpop.f32.mrf.mxu0
      %v4740 = vadd.f32 %v4579, %v4739
      %v4741 = vpop.f32.mrf.mxu0
      %4742 = vmatprep.mubr.bf16.mxu0 %v3845
      %4743 = vmatmul.mubr.bf16.gmra.mxu0 %v3844
      %v4744 = vpop.f32.mrf.mxu0
      %v4745 = vadd.f32 %v4584, %v4744
      %v4746 = vpop.f32.mrf.mxu0
      %v4747 = vpop.f32.mrf.mxu0
      %v4748 = vadd.f32 %v4587, %v4747
      %v4749 = vpop.f32.mrf.mxu0
      %4750 = vmatprep.mubr.bf16.mxu0 %v3854
      %4751 = vmatmul.mubr.bf16.gmra.mxu0 %v3853
      %v4752 = vpop.f32.mrf.mxu0
      %v4753 = vadd.f32 %v4592, %v4752
      %v4754 = vpop.f32.mrf.mxu0
      %v4755 = vpop.f32.mrf.mxu0
      %v4756 = vadd.f32 %v4595, %v4755
      %v4757 = vpop.f32.mrf.mxu0
      %4758 = vmatprep.mubr.bf16.mxu0 %v3863
      %4759 = vmatmul.mubr.bf16.gmra.mxu0 %v3862
      %v4760 = vpop.f32.mrf.mxu0
      %v4761 = vadd.f32 %v4600, %v4760
      %v4762 = vpop.f32.mrf.mxu0
      %v4763 = vpop.f32.mrf.mxu0
      %v4764 = vadd.f32 %v4603, %v4763
      %v4765 = vpop.f32.mrf.mxu0
      %4766 = vdwg.mxu0
      %4767 = vmatprep.subr.bf16.mxu0 0
      %4768 = vmatpush1.bf16.msra.mxu0 %v4340
      %4769 = vmatprep.subr.bf16.mxu0 0
      %4770 = vmatpush1.bf16.msra.mxu0 %v4339
      %4771 = vmatprep.subr.bf16.mxu0 0
      %4772 = vmatpush1.bf16.msra.mxu0 %v4338
      %4773 = vmatprep.subr.bf16.mxu0 0
      %4774 = vmatpush1.bf16.msra.mxu0 %v4337
      %4775 = vmatprep.subr.bf16.mxu0 0
      %4776 = vmatpush1.bf16.msra.mxu0 %v4336
      %4777 = vmatprep.subr.bf16.mxu0 0
      %4778 = vmatpush1.bf16.msra.mxu0 %v4335
      %4779 = vmatprep.subr.bf16.mxu0 0
      %4780 = vmatpush1.bf16.msra.mxu0 %v4334
      %4781 = vmatprep.subr.bf16.mxu0 0
      %4782 = vmatpush1.bf16.msra.mxu0 %v4333
      %4783 = vmatprep.subr.bf16.mxu0 0
      %4784 = vmatpush2.bf16.msra.mxu0 %v4348
      %4785 = vmatprep.subr.bf16.mxu0 0
      %4786 = vmatpush2.bf16.msra.mxu0 %v4347
      %4787 = vmatprep.subr.bf16.mxu0 0
      %4788 = vmatpush2.bf16.msra.mxu0 %v4346
      %4789 = vmatprep.subr.bf16.mxu0 0
      %4790 = vmatpush2.bf16.msra.mxu0 %v4345
      %4791 = vmatprep.subr.bf16.mxu0 0
      %4792 = vmatpush2.bf16.msra.mxu0 %v4344
      %4793 = vmatprep.subr.bf16.mxu0 0
      %4794 = vmatpush2.bf16.msra.mxu0 %v4343
      %4795 = vmatprep.subr.bf16.mxu0 0
      %4796 = vmatpush2.bf16.msra.mxu0 %v4342
      %4797 = vmatprep.subr.bf16.mxu0 0
      %4798 = vmatpush2.bf16.msra.mxu0 %v4341
      %4799 = vmatprep.mubr.bf16.mxu0 %v3730
      %4800 = vmatmul.mubr.bf16.gmra.mxu0 %v3729
      %v4801 = vpop.f32.mrf.mxu0
      %v4802 = vadd.f32 %v4641, %v4801
      %v4803 = vpop.f32.mrf.mxu0
      %v4804 = vpop.f32.mrf.mxu0
      %v4805 = vadd.f32 %v4644, %v4804
      %v4806 = vpop.f32.mrf.mxu0
      %4807 = vmatprep.mubr.bf16.mxu0 %v3739
      %4808 = vmatmul.mubr.bf16.gmra.mxu0 %v3738
      %v4809 = vpop.f32.mrf.mxu0
      %v4810 = vadd.f32 %v4649, %v4809
      %v4811 = vpop.f32.mrf.mxu0
      %v4812 = vpop.f32.mrf.mxu0
      %v4813 = vadd.f32 %v4652, %v4812
      %v4814 = vpop.f32.mrf.mxu0
      %4815 = vmatprep.mubr.bf16.mxu0 %v3748
      %4816 = vmatmul.mubr.bf16.gmra.mxu0 %v3747
      %v4817 = vpop.f32.mrf.mxu0
      %v4818 = vadd.f32 %v4657, %v4817
      %v4819 = vpop.f32.mrf.mxu0
      %v4820 = vpop.f32.mrf.mxu0
      %v4821 = vadd.f32 %v4660, %v4820
      %v4822 = vpop.f32.mrf.mxu0
      %4823 = vmatprep.mubr.bf16.mxu0 %v3757
      %4824 = vmatmul.mubr.bf16.gmra.mxu0 %v3756
      %v4825 = vpop.f32.mrf.mxu0
      %v4826 = vadd.f32 %v4665, %v4825
      %v4827 = vpop.f32.mrf.mxu0
      %v4828 = vpop.f32.mrf.mxu0
      %v4829 = vadd.f32 %v4668, %v4828
      %v4830 = vpop.f32.mrf.mxu0
      %4831 = vmatprep.mubr.bf16.mxu0 %v3766
      %4832 = vmatmul.mubr.bf16.gmra.mxu0 %v3765
      %v4833 = vpop.f32.mrf.mxu0
      %v4834 = vadd.f32 %v4673, %v4833
      %v4835 = vpop.f32.mrf.mxu0
      %v4836 = vpop.f32.mrf.mxu0
      %v4837 = vadd.f32 %v4676, %v4836
      %v4838 = vpop.f32.mrf.mxu0
      %4839 = vmatprep.mubr.bf16.mxu0 %v3775
      %4840 = vmatmul.mubr.bf16.gmra.mxu0 %v3774
      %v4841 = vpop.f32.mrf.mxu0
      %v4842 = vadd.f32 %v4681, %v4841
      %v4843 = vpop.f32.mrf.mxu0
      %v4844 = vpop.f32.mrf.mxu0
      %v4845 = vadd.f32 %v4684, %v4844
      %v4846 = vpop.f32.mrf.mxu0
      %4847 = vmatprep.mubr.bf16.mxu0 %v3784
      %4848 = vmatmul.mubr.bf16.gmra.mxu0 %v3783
      %v4849 = vpop.f32.mrf.mxu0
      %v4850 = vadd.f32 %v4689, %v4849
      %v4851 = vpop.f32.mrf.mxu0
      %v4852 = vpop.f32.mrf.mxu0
      %v4853 = vadd.f32 %v4692, %v4852
      %v4854 = vpop.f32.mrf.mxu0
      %4855 = vmatprep.mubr.bf16.mxu0 %v3793
      %4856 = vmatmul.mubr.bf16.gmra.mxu0 %v3792
      %v4857 = vpop.f32.mrf.mxu0
      %v4858 = vadd.f32 %v4697, %v4857
      %v4859 = vpop.f32.mrf.mxu0
      %v4860 = vpop.f32.mrf.mxu0
      %v4861 = vadd.f32 %v4700, %v4860
      %v4862 = vpop.f32.mrf.mxu0
      %4863 = vmatprep.mubr.bf16.mxu0 %v3802
      %4864 = vmatmul.mubr.bf16.gmra.mxu0 %v3801
      %v4865 = vpop.f32.mrf.mxu0
      %v4866 = vadd.f32 %v4705, %v4865
      %v4867 = vpop.f32.mrf.mxu0
      %v4868 = vpop.f32.mrf.mxu0
      %v4869 = vadd.f32 %v4708, %v4868
      %v4870 = vpop.f32.mrf.mxu0
      %4871 = vmatprep.mubr.bf16.mxu0 %v3811
      %4872 = vmatmul.mubr.bf16.gmra.mxu0 %v3810
      %v4873 = vpop.f32.mrf.mxu0
      %v4874 = vadd.f32 %v4713, %v4873
      %v4875 = vpop.f32.mrf.mxu0
      %v4876 = vpop.f32.mrf.mxu0
      %v4877 = vadd.f32 %v4716, %v4876
      %v4878 = vpop.f32.mrf.mxu0
      %4879 = vmatprep.mubr.bf16.mxu0 %v3820
      %4880 = vmatmul.mubr.bf16.gmra.mxu0 %v3819
      %v4881 = vpop.f32.mrf.mxu0
      %v4882 = vadd.f32 %v4721, %v4881
      %v4883 = vpop.f32.mrf.mxu0
      %v4884 = vpop.f32.mrf.mxu0
      %v4885 = vadd.f32 %v4724, %v4884
      %v4886 = vpop.f32.mrf.mxu0
      %4887 = vmatprep.mubr.bf16.mxu0 %v3829
      %4888 = vmatmul.mubr.bf16.gmra.mxu0 %v3828
      %v4889 = vpop.f32.mrf.mxu0
      %v4890 = vadd.f32 %v4729, %v4889
      %v4891 = vpop.f32.mrf.mxu0
      %v4892 = vpop.f32.mrf.mxu0
      %v4893 = vadd.f32 %v4732, %v4892
      %v4894 = vpop.f32.mrf.mxu0
      %4895 = vmatprep.mubr.bf16.mxu0 %v3838
      %4896 = vmatmul.mubr.bf16.gmra.mxu0 %v3837
      %v4897 = vpop.f32.mrf.mxu0
      %v4898 = vadd.f32 %v4737, %v4897
      %v4899 = vpop.f32.mrf.mxu0
      %v4900 = vpop.f32.mrf.mxu0
      %v4901 = vadd.f32 %v4740, %v4900
      %v4902 = vpop.f32.mrf.mxu0
      %4903 = vmatprep.mubr.bf16.mxu0 %v3847
      %4904 = vmatmul.mubr.bf16.gmra.mxu0 %v3846
      %v4905 = vpop.f32.mrf.mxu0
      %v4906 = vadd.f32 %v4745, %v4905
      %v4907 = vpop.f32.mrf.mxu0
      %v4908 = vpop.f32.mrf.mxu0
      %v4909 = vadd.f32 %v4748, %v4908
      %v4910 = vpop.f32.mrf.mxu0
      %4911 = vmatprep.mubr.bf16.mxu0 %v3856
      %4912 = vmatmul.mubr.bf16.gmra.mxu0 %v3855
      %v4913 = vpop.f32.mrf.mxu0
      %v4914 = vadd.f32 %v4753, %v4913
      %v4915 = vpop.f32.mrf.mxu0
      %v4916 = vpop.f32.mrf.mxu0
      %v4917 = vadd.f32 %v4756, %v4916
      %v4918 = vpop.f32.mrf.mxu0
      %4919 = vmatprep.mubr.bf16.mxu0 %v3865
      %4920 = vmatmul.mubr.bf16.gmra.mxu0 %v3864
      %v4921 = vpop.f32.mrf.mxu0
      %v4922 = vadd.f32 %v4761, %v4921
      %v4923 = vpop.f32.mrf.mxu0
      %v4924 = vpop.f32.mrf.mxu0
      %v4925 = vadd.f32 %v4764, %v4924
      %v4926 = vpop.f32.mrf.mxu0
      %4927 = vdwg.mxu0
      %4928 = vmatprep.subr.bf16.mxu0 0
      %4929 = vmatpush1.bf16.msra.mxu0 %v4356
      %4930 = vmatprep.subr.bf16.mxu0 0
      %4931 = vmatpush1.bf16.msra.mxu0 %v4355
      %4932 = vmatprep.subr.bf16.mxu0 0
      %4933 = vmatpush1.bf16.msra.mxu0 %v4354
      %4934 = vmatprep.subr.bf16.mxu0 0
      %4935 = vmatpush1.bf16.msra.mxu0 %v4353
      %4936 = vmatprep.subr.bf16.mxu0 0
      %4937 = vmatpush1.bf16.msra.mxu0 %v4352
      %4938 = vmatprep.subr.bf16.mxu0 0
      %4939 = vmatpush1.bf16.msra.mxu0 %v4351
      %4940 = vmatprep.subr.bf16.mxu0 0
      %4941 = vmatpush1.bf16.msra.mxu0 %v4350
      %4942 = vmatprep.subr.bf16.mxu0 0
      %4943 = vmatpush1.bf16.msra.mxu0 %v4349
      %4944 = vmatprep.subr.bf16.mxu0 0
      %4945 = vmatpush2.bf16.msra.mxu0 %v4364
      %4946 = vmatprep.subr.bf16.mxu0 0
      %4947 = vmatpush2.bf16.msra.mxu0 %v4363
      %4948 = vmatprep.subr.bf16.mxu0 0
      %4949 = vmatpush2.bf16.msra.mxu0 %v4362
      %4950 = vmatprep.subr.bf16.mxu0 0
      %4951 = vmatpush2.bf16.msra.mxu0 %v4361
      %4952 = vmatprep.subr.bf16.mxu0 0
      %4953 = vmatpush2.bf16.msra.mxu0 %v4360
      %4954 = vmatprep.subr.bf16.mxu0 0
      %4955 = vmatpush2.bf16.msra.mxu0 %v4359
      %4956 = vmatprep.subr.bf16.mxu0 0
      %4957 = vmatpush2.bf16.msra.mxu0 %v4358
      %4958 = vmatprep.subr.bf16.mxu0 0
      %4959 = vmatpush2.bf16.msra.mxu0 %v4357
      %4960 = vmatprep.mubr.bf16.mxu0 %v3732
      %4961 = vmatmul.mubr.bf16.gmra.mxu0 %v3731
      %v4962 = vpop.f32.mrf.mxu0
      %v4963 = vadd.f32 %v4802, %v4962
      %v4964 = vpop.f32.mrf.mxu0
      %v4965 = vpop.f32.mrf.mxu0
      %v4966 = vadd.f32 %v4805, %v4965
      %v4967 = vpop.f32.mrf.mxu0
      %4968 = vmatprep.mubr.bf16.mxu0 %v3741
      %4969 = vmatmul.mubr.bf16.gmra.mxu0 %v3740
      %v4970 = vpop.f32.mrf.mxu0
      %v4971 = vadd.f32 %v4810, %v4970
      %v4972 = vpop.f32.mrf.mxu0
      %v4973 = vpop.f32.mrf.mxu0
      %v4974 = vadd.f32 %v4813, %v4973
      %v4975 = vpop.f32.mrf.mxu0
      %4976 = vmatprep.mubr.bf16.mxu0 %v3750
      %4977 = vmatmul.mubr.bf16.gmra.mxu0 %v3749
      %v4978 = vpop.f32.mrf.mxu0
      %v4979 = vadd.f32 %v4818, %v4978
      %v4980 = vpop.f32.mrf.mxu0
      %v4981 = vpop.f32.mrf.mxu0
      %v4982 = vadd.f32 %v4821, %v4981
      %v4983 = vpop.f32.mrf.mxu0
      %4984 = vmatprep.mubr.bf16.mxu0 %v3759
      %4985 = vmatmul.mubr.bf16.gmra.mxu0 %v3758
      %v4986 = vpop.f32.mrf.mxu0
      %v4987 = vadd.f32 %v4826, %v4986
      %v4988 = vpop.f32.mrf.mxu0
      %v4989 = vpop.f32.mrf.mxu0
      %v4990 = vadd.f32 %v4829, %v4989
      %v4991 = vpop.f32.mrf.mxu0
      %4992 = vmatprep.mubr.bf16.mxu0 %v3768
      %4993 = vmatmul.mubr.bf16.gmra.mxu0 %v3767
      %v4994 = vpop.f32.mrf.mxu0
      %v4995 = vadd.f32 %v4834, %v4994
      %v4996 = vpop.f32.mrf.mxu0
      %v4997 = vpop.f32.mrf.mxu0
      %v4998 = vadd.f32 %v4837, %v4997
      %v4999 = vpop.f32.mrf.mxu0
      %5000 = vmatprep.mubr.bf16.mxu0 %v3777
      %5001 = vmatmul.mubr.bf16.gmra.mxu0 %v3776
      %v5002 = vpop.f32.mrf.mxu0
      %v5003 = vadd.f32 %v4842, %v5002
      %v5004 = vpop.f32.mrf.mxu0
      %v5005 = vpop.f32.mrf.mxu0
      %v5006 = vadd.f32 %v4845, %v5005
      %v5007 = vpop.f32.mrf.mxu0
      %5008 = vmatprep.mubr.bf16.mxu0 %v3786
      %5009 = vmatmul.mubr.bf16.gmra.mxu0 %v3785
      %v5010 = vpop.f32.mrf.mxu0
      %v5011 = vadd.f32 %v4850, %v5010
      %v5012 = vpop.f32.mrf.mxu0
      %v5013 = vpop.f32.mrf.mxu0
      %v5014 = vadd.f32 %v4853, %v5013
      %v5015 = vpop.f32.mrf.mxu0
      %5016 = vmatprep.mubr.bf16.mxu0 %v3795
      %5017 = vmatmul.mubr.bf16.gmra.mxu0 %v3794
      %v5018 = vpop.f32.mrf.mxu0
      %v5019 = vadd.f32 %v4858, %v5018
      %v5020 = vpop.f32.mrf.mxu0
      %v5021 = vpop.f32.mrf.mxu0
      %v5022 = vadd.f32 %v4861, %v5021
      %v5023 = vpop.f32.mrf.mxu0
      %5024 = vmatprep.mubr.bf16.mxu0 %v3804
      %5025 = vmatmul.mubr.bf16.gmra.mxu0 %v3803
      %v5026 = vpop.f32.mrf.mxu0
      %v5027 = vadd.f32 %v4866, %v5026
      %v5028 = vpop.f32.mrf.mxu0
      %v5029 = vpop.f32.mrf.mxu0
      %v5030 = vadd.f32 %v4869, %v5029
      %v5031 = vpop.f32.mrf.mxu0
      %5032 = vmatprep.mubr.bf16.mxu0 %v3813
      %5033 = vmatmul.mubr.bf16.gmra.mxu0 %v3812
      %v5034 = vpop.f32.mrf.mxu0
      %v5035 = vadd.f32 %v4874, %v5034
      %v5036 = vpop.f32.mrf.mxu0
      %v5037 = vpop.f32.mrf.mxu0
      %v5038 = vadd.f32 %v4877, %v5037
      %v5039 = vpop.f32.mrf.mxu0
      %5040 = vmatprep.mubr.bf16.mxu0 %v3822
      %5041 = vmatmul.mubr.bf16.gmra.mxu0 %v3821
      %v5042 = vpop.f32.mrf.mxu0
      %v5043 = vadd.f32 %v4882, %v5042
      %v5044 = vpop.f32.mrf.mxu0
      %v5045 = vpop.f32.mrf.mxu0
      %v5046 = vadd.f32 %v4885, %v5045
      %v5047 = vpop.f32.mrf.mxu0
      %5048 = vmatprep.mubr.bf16.mxu0 %v3831
      %5049 = vmatmul.mubr.bf16.gmra.mxu0 %v3830
      %v5050 = vpop.f32.mrf.mxu0
      %v5051 = vadd.f32 %v4890, %v5050
      %v5052 = vpop.f32.mrf.mxu0
      %v5053 = vpop.f32.mrf.mxu0
      %v5054 = vadd.f32 %v4893, %v5053
      %v5055 = vpop.f32.mrf.mxu0
      %5056 = vmatprep.mubr.bf16.mxu0 %v3840
      %5057 = vmatmul.mubr.bf16.gmra.mxu0 %v3839
      %v5058 = vpop.f32.mrf.mxu0
      %v5059 = vadd.f32 %v4898, %v5058
      %v5060 = vpop.f32.mrf.mxu0
      %v5061 = vpop.f32.mrf.mxu0
      %v5062 = vadd.f32 %v4901, %v5061
      %v5063 = vpop.f32.mrf.mxu0
      %5064 = vmatprep.mubr.bf16.mxu0 %v3849
      %5065 = vmatmul.mubr.bf16.gmra.mxu0 %v3848
      %v5066 = vpop.f32.mrf.mxu0
      %v5067 = vadd.f32 %v4906, %v5066
      %v5068 = vpop.f32.mrf.mxu0
      %v5069 = vpop.f32.mrf.mxu0
      %v5070 = vadd.f32 %v4909, %v5069
      %v5071 = vpop.f32.mrf.mxu0
      %5072 = vmatprep.mubr.bf16.mxu0 %v3858
      %5073 = vmatmul.mubr.bf16.gmra.mxu0 %v3857
      %v5074 = vpop.f32.mrf.mxu0
      %v5075 = vadd.f32 %v4914, %v5074
      %v5076 = vpop.f32.mrf.mxu0
      %v5077 = vpop.f32.mrf.mxu0
      %v5078 = vadd.f32 %v4917, %v5077
      %v5079 = vpop.f32.mrf.mxu0
      %5080 = vmatprep.mubr.bf16.mxu0 %v3867
      %5081 = vmatmul.mubr.bf16.gmra.mxu0 %v3866
      %v5082 = vpop.f32.mrf.mxu0
      %v5083 = vadd.f32 %v4922, %v5082
      %v5084 = vpop.f32.mrf.mxu0
      %v5085 = vpop.f32.mrf.mxu0
      %v5086 = vadd.f32 %v4925, %v5085
      %v5087 = vpop.f32.mrf.mxu0
      %5088 = vdwg.mxu0
      %5089 = vmatprep.subr.bf16.mxu0 0
      %5090 = vmatpush1.bf16.msra.mxu0 %v4372
      %5091 = vmatprep.subr.bf16.mxu0 0
      %5092 = vmatpush1.bf16.msra.mxu0 %v4371
      %5093 = vmatprep.subr.bf16.mxu0 0
      %5094 = vmatpush1.bf16.msra.mxu0 %v4370
      %5095 = vmatprep.subr.bf16.mxu0 0
      %5096 = vmatpush1.bf16.msra.mxu0 %v4369
      %5097 = vmatprep.subr.bf16.mxu0 0
      %5098 = vmatpush1.bf16.msra.mxu0 %v4368
      %5099 = vmatprep.subr.bf16.mxu0 0
      %5100 = vmatpush1.bf16.msra.mxu0 %v4367
      %5101 = vmatprep.subr.bf16.mxu0 0
      %5102 = vmatpush1.bf16.msra.mxu0 %v4366
      %5103 = vmatprep.subr.bf16.mxu0 0
      %5104 = vmatpush1.bf16.msra.mxu0 %v4365
      %5105 = vmatprep.subr.bf16.mxu0 0
      %5106 = vmatpush2.bf16.msra.mxu0 0
      %5107 = vmatprep.subr.bf16.mxu0 0
      %5108 = vmatpush2.bf16.msra.mxu0 0
      %5109 = vmatprep.subr.bf16.mxu0 0
      %5110 = vmatpush2.bf16.msra.mxu0 0
      %5111 = vmatprep.subr.bf16.mxu0 0
      %5112 = vmatpush2.bf16.msra.mxu0 0
      %5113 = vmatprep.subr.bf16.mxu0 0
      %5114 = vmatpush2.bf16.msra.mxu0 0
      %5115 = vmatprep.subr.bf16.mxu0 0
      %5116 = vmatpush2.bf16.msra.mxu0 0
      %5117 = vmatprep.subr.bf16.mxu0 0
      %5118 = vmatpush2.bf16.msra.mxu0 0
      %5119 = vmatprep.subr.bf16.mxu0 0
      %5120 = vmatpush2.bf16.msra.mxu0 0
      %5121 = vmatprep.mubr.bf16.mxu0 0
      %5122 = vmatmul.mubr.bf16.gmra.mxu0 %v3733
      %v5123 = vpop.f32.mrf.mxu0
      %v5124 = vadd.f32 %v4963, %v5123
      %v5125 = vpop.f32.mrf.mxu0
      %v5126 = vpop.f32.mrf.mxu0
      %v5127 = vadd.f32 %v4966, %v5126
      %v5128 = vpop.f32.mrf.mxu0
      %5129 = vmatprep.mubr.bf16.mxu0 0
      %5130 = vmatmul.mubr.bf16.gmra.mxu0 %v3742
      %v5131 = vpop.f32.mrf.mxu0
      %v5132 = vadd.f32 %v4971, %v5131
      %v5133 = vpop.f32.mrf.mxu0
      %v5134 = vpop.f32.mrf.mxu0
      %v5135 = vadd.f32 %v4974, %v5134
      %v5136 = vpop.f32.mrf.mxu0
      %5137 = vmatprep.mubr.bf16.mxu0 0
      %5138 = vmatmul.mubr.bf16.gmra.mxu0 %v3751
      %v5139 = vpop.f32.mrf.mxu0
      %v5140 = vadd.f32 %v4979, %v5139
      %v5141 = vpop.f32.mrf.mxu0
      %v5142 = vpop.f32.mrf.mxu0
      %v5143 = vadd.f32 %v4982, %v5142
      %v5144 = vpop.f32.mrf.mxu0
      %5145 = vmatprep.mubr.bf16.mxu0 0
      %5146 = vmatmul.mubr.bf16.gmra.mxu0 %v3760
      %v5147 = vpop.f32.mrf.mxu0
      %v5148 = vadd.f32 %v4987, %v5147
      %v5149 = vpop.f32.mrf.mxu0
      %v5150 = vpop.f32.mrf.mxu0
      %v5151 = vadd.f32 %v4990, %v5150
      %v5152 = vpop.f32.mrf.mxu0
      %5153 = vmatprep.mubr.bf16.mxu0 0
      %5154 = vmatmul.mubr.bf16.gmra.mxu0 %v3769
      %v5155 = vpop.f32.mrf.mxu0
      %v5156 = vadd.f32 %v4995, %v5155
      %v5157 = vpop.f32.mrf.mxu0
      %v5158 = vpop.f32.mrf.mxu0
      %v5159 = vadd.f32 %v4998, %v5158
      %v5160 = vpop.f32.mrf.mxu0
      %5161 = vmatprep.mubr.bf16.mxu0 0
      %5162 = vmatmul.mubr.bf16.gmra.mxu0 %v3778
      %v5163 = vpop.f32.mrf.mxu0
      %v5164 = vadd.f32 %v5003, %v5163
      %v5165 = vpop.f32.mrf.mxu0
      %v5166 = vpop.f32.mrf.mxu0
      %v5167 = vadd.f32 %v5006, %v5166
      %v5168 = vpop.f32.mrf.mxu0
      %5169 = vmatprep.mubr.bf16.mxu0 0
      %5170 = vmatmul.mubr.bf16.gmra.mxu0 %v3787
      %v5171 = vpop.f32.mrf.mxu0
      %v5172 = vadd.f32 %v5011, %v5171
      %v5173 = vpop.f32.mrf.mxu0
      %v5174 = vpop.f32.mrf.mxu0
      %v5175 = vadd.f32 %v5014, %v5174
      %v5176 = vpop.f32.mrf.mxu0
      %5177 = vmatprep.mubr.bf16.mxu0 0
      %5178 = vmatmul.mubr.bf16.gmra.mxu0 %v3796
      %v5179 = vpop.f32.mrf.mxu0
      %v5180 = vadd.f32 %v5019, %v5179
      %v5181 = vpop.f32.mrf.mxu0
      %v5182 = vpop.f32.mrf.mxu0
      %v5183 = vadd.f32 %v5022, %v5182
      %v5184 = vpop.f32.mrf.mxu0
      %5185 = vmatprep.mubr.bf16.mxu0 0
      %5186 = vmatmul.mubr.bf16.gmra.mxu0 %v3805
      %v5187 = vpop.f32.mrf.mxu0
      %v5188 = vadd.f32 %v5027, %v5187
      %v5189 = vpop.f32.mrf.mxu0
      %v5190 = vpop.f32.mrf.mxu0
      %v5191 = vadd.f32 %v5030, %v5190
      %v5192 = vpop.f32.mrf.mxu0
      %5193 = vmatprep.mubr.bf16.mxu0 0
      %5194 = vmatmul.mubr.bf16.gmra.mxu0 %v3814
      %v5195 = vpop.f32.mrf.mxu0
      %v5196 = vadd.f32 %v5035, %v5195
      %v5197 = vpop.f32.mrf.mxu0
      %v5198 = vpop.f32.mrf.mxu0
      %v5199 = vadd.f32 %v5038, %v5198
      %v5200 = vpop.f32.mrf.mxu0
      %5201 = vmatprep.mubr.bf16.mxu0 0
      %5202 = vmatmul.mubr.bf16.gmra.mxu0 %v3823
      %v5203 = vpop.f32.mrf.mxu0
      %v5204 = vadd.f32 %v5043, %v5203
      %v5205 = vpop.f32.mrf.mxu0
      %v5206 = vpop.f32.mrf.mxu0
      %v5207 = vadd.f32 %v5046, %v5206
      %v5208 = vpop.f32.mrf.mxu0
      %5209 = vmatprep.mubr.bf16.mxu0 0
      %5210 = vmatmul.mubr.bf16.gmra.mxu0 %v3832
      %v5211 = vpop.f32.mrf.mxu0
      %v5212 = vadd.f32 %v5051, %v5211
      %v5213 = vpop.f32.mrf.mxu0
      %v5214 = vpop.f32.mrf.mxu0
      %v5215 = vadd.f32 %v5054, %v5214
      %v5216 = vpop.f32.mrf.mxu0
      %5217 = vmatprep.mubr.bf16.mxu0 0
      %5218 = vmatmul.mubr.bf16.gmra.mxu0 %v3841
      %v5219 = vpop.f32.mrf.mxu0
      %v5220 = vadd.f32 %v5059, %v5219
      %v5221 = vpop.f32.mrf.mxu0
      %v5222 = vpop.f32.mrf.mxu0
      %v5223 = vadd.f32 %v5062, %v5222
      %v5224 = vpop.f32.mrf.mxu0
      %5225 = vmatprep.mubr.bf16.mxu0 0
      %5226 = vmatmul.mubr.bf16.gmra.mxu0 %v3850
      %v5227 = vpop.f32.mrf.mxu0
      %v5228 = vadd.f32 %v5067, %v5227
      %v5229 = vpop.f32.mrf.mxu0
      %v5230 = vpop.f32.mrf.mxu0
      %v5231 = vadd.f32 %v5070, %v5230
      %v5232 = vpop.f32.mrf.mxu0
      %5233 = vmatprep.mubr.bf16.mxu0 0
      %5234 = vmatmul.mubr.bf16.gmra.mxu0 %v3859
      %v5235 = vpop.f32.mrf.mxu0
      %v5236 = vadd.f32 %v5075, %v5235
      %v5237 = vpop.f32.mrf.mxu0
      %v5238 = vpop.f32.mrf.mxu0
      %v5239 = vadd.f32 %v5078, %v5238
      %v5240 = vpop.f32.mrf.mxu0
      %5241 = vmatprep.mubr.bf16.mxu0 0
      %5242 = vmatmul.mubr.bf16.gmra.mxu0 %v3868
      %v5243 = vpop.f32.mrf.mxu0
      %v5244 = vadd.f32 %v5083, %v5243
      %v5245 = vpop.f32.mrf.mxu0
      %v5246 = vpop.f32.mrf.mxu0
      %v5247 = vadd.f32 %v5086, %v5246
      %v5248 = vpop.f32.mrf.mxu0
      %5249 = vdwg.mxu0
      %v5250 = vld [vmem:[%s7] sm:$0x1]
      %v5252 = vlaneseq
      %v5253 = vshrl.u32 %v5252, 7
      %v5254 = vsub.s32 0, %v5253
      %v5255 = vrot.slane %v5250, %v5254
      %v5257 = vmul.f32 %v5124, %v5255
      %v5258 = vmul.f32 %v5127, %v5255
      %v5259 = vmul.f32 %v5132, %v5255
      %v5260 = vmul.f32 %v5135, %v5255
      %v5261 = vmul.f32 %v5140, %v5255
      %v5262 = vmul.f32 %v5143, %v5255
      %v5263 = vmul.f32 %v5148, %v5255
      %v5264 = vmul.f32 %v5151, %v5255
      %v5265 = vmul.f32 %v5156, %v5255
      %v5266 = vmul.f32 %v5159, %v5255
      %v5267 = vmul.f32 %v5164, %v5255
      %v5268 = vmul.f32 %v5167, %v5255
      %v5269 = vmul.f32 %v5172, %v5255
      %v5270 = vmul.f32 %v5175, %v5255
      %v5271 = vmul.f32 %v5180, %v5255
      %v5272 = vmul.f32 %v5183, %v5255
      %v5273 = vmul.f32 %v5188, %v5255
      %v5274 = vmul.f32 %v5191, %v5255
      %v5275 = vmul.f32 %v5196, %v5255
      %v5276 = vmul.f32 %v5199, %v5255
      %v5277 = vmul.f32 %v5204, %v5255
      %v5278 = vmul.f32 %v5207, %v5255
      %v5279 = vmul.f32 %v5212, %v5255
      %v5280 = vmul.f32 %v5215, %v5255
      %v5281 = vmul.f32 %v5220, %v5255
      %v5282 = vmul.f32 %v5223, %v5255
      %v5283 = vmul.f32 %v5228, %v5255
      %v5284 = vmul.f32 %v5231, %v5255
      %v5285 = vmul.f32 %v5236, %v5255
      %v5286 = vmul.f32 %v5239, %v5255
      %v5287 = vmul.f32 %v5244, %v5255
      %v5288 = vmul.f32 %v5247, %v5255
      %v5289 = vld [vmem:[%s8] sm:$0x1]
      %v5291 = vlaneseq
      %v5292 = vshrl.u32 %v5291, 7
      %v5293 = vsub.s32 0, %v5292
      %v5294 = vrot.slane %v5289, %v5293
      %v5296 = vadd.f32 %v5257, %v5294
      %v5297 = vadd.f32 %v5258, %v5294
      %v5298 = vadd.f32 %v5259, %v5294
      %v5299 = vadd.f32 %v5260, %v5294
      %v5300 = vadd.f32 %v5261, %v5294
      %v5301 = vadd.f32 %v5262, %v5294
      %v5302 = vadd.f32 %v5263, %v5294
      %v5303 = vadd.f32 %v5264, %v5294
      %v5304 = vadd.f32 %v5265, %v5294
      %v5305 = vadd.f32 %v5266, %v5294
      %v5306 = vadd.f32 %v5267, %v5294
      %v5307 = vadd.f32 %v5268, %v5294
      %v5308 = vadd.f32 %v5269, %v5294
      %v5309 = vadd.f32 %v5270, %v5294
      %v5310 = vadd.f32 %v5271, %v5294
      %v5311 = vadd.f32 %v5272, %v5294
      %v5312 = vadd.f32 %v5273, %v5294
      %v5313 = vadd.f32 %v5274, %v5294
      %v5314 = vadd.f32 %v5275, %v5294
      %v5315 = vadd.f32 %v5276, %v5294
      %v5316 = vadd.f32 %v5277, %v5294
      %v5317 = vadd.f32 %v5278, %v5294
      %v5318 = vadd.f32 %v5279, %v5294
      %v5319 = vadd.f32 %v5280, %v5294
      %v5320 = vadd.f32 %v5281, %v5294
      %v5321 = vadd.f32 %v5282, %v5294
      %v5322 = vadd.f32 %v5283, %v5294
      %v5323 = vadd.f32 %v5284, %v5294
      %v5324 = vadd.f32 %v5285, %v5294
      %v5325 = vadd.f32 %v5286, %v5294
      %v5326 = vadd.f32 %v5287, %v5294
      %v5327 = vadd.f32 %v5288, %v5294
      %v5328 = vmax.f32 %v5296, 0.0
      %v5329 = vmax.f32 %v5297, 0.0
      %v5330 = vmax.f32 %v5298, 0.0
      %v5331 = vmax.f32 %v5299, 0.0
      %v5332 = vmax.f32 %v5300, 0.0
      %v5333 = vmax.f32 %v5301, 0.0
      %v5334 = vmax.f32 %v5302, 0.0
      %v5335 = vmax.f32 %v5303, 0.0
      %v5336 = vmax.f32 %v5304, 0.0
      %v5337 = vmax.f32 %v5305, 0.0
      %v5338 = vmax.f32 %v5306, 0.0
      %v5339 = vmax.f32 %v5307, 0.0
      %v5340 = vmax.f32 %v5308, 0.0
      %v5341 = vmax.f32 %v5309, 0.0
      %v5342 = vmax.f32 %v5310, 0.0
      %v5343 = vmax.f32 %v5311, 0.0
      %v5344 = vmax.f32 %v5312, 0.0
      %v5345 = vmax.f32 %v5313, 0.0
      %v5346 = vmax.f32 %v5314, 0.0
      %v5347 = vmax.f32 %v5315, 0.0
      %v5348 = vmax.f32 %v5316, 0.0
      %v5349 = vmax.f32 %v5317, 0.0
      %v5350 = vmax.f32 %v5318, 0.0
      %v5351 = vmax.f32 %v5319, 0.0
      %v5352 = vmax.f32 %v5320, 0.0
      %v5353 = vmax.f32 %v5321, 0.0
      %v5354 = vmax.f32 %v5322, 0.0
      %v5355 = vmax.f32 %v5323, 0.0
      %v5356 = vmax.f32 %v5324, 0.0
      %v5357 = vmax.f32 %v5325, 0.0
      %v5358 = vmax.f32 %v5326, 0.0
      %v5359 = vmax.f32 %v5327, 0.0
      %5360 = vxpose.xlu0.b32.start [1/16] %v5328, 128
      %5361 = vxpose.xlu0.b32.cont [2/16] %v5329, 128
      %5362 = vxpose.xlu0.b32.cont [3/16] %v5330, 128
      %5363 = vxpose.xlu0.b32.cont [4/16] %v5331, 128
      %5364 = vxpose.xlu0.b32.cont [5/16] %v5332, 128
      %5365 = vxpose.xlu0.b32.cont [6/16] %v5333, 128
      %5366 = vxpose.xlu0.b32.cont [7/16] %v5334, 128
      %5367 = vxpose.xlu0.b32.cont [8/16] %v5335, 128
      %5368 = vxpose.xlu0.b32.cont [9/16] %v5336, 128
      %5369 = vxpose.xlu0.b32.cont [10/16] %v5337, 128
      %5370 = vxpose.xlu0.b32.cont [11/16] %v5338, 128
      %5371 = vxpose.xlu0.b32.cont [12/16] %v5339, 128
      %5372 = vxpose.xlu0.b32.cont [13/16] %v5340, 128
      %5373 = vxpose.xlu0.b32.cont [14/16] %v5341, 128
      %5374 = vxpose.xlu0.b32.cont [15/16] %v5342, 128
      %5375 = vxpose.xlu0.b32.end [16/16] %v5343, 128
      %v5376 = vpop.trf.xlu0
      %v5377 = vpop.trf.xlu0
      %v5378 = vpop.trf.xlu0
      %v5379 = vpop.trf.xlu0
      %v5380 = vpop.trf.xlu0
      %v5381 = vpop.trf.xlu0
      %v5382 = vpop.trf.xlu0
      %v5383 = vpop.trf.xlu0
      %v5384 = vpop.trf.xlu0
      %v5385 = vpop.trf.xlu0
      %v5386 = vpop.trf.xlu0
      %v5387 = vpop.trf.xlu0
      %v5388 = vpop.trf.xlu0
      %v5389 = vpop.trf.xlu0
      %v5390 = vpop.trf.xlu0
      %v5391 = vpop.trf.xlu0
      %5392 = vxpose.xlu0.b32.start [1/16] %v5344, 128
      %5393 = vxpose.xlu0.b32.cont [2/16] %v5345, 128
      %5394 = vxpose.xlu0.b32.cont [3/16] %v5346, 128
      %5395 = vxpose.xlu0.b32.cont [4/16] %v5347, 128
      %5396 = vxpose.xlu0.b32.cont [5/16] %v5348, 128
      %5397 = vxpose.xlu0.b32.cont [6/16] %v5349, 128
      %5398 = vxpose.xlu0.b32.cont [7/16] %v5350, 128
      %5399 = vxpose.xlu0.b32.cont [8/16] %v5351, 128
      %5400 = vxpose.xlu0.b32.cont [9/16] %v5352, 128
      %5401 = vxpose.xlu0.b32.cont [10/16] %v5353, 128
      %5402 = vxpose.xlu0.b32.cont [11/16] %v5354, 128
      %5403 = vxpose.xlu0.b32.cont [12/16] %v5355, 128
      %5404 = vxpose.xlu0.b32.cont [13/16] %v5356, 128
      %5405 = vxpose.xlu0.b32.cont [14/16] %v5357, 128
      %5406 = vxpose.xlu0.b32.cont [15/16] %v5358, 128
      %5407 = vxpose.xlu0.b32.end [16/16] %v5359, 128
      %v5408 = vpop.trf.xlu0
      %v5409 = vpop.trf.xlu0
      %v5410 = vpop.trf.xlu0
      %v5411 = vpop.trf.xlu0
      %v5412 = vpop.trf.xlu0
      %v5413 = vpop.trf.xlu0
      %v5414 = vpop.trf.xlu0
      %v5415 = vpop.trf.xlu0
      %v5416 = vpop.trf.xlu0
      %v5417 = vpop.trf.xlu0
      %v5418 = vpop.trf.xlu0
      %v5419 = vpop.trf.xlu0
      %v5420 = vpop.trf.xlu0
      %v5421 = vpop.trf.xlu0
      %v5422 = vpop.trf.xlu0
      %v5423 = vpop.trf.xlu0
      %5424 = vst [vmem:[%s352] sm:$0xff] %v5376
      %5425 = vst [vmem:[%s352 + $0x8] sm:$0xff] %v5408
      %p5426 = scmp.lt.s32.totalorder %s20, 1
      %s5427 = scalar_select %p5426, %s20, 1
      %s5428 = smul.addr %s5427, 2
      %s5429 = smul.addr %s5428, 8
      %s5430 = scalar_lea.vmem %s9, %s5429
      // Predicated region
      $region57: #{decoder_block.1} parent=55 // pred_check
        %p5431 = pneg %p237
      $region58: #{decoder_block.1} parent=55 // pred_check_branch
        %5433 = sbr.rel (%p5431) target = $region60
      $region59: #{decoder_block.1} parent=55 // pred_region
        _
      $region60: #{decoder_block.1} parent=55 // pred_fallthru
        _
    $region56: #{decoder_block.1} parent=5 // pred_fallthru
      _
    %p5434 = scmp.le.s32.totalorder 2, %s15
    // Predicated region
    $region61: #{decoder_block.1} parent=5 // pred_check
      %p5435 = pneg %p5434
    $region62: #{decoder_block.1} parent=5 // pred_check_branch
      %5437 = sbr.rel (%p5435) target = $region64
    $region63: #{decoder_block.1} parent=5 // pred_region
      %s5438 = ssub.s32 %s15, 2
      // Predicated region
      $region65: #{decoder_block.1} parent=63 // pred_check
        %p5439 = pneg %p243
      $region66: #{decoder_block.1} parent=63 // pred_check_branch
        %5441 = sbr.rel (%p5439) target = $region68
      $region67: #{decoder_block.1} parent=63 // pred_region
        %p5442 = scmp.lt.s32.totalorder %s21, 1
        %s5443 = scalar_select %p5442, %s21, 1
        %s5444 = smul.addr %s5443, 2
        %s5445 = smul.addr %s5444, 8
        %s5446 = scalar_lea.vmem %s9, %s5445
      $region68: #{decoder_block.1} parent=63 // pred_fallthru
        _
    $region64: #{decoder_block.1} parent=5 // pred_fallthru
      _
  $region6: #{decoder_block.1} parent=0 // loop_footer
    %s19 = sadd.s32 1, %s15
  $region7: #{decoder_block.1} parent=0 // loop_footer_branch
    %14 = sbr.rel target = $region3
  $region8: #{decoder_block.1} parent=0 // loop_exit
    _

</llo_original>
